<compile_context>
chip_gen: v5e
topology: v5e:2x2
jax: 0.10.0
libtpu: 0.0.40
codegen_flags: <defaults>
</compile_context>

<pallas_src>
import jax
import jax.numpy as jnp
from jax.experimental import pallas as pl
from jax.experimental.pallas import tpu as pltpu

# ----------------------------- model configuration ---------------------------------
BATCH = 2
NUM_INPUTS = 2                      # stereo mix
NUM_OUTPUTS = 2                     # stereo per source
NUM_CHANNELS = [8, 16, 24]          # num_levels = 3  -> 2 down / 2 up blocks
INSTRUMENTS = ["bass", "drums"]
KSIZE = 5                           # kernel_size (odd)
STRIDE = 2                          # strides
DEPTH = 1
TARGET_OUTPUT_SIZE = 16
SEPARATE = False                    # single 'ALL' wave-u-net, output split per source


# ------------------------ size bookkeeping (mirrors PyTorch) ------------------------
def _conv_out(i, k, s, transpose=False):
    if transpose:
        assert i > 1
        c = (i - 1) * s + 1
        c = c - k + 1
        assert c > 0
        return c
    c = i - k + 1
    assert c > 0
    assert (c - 1) % s == 0
    return (c - 1) // s + 1


def _conv_in(o, k, s, transpose=False):
    c = o if transpose else (o - 1) * s + 1
    c = c + k - 1
    if transpose:
        assert (c - 1) % s == 0
        c = (c - 1) // s + 1
    assert c > 0
    return c


def _up_block_out(i):
    c = _conv_out(i, KSIZE, STRIDE, transpose=True)      # upconv
    for _ in range(DEPTH):                                # pre convs
        c = _conv_out(c, KSIZE, 1)
    for _ in range(DEPTH):                                # post convs
        c = _conv_out(c, KSIZE, 1)
    return c


def _down_block_in(o):
    c = _conv_in(o, KSIZE, STRIDE)                        # downconv
    for _ in range(DEPTH):                                # post convs
        c = _conv_in(c, KSIZE, 1)
    for _ in range(DEPTH):                                # pre convs
        c = _conv_in(c, KSIZE, 1)
    return c


def check_padding(target_output_size):
    bottleneck = 1
    while True:
        try:
            cur = bottleneck
            for _ in range(len(NUM_CHANNELS) - 1):
                cur = _up_block_out(cur)
            output_size = cur
            cur = bottleneck
            for _ in range(DEPTH):                        # bottleneck convs
                cur = _conv_in(cur, KSIZE, 1)
            for _ in range(len(NUM_CHANNELS) - 1):
                cur = _down_block_in(cur)
            assert output_size >= target_output_size
            return cur, output_size
        except AssertionError:
            bottleneck += 1


INPUT_SIZE, OUTPUT_SIZE = check_padding(TARGET_OUTPUT_SIZE)   # (105, 17) for this config


# ------------------------------- parameter init -------------------------------------
def _conv_init(key, cout, cin, k, scale=0.1):
    kw, kb = jax.random.split(key)
    w = scale * jax.random.normal(kw, (cout, cin, k), jnp.float32)
    b = scale * jax.random.normal(kb, (cout,), jnp.float32)
    return w, b


def _convT_init(key, cin, cout, k, scale=0.1):
    kw, kb = jax.random.split(key)
    w = scale * jax.random.normal(kw, (cin, cout, k), jnp.float32)  # ConvTranspose1d layout
    b = scale * jax.random.normal(kb, (cout,), jnp.float32)
    return w, b


def init_waveunet_params(key):
    keys = iter(jax.random.split(key, 64))
    p = {"down": [], "up": [], "bottleneck": [], "out": None}
    nch = NUM_CHANNELS
    for i in range(len(nch) - 1):                       # downsampling blocks
        in_ch = NUM_INPUTS if i == 0 else nch[i]
        n_short, n_out = nch[i], nch[i + 1]
        blk = {
            "pre": [_conv_init(next(keys), n_short, in_ch, KSIZE)]
                   + [_conv_init(next(keys), n_short, n_short, KSIZE) for _ in range(DEPTH - 1)],
            "post": [_conv_init(next(keys), n_out, n_short, KSIZE)]
                    + [_conv_init(next(keys), n_out, n_out, KSIZE) for _ in range(DEPTH - 1)],
            "down": _conv_init(next(keys), n_out, n_out, KSIZE),
        }
        p["down"].append(blk)
    for i in range(len(nch) - 1):                       # upsampling blocks
        n_in, n_short, n_out = nch[-1 - i], nch[-2 - i], nch[-2 - i]
        blk = {
            "up": _convT_init(next(keys), n_in, n_in, KSIZE),
            "pre": [_conv_init(next(keys), n_out, n_in, KSIZE)]
                   + [_conv_init(next(keys), n_out, n_out, KSIZE) for _ in range(DEPTH - 1)],
            "post": [_conv_init(next(keys), n_out, n_out + n_short, KSIZE)]
                    + [_conv_init(next(keys), n_out, n_out, KSIZE) for _ in range(DEPTH - 1)],
        }
        p["up"].append(blk)
    p["bottleneck"] = [_conv_init(next(keys), nch[-1], nch[-1], KSIZE) for _ in range(DEPTH)]
    outputs = NUM_OUTPUTS if SEPARATE else NUM_OUTPUTS * len(INSTRUMENTS)
    p["out"] = _conv_init(next(keys), outputs, nch[0], 1)
    return p


# --------------------- one-time kernel-parameter preparation ------------------------
def _prep_conv(w, b):
    """PyTorch (Co, Ci, K) conv weight -> im2col matmul layout (Co, K*Ci), f32 bias (Co,1)."""
    co, ci, k = w.shape
    wcol = jnp.transpose(w, (0, 2, 1)).reshape(co, k * ci).astype(jnp.float32)
    return [wcol, b.reshape(co, 1).astype(jnp.float32)]


def _prep_convT(w_t, b):
    """ConvTranspose1d weight (Cin, Cout, K) -> equivalent valid-conv weight (flipped)."""
    w = jnp.flip(jnp.transpose(w_t, (1, 0, 2)), axis=2)
    return _prep_conv(w, b)


def _decim_matrix(l_full, stride):
    """(l_full, l_strided) 0/1 matrix; y_full @ M == y_full[:, ::stride] exactly."""
    assert (l_full - 1) % stride == 0
    l_s = (l_full - 1) // stride + 1
    return (jnp.arange(l_full)[:, None] == stride * jnp.arange(l_s)[None, :]).astype(jnp.float32)


def _dilate_matrix(l_in, stride):
    """(l_in, l_dilated) 0/1 matrix; x @ M inserts stride-1 zeros between samples exactly."""
    l_d = (l_in - 1) * stride + 1
    return (stride * jnp.arange(l_in)[:, None] == jnp.arange(l_d)[None, :]).astype(jnp.float32)


def prepare_kernel_params(params):
    """Hoisted layout glue (done once): matmul-layout weights, flips, f32 casts,
    bias reshapes, stride/dilation selection matrices, skip-concat weight split."""
    flat = []
    L = INPUT_SIZE
    # downsampling blocks
    for blk in params["down"]:
        for (w, b) in blk["pre"]:
            flat += _prep_conv(w, b); L = L - KSIZE + 1
        for (w, b) in blk["post"]:
            flat += _prep_conv(w, b); L = L - KSIZE + 1
        wd, bd = blk["down"]
        flat += _prep_conv(wd, bd)
        L = L - KSIZE + 1
        flat.append(_decim_matrix(L, STRIDE))
        L = (L - 1) // STRIDE + 1
    # bottleneck
    for (w, b) in params["bottleneck"]:
        flat += _prep_conv(w, b); L = L - KSIZE + 1
    # upsampling blocks
    for idx, blk in enumerate(params["up"]):
        wu, bu = blk["up"]
        flat += _prep_convT(wu, bu)
        flat.append(_dilate_matrix(L, STRIDE))
        L = (L - 1) * STRIDE + 1 - KSIZE + 1
        for (w, b) in blk["pre"]:
            flat += _prep_conv(w, b); L = L - KSIZE + 1
        # first post conv consumes cat([combined(n_short ch), cropped_up(n_out ch)]):
        # split the weight along input channels -> two matmuls into one accumulator.
        n_short = NUM_CHANNELS[-2 - idx]
        w, b = blk["post"][0]
        wa, bias = _prep_conv(w[:, :n_short, :], b)
        wb, _ = _prep_conv(w[:, n_short:, :], b)
        flat += [wa, wb, bias]
        L = L - KSIZE + 1
        # TODO(synk): depth>1 post-conv re-concat path (channel counts are inconsistent
        # in the reference for depth>1) is not exercised; treated as plain convs here.
        for (w, b) in blk["post"][1:]:
            flat += _prep_conv(w, b); L = L - KSIZE + 1
    wo, bo = params["out"]
    flat += _prep_conv(wo, bo)                     # 1x1 output conv
    assert L == OUTPUT_SIZE, L
    return flat


# --------------------------- in-kernel building blocks ------------------------------
def _lrelu(y):                                     # F.leaky_relu, slope 0.01
    return jnp.where(y >= 0.0, y, 0.01 * y)


def _conv_acc(x, wcol, k):
    """Valid stride-1 conv accumulator on a (Ci, Lin) value. im2col single matmul when
    channels are sublane-aligned; per-tap accumulation otherwise (input layer Ci=2)."""
    ci, lin = x.shape
    lout = lin - k + 1
    if k == 1:
        return jnp.dot(wcol, x, preferred_element_type=jnp.float32)
    if ci % 8 == 0:
        xcol = jnp.concatenate([x[:, j:j + lout] for j in range(k)], axis=0)  # (K*Ci, Lout)
        return jnp.dot(wcol, xcol, preferred_element_type=jnp.float32)
    acc = jnp.zeros((wcol.shape[0], lout), jnp.float32)
    for j in range(k):
        acc = acc + jnp.dot(wcol[:, j * ci:(j + 1) * ci], x[:, j:j + lout],
                            preferred_element_type=jnp.float32)
    return acc


def _conv(x, wcol, bias, k, act=_lrelu):
    acc = _conv_acc(x, wcol, k) + bias
    return act(acc) if act is not None else acc


def _conv_2in(xa, xb, wa, wb, bias, k, act=_lrelu):
    """Conv over channel-concat [xa; xb] without materializing the concat."""
    acc = _conv_acc(xa, wa, k) + _conv_acc(xb, wb, k) + bias
    return act(acc)


def _crop(x, target_len):
    diff = x.shape[1] - target_len
    assert diff >= 0 and diff % 2 == 0
    c = diff // 2
    return x[:, c:c + target_len] if c else x


# ------------------------------ fused forward kernel --------------------------------
def _waveunet_kernel(*refs):
    x_ref = refs[0]
    o_ref = refs[-1]
    weights = [r[...] for r in refs[1:-1]]          # all params resident in VMEM, loaded once

    n_down = len(NUM_CHANNELS) - 1
    for b in range(x_ref.shape[0]):                 # static unroll over batch
        it = iter(weights)
        out = x_ref[b]                              # (Ci, Lin)
        shortcuts = []
        # ---- downsampling blocks ----
        for _ in range(n_down):
            short = out
            for _ in range(DEPTH):
                w, bb = next(it), next(it)
                short = _conv(short, w, bb, KSIZE)
            o = short
            for _ in range(DEPTH):
                w, bb = next(it), next(it)
                o = _conv(o, w, bb, KSIZE)
            wd, bd, sel = next(it), next(it), next(it)
            full = _conv(o, wd, bd, KSIZE)                                    # stride-1 + lrelu
            out = jnp.dot(full, sel, preferred_element_type=jnp.float32)      # exact ::STRIDE pick
            shortcuts.append(short)
        # ---- bottleneck ----
        for _ in range(DEPTH):
            w, bb = next(it), next(it)
            out = _conv(out, w, bb, KSIZE)
        # ---- upsampling blocks ----
        for idx in range(n_down):
            short = shortcuts[-1 - idx]
            wu, bu, dil = next(it), next(it), next(it)
            xd = jnp.dot(out, dil, preferred_element_type=jnp.float32)        # zero-dilation in VMEM
            up = _conv(xd, wu, bu, KSIZE)                                     # ConvTranspose equiv.
            for _ in range(DEPTH):
                w, bb = next(it), next(it)
                up = _conv(up, w, bb, KSIZE)
            combined = _crop(short, up.shape[1])
            wa, wb, bb = next(it), next(it), next(it)
            combined = _conv_2in(combined, _crop(up, combined.shape[1]), wa, wb, bb, KSIZE)
            for _ in range(DEPTH - 1):
                w, bb = next(it), next(it)
                combined = _conv(combined, w, bb, KSIZE)
            out = combined
        # ---- 1x1 output conv + eval-mode clamp ----
        wo, bo = next(it), next(it)
        out = _conv(out, wo, bo, 1, act=lambda y: jnp.clip(y, -1.0, 1.0))
        o_ref[b] = out.astype(o_ref.dtype)


def waveunet_forward(kernel_params, x):
    assert x.shape[-1] == INPUT_SIZE
    n_out_ch = NUM_OUTPUTS if SEPARATE else NUM_OUTPUTS * len(INSTRUMENTS)
    n_inputs = 1 + len(kernel_params)
    out = pl.pallas_call(
        _waveunet_kernel,
        out_shape=jax.ShapeDtypeStruct((x.shape[0], n_out_ch, OUTPUT_SIZE), jnp.float32),
        in_specs=[pl.BlockSpec(memory_space=pltpu.MemorySpace.VMEM)] * n_inputs,
        out_specs=pl.BlockSpec(memory_space=pltpu.MemorySpace.VMEM),
    )(x.astype(jnp.float32), *kernel_params)
    return {inst: out[:, i * NUM_OUTPUTS:(i + 1) * NUM_OUTPUTS]
            for i, inst in enumerate(INSTRUMENTS)}


# --------------------------- pure-JAX reference (for checking) ----------------------
def _ref_conv(x, w, b, stride=1, act="lrelu"):
    y = jax.lax.conv_general_dilated(
        x, w, window_strides=(stride,), padding="VALID",
        dimension_numbers=("NCH", "OIH", "NCH"),
        precision=jax.lax.Precision.HIGHEST)
    y = y + b.reshape(1, -1, 1)
    if act == "lrelu":
        y = jnp.where(y >= 0.0, y, 0.01 * y)
    return y


def _ref_convT(x, w_t, b, stride):
    # ConvTranspose1d(k, stride, padding=k-1) == zero-dilate input by `stride`, then a
    # VALID conv with the (Cout, Cin, K) flipped weight.  lax requires explicit padding
    # when lhs_dilation is used, so pass [(0, 0)] instead of the string "VALID".
    w = jnp.flip(jnp.transpose(w_t, (1, 0, 2)), axis=2)
    y = jax.lax.conv_general_dilated(
        x, w, window_strides=(1,), padding=[(0, 0)], lhs_dilation=(stride,),
        dimension_numbers=("NCH", "OIH", "NCH"),
        precision=jax.lax.Precision.HIGHEST)
    y = y + b.reshape(1, -1, 1)
    return jnp.where(y >= 0.0, y, 0.01 * y)


def _ref_crop(x, target):
    diff = x.shape[-1] - target.shape[-1]
    assert diff % 2 == 0 and diff >= 0
    c = diff // 2
    return x if c == 0 else x[:, :, c:-c]


def waveunet_reference(params, x):
    shortcuts = []
    out = x
    for blk in params["down"]:
        short = out
        for (w, b) in blk["pre"]:
            short = _ref_conv(short, w, b)
        o = short
        for (w, b) in blk["post"]:
            o = _ref_conv(o, w, b)
        wd, bd = blk["down"]
        out = _ref_conv(o, wd, bd, stride=STRIDE)
        shortcuts.append(short)
    for (w, b) in params["bottleneck"]:
        out = _ref_conv(out, w, b)
    for idx, blk in enumerate(params["up"]):
        short = shortcuts[-1 - idx]
        wu, bu = blk["up"]
        up = _ref_convT(out, wu, bu, STRIDE)
        for (w, b) in blk["pre"]:
            up = _ref_conv(up, w, b)
        combined = _ref_crop(short, up)
        for (w, b) in blk["post"]:
            combined = _ref_conv(
                jnp.concatenate([combined, _ref_crop(up, combined)], axis=1), w, b)
        out = combined
    wo, bo = params["out"]
    out = _ref_conv(out, wo, bo, act=None)
    out = jnp.clip(out, -1.0, 1.0)
    return {inst: out[:, i * NUM_OUTPUTS:(i + 1) * NUM_OUTPUTS]
            for i, inst in enumerate(INSTRUMENTS)}


# ------------------------------------- main ------------------------------------------
if __name__ == "__main__":
    key = jax.random.PRNGKey(0)
    kp, kx = jax.random.split(key)
    params = init_waveunet_params(kp)
    kernel_params = prepare_kernel_params(params)     # one-time hoisted layout glue
    x = jax.random.normal(kx, (BATCH, NUM_INPUTS, INPUT_SIZE), jnp.float32)

    fwd = jax.jit(waveunet_forward)
    out_dict = fwd(kernel_params, x)
    out_dict = jax.tree_util.tree_map(jax.block_until_ready, out_dict)

    ref_dict = waveunet_reference(params, x)
    for inst in INSTRUMENTS:
        y = out_dict[inst]
        assert y.shape == (BATCH, NUM_OUTPUTS, OUTPUT_SIZE), y.shape
        assert bool(jnp.all(jnp.isfinite(y)))
        assert bool(jnp.all(y <= 1.0)) and bool(jnp.all(y >= -1.0))
        err = float(jnp.max(jnp.abs(y - ref_dict[inst])))
        assert err < 5e-3, err

    print("KERNEL_OK")
</pallas_src>

<mosaic_0001>
module attributes {stable_mosaic.version = 11 : i64} {
  func.func @_waveunet_kernel(%arg0: memref<2x2x105xf32, #tpu.memory_space<vmem>>, %arg1: memref<8x10xf32, #tpu.memory_space<vmem>>, %arg2: memref<8x1xf32, #tpu.memory_space<vmem>>, %arg3: memref<16x40xf32, #tpu.memory_space<vmem>>, %arg4: memref<16x1xf32, #tpu.memory_space<vmem>>, %arg5: memref<16x80xf32, #tpu.memory_space<vmem>>, %arg6: memref<16x1xf32, #tpu.memory_space<vmem>>, %arg7: memref<93x47xf32, #tpu.memory_space<vmem>>, %arg8: memref<16x80xf32, #tpu.memory_space<vmem>>, %arg9: memref<16x1xf32, #tpu.memory_space<vmem>>, %arg10: memref<24x80xf32, #tpu.memory_space<vmem>>, %arg11: memref<24x1xf32, #tpu.memory_space<vmem>>, %arg12: memref<24x120xf32, #tpu.memory_space<vmem>>, %arg13: memref<24x1xf32, #tpu.memory_space<vmem>>, %arg14: memref<35x18xf32, #tpu.memory_space<vmem>>, %arg15: memref<24x120xf32, #tpu.memory_space<vmem>>, %arg16: memref<24x1xf32, #tpu.memory_space<vmem>>, %arg17: memref<24x120xf32, #tpu.memory_space<vmem>>, %arg18: memref<24x1xf32, #tpu.memory_space<vmem>>, %arg19: memref<14x27xf32, #tpu.memory_space<vmem>>, %arg20: memref<16x120xf32, #tpu.memory_space<vmem>>, %arg21: memref<16x1xf32, #tpu.memory_space<vmem>>, %arg22: memref<16x80xf32, #tpu.memory_space<vmem>>, %arg23: memref<16x80xf32, #tpu.memory_space<vmem>>, %arg24: memref<16x1xf32, #tpu.memory_space<vmem>>, %arg25: memref<16x80xf32, #tpu.memory_space<vmem>>, %arg26: memref<16x1xf32, #tpu.memory_space<vmem>>, %arg27: memref<15x29xf32, #tpu.memory_space<vmem>>, %arg28: memref<8x80xf32, #tpu.memory_space<vmem>>, %arg29: memref<8x1xf32, #tpu.memory_space<vmem>>, %arg30: memref<8x40xf32, #tpu.memory_space<vmem>>, %arg31: memref<8x40xf32, #tpu.memory_space<vmem>>, %arg32: memref<8x1xf32, #tpu.memory_space<vmem>>, %arg33: memref<4x8xf32, #tpu.memory_space<vmem>>, %arg34: memref<4x1xf32, #tpu.memory_space<vmem>>, %arg35: memref<2x4x17xf32, #tpu.memory_space<vmem>>) attributes {dimension_semantics = [], scalar_prefetch = 0 : i64, scratch_operands = 0 : i64, tpu.core_type = #tpu.core_type<tc>} {
    %c0 = arith.constant 0 : index
    %c0_0 = arith.constant 0 : index
    %0 = vector.load %arg1[%c0, %c0_0] : memref<8x10xf32, #tpu.memory_space<vmem>>, vector<8x10xf32>
    %c0_1 = arith.constant 0 : index
    %c0_2 = arith.constant 0 : index
    %1 = vector.load %arg2[%c0_1, %c0_2] : memref<8x1xf32, #tpu.memory_space<vmem>>, vector<8x1xf32>
    %c0_3 = arith.constant 0 : index
    %c0_4 = arith.constant 0 : index
    %2 = vector.load %arg3[%c0_3, %c0_4] : memref<16x40xf32, #tpu.memory_space<vmem>>, vector<16x40xf32>
    %c0_5 = arith.constant 0 : index
    %c0_6 = arith.constant 0 : index
    %3 = vector.load %arg4[%c0_5, %c0_6] : memref<16x1xf32, #tpu.memory_space<vmem>>, vector<16x1xf32>
    %c0_7 = arith.constant 0 : index
    %c0_8 = arith.constant 0 : index
    %4 = vector.load %arg5[%c0_7, %c0_8] : memref<16x80xf32, #tpu.memory_space<vmem>>, vector<16x80xf32>
    %c0_9 = arith.constant 0 : index
    %c0_10 = arith.constant 0 : index
    %5 = vector.load %arg6[%c0_9, %c0_10] : memref<16x1xf32, #tpu.memory_space<vmem>>, vector<16x1xf32>
    %c0_11 = arith.constant 0 : index
    %c0_12 = arith.constant 0 : index
    %6 = vector.load %arg7[%c0_11, %c0_12] : memref<93x47xf32, #tpu.memory_space<vmem>>, vector<93x47xf32>
    %c0_13 = arith.constant 0 : index
    %c0_14 = arith.constant 0 : index
    %7 = vector.load %arg8[%c0_13, %c0_14] : memref<16x80xf32, #tpu.memory_space<vmem>>, vector<16x80xf32>
    %c0_15 = arith.constant 0 : index
    %c0_16 = arith.constant 0 : index
    %8 = vector.load %arg9[%c0_15, %c0_16] : memref<16x1xf32, #tpu.memory_space<vmem>>, vector<16x1xf32>
    %c0_17 = arith.constant 0 : index
    %c0_18 = arith.constant 0 : index
    %9 = vector.load %arg10[%c0_17, %c0_18] : memref<24x80xf32, #tpu.memory_space<vmem>>, vector<24x80xf32>
    %c0_19 = arith.constant 0 : index
    %c0_20 = arith.constant 0 : index
    %10 = vector.load %arg11[%c0_19, %c0_20] : memref<24x1xf32, #tpu.memory_space<vmem>>, vector<24x1xf32>
    %c0_21 = arith.constant 0 : index
    %c0_22 = arith.constant 0 : index
    %11 = vector.load %arg12[%c0_21, %c0_22] : memref<24x120xf32, #tpu.memory_space<vmem>>, vector<24x120xf32>
    %c0_23 = arith.constant 0 : index
    %c0_24 = arith.constant 0 : index
    %12 = vector.load %arg13[%c0_23, %c0_24] : memref<24x1xf32, #tpu.memory_space<vmem>>, vector<24x1xf32>
    %c0_25 = arith.constant 0 : index
    %c0_26 = arith.constant 0 : index
    %13 = vector.load %arg14[%c0_25, %c0_26] : memref<35x18xf32, #tpu.memory_space<vmem>>, vector<35x18xf32>
    %c0_27 = arith.constant 0 : index
    %c0_28 = arith.constant 0 : index
    %14 = vector.load %arg15[%c0_27, %c0_28] : memref<24x120xf32, #tpu.memory_space<vmem>>, vector<24x120xf32>
    %c0_29 = arith.constant 0 : index
    %c0_30 = arith.constant 0 : index
    %15 = vector.load %arg16[%c0_29, %c0_30] : memref<24x1xf32, #tpu.memory_space<vmem>>, vector<24x1xf32>
    %c0_31 = arith.constant 0 : index
    %c0_32 = arith.constant 0 : index
    %16 = vector.load %arg17[%c0_31, %c0_32] : memref<24x120xf32, #tpu.memory_space<vmem>>, vector<24x120xf32>
    %c0_33 = arith.constant 0 : index
    %c0_34 = arith.constant 0 : index
    %17 = vector.load %arg18[%c0_33, %c0_34] : memref<24x1xf32, #tpu.memory_space<vmem>>, vector<24x1xf32>
    %c0_35 = arith.constant 0 : index
    %c0_36 = arith.constant 0 : index
    %18 = vector.load %arg19[%c0_35, %c0_36] : memref<14x27xf32, #tpu.memory_space<vmem>>, vector<14x27xf32>
    %c0_37 = arith.constant 0 : index
    %c0_38 = arith.constant 0 : index
    %19 = vector.load %arg20[%c0_37, %c0_38] : memref<16x120xf32, #tpu.memory_space<vmem>>, vector<16x120xf32>
    %c0_39 = arith.constant 0 : index
    %c0_40 = arith.constant 0 : index
    %20 = vector.load %arg21[%c0_39, %c0_40] : memref<16x1xf32, #tpu.memory_space<vmem>>, vector<16x1xf32>
    %c0_41 = arith.constant 0 : index
    %c0_42 = arith.constant 0 : index
    %21 = vector.load %arg22[%c0_41, %c0_42] : memref<16x80xf32, #tpu.memory_space<vmem>>, vector<16x80xf32>
    %c0_43 = arith.constant 0 : index
    %c0_44 = arith.constant 0 : index
    %22 = vector.load %arg23[%c0_43, %c0_44] : memref<16x80xf32, #tpu.memory_space<vmem>>, vector<16x80xf32>
    %c0_45 = arith.constant 0 : index
    %c0_46 = arith.constant 0 : index
    %23 = vector.load %arg24[%c0_45, %c0_46] : memref<16x1xf32, #tpu.memory_space<vmem>>, vector<16x1xf32>
    %c0_47 = arith.constant 0 : index
    %c0_48 = arith.constant 0 : index
    %24 = vector.load %arg25[%c0_47, %c0_48] : memref<16x80xf32, #tpu.memory_space<vmem>>, vector<16x80xf32>
    %c0_49 = arith.constant 0 : index
    %c0_50 = arith.constant 0 : index
    %25 = vector.load %arg26[%c0_49, %c0_50] : memref<16x1xf32, #tpu.memory_space<vmem>>, vector<16x1xf32>
    %c0_51 = arith.constant 0 : index
    %c0_52 = arith.constant 0 : index
    %26 = vector.load %arg27[%c0_51, %c0_52] : memref<15x29xf32, #tpu.memory_space<vmem>>, vector<15x29xf32>
    %c0_53 = arith.constant 0 : index
    %c0_54 = arith.constant 0 : index
    %27 = vector.load %arg28[%c0_53, %c0_54] : memref<8x80xf32, #tpu.memory_space<vmem>>, vector<8x80xf32>
    %c0_55 = arith.constant 0 : index
    %c0_56 = arith.constant 0 : index
    %28 = vector.load %arg29[%c0_55, %c0_56] : memref<8x1xf32, #tpu.memory_space<vmem>>, vector<8x1xf32>
    %c0_57 = arith.constant 0 : index
    %c0_58 = arith.constant 0 : index
    %29 = vector.load %arg30[%c0_57, %c0_58] : memref<8x40xf32, #tpu.memory_space<vmem>>, vector<8x40xf32>
    %c0_59 = arith.constant 0 : index
    %c0_60 = arith.constant 0 : index
    %30 = vector.load %arg31[%c0_59, %c0_60] : memref<8x40xf32, #tpu.memory_space<vmem>>, vector<8x40xf32>
    %c0_61 = arith.constant 0 : index
    %c0_62 = arith.constant 0 : index
    %31 = vector.load %arg32[%c0_61, %c0_62] : memref<8x1xf32, #tpu.memory_space<vmem>>, vector<8x1xf32>
    %c0_63 = arith.constant 0 : index
    %c0_64 = arith.constant 0 : index
    %32 = vector.load %arg33[%c0_63, %c0_64] : memref<4x8xf32, #tpu.memory_space<vmem>>, vector<4x8xf32>
    %c0_65 = arith.constant 0 : index
    %c0_66 = arith.constant 0 : index
    %33 = vector.load %arg34[%c0_65, %c0_66] : memref<4x1xf32, #tpu.memory_space<vmem>>, vector<4x1xf32>
    %c0_67 = arith.constant 0 : index
    %c0_68 = arith.constant 0 : index
    %c0_69 = arith.constant 0 : index
    %34 = vector.load %arg0[%c0_67, %c0_68, %c0_69] : memref<2x2x105xf32, #tpu.memory_space<vmem>>, vector<1x2x105xf32>
    %35 = vector.shape_cast %34 : vector<1x2x105xf32> to vector<2x105xf32>
    %cst = arith.constant 0.000000e+00 : f32
    %36 = vector.broadcast %cst : f32 to vector<8x101xf32>
    %37 = vector.extract_strided_slice %0 {offsets = [0, 0], sizes = [8, 2], strides = [1, 1]} : vector<8x10xf32> to vector<8x2xf32>
    %38 = vector.extract_strided_slice %35 {offsets = [0, 0], sizes = [2, 101], strides = [1, 1]} : vector<2x105xf32> to vector<2x101xf32>
    %cst_70 = arith.constant dense<0.000000e+00> : vector<8x101xf32>
    %39 = tpu.matmul %37, %38, %cst_70 {dimension_numbers = #tpu.dot_dimension_numbers<[1], [0], [0], [1], [0, 0, 1, 1], [], []>} : vector<8x2xf32>, vector<2x101xf32>, vector<8x101xf32> -> vector<8x101xf32>
    %40 = arith.addf %36, %39 : vector<8x101xf32>
    %41 = vector.extract_strided_slice %0 {offsets = [0, 2], sizes = [8, 2], strides = [1, 1]} : vector<8x10xf32> to vector<8x2xf32>
    %42 = vector.extract_strided_slice %35 {offsets = [0, 1], sizes = [2, 101], strides = [1, 1]} : vector<2x105xf32> to vector<2x101xf32>
    %cst_71 = arith.constant dense<0.000000e+00> : vector<8x101xf32>
    %43 = tpu.matmul %41, %42, %cst_71 {dimension_numbers = #tpu.dot_dimension_numbers<[1], [0], [0], [1], [0, 0, 1, 1], [], []>} : vector<8x2xf32>, vector<2x101xf32>, vector<8x101xf32> -> vector<8x101xf32>
    %44 = arith.addf %40, %43 : vector<8x101xf32>
    %45 = vector.extract_strided_slice %0 {offsets = [0, 4], sizes = [8, 2], strides = [1, 1]} : vector<8x10xf32> to vector<8x2xf32>
    %46 = vector.extract_strided_slice %35 {offsets = [0, 2], sizes = [2, 101], strides = [1, 1]} : vector<2x105xf32> to vector<2x101xf32>
    %cst_72 = arith.constant dense<0.000000e+00> : vector<8x101xf32>
    %47 = tpu.matmul %45, %46, %cst_72 {dimension_numbers = #tpu.dot_dimension_numbers<[1], [0], [0], [1], [0, 0, 1, 1], [], []>} : vector<8x2xf32>, vector<2x101xf32>, vector<8x101xf32> -> vector<8x101xf32>
    %48 = arith.addf %44, %47 : vector<8x101xf32>
    %49 = vector.extract_strided_slice %0 {offsets = [0, 6], sizes = [8, 2], strides = [1, 1]} : vector<8x10xf32> to vector<8x2xf32>
    %50 = vector.extract_strided_slice %35 {offsets = [0, 3], sizes = [2, 101], strides = [1, 1]} : vector<2x105xf32> to vector<2x101xf32>
    %cst_73 = arith.constant dense<0.000000e+00> : vector<8x101xf32>
    %51 = tpu.matmul %49, %50, %cst_73 {dimension_numbers = #tpu.dot_dimension_numbers<[1], [0], [0], [1], [0, 0, 1, 1], [], []>} : vector<8x2xf32>, vector<2x101xf32>, vector<8x101xf32> -> vector<8x101xf32>
    %52 = arith.addf %48, %51 : vector<8x101xf32>
    %53 = vector.extract_strided_slice %0 {offsets = [0, 8], sizes = [8, 2], strides = [1, 1]} : vector<8x10xf32> to vector<8x2xf32>
    %54 = vector.extract_strided_slice %35 {offsets = [0, 4], sizes = [2, 101], strides = [1, 1]} : vector<2x105xf32> to vector<2x101xf32>
    %cst_74 = arith.constant dense<0.000000e+00> : vector<8x101xf32>
    %55 = tpu.matmul %53, %54, %cst_74 {dimension_numbers = #tpu.dot_dimension_numbers<[1], [0], [0], [1], [0, 0, 1, 1], [], []>} : vector<8x2xf32>, vector<2x101xf32>, vector<8x101xf32> -> vector<8x101xf32>
    %56 = arith.addf %52, %55 : vector<8x101xf32>
    %57 = vector.broadcast %1 : vector<8x1xf32> to vector<8x101xf32>
    %58 = arith.addf %56, %57 : vector<8x101xf32>
    %cst_75 = arith.constant 0.000000e+00 : f32
    %59 = vector.broadcast %cst_75 : f32 to vector<8x101xf32>
    %60 = arith.cmpf oge, %58, %59 : vector<8x101xf32>
    %cst_76 = arith.constant 0.00999999977 : f32
    %61 = vector.broadcast %cst_76 : f32 to vector<8x101xf32>
    %62 = arith.mulf %61, %58 : vector<8x101xf32>
    %63 = arith.select %60, %58, %62 : vector<8x101xi1>, vector<8x101xf32>
    %64 = vector.extract_strided_slice %63 {offsets = [0, 0], sizes = [8, 97], strides = [1, 1]} : vector<8x101xf32> to vector<8x97xf32>
    %65 = vector.extract_strided_slice %63 {offsets = [0, 1], sizes = [8, 97], strides = [1, 1]} : vector<8x101xf32> to vector<8x97xf32>
    %66 = vector.extract_strided_slice %63 {offsets = [0, 2], sizes = [8, 97], strides = [1, 1]} : vector<8x101xf32> to vector<8x97xf32>
    %67 = vector.extract_strided_slice %63 {offsets = [0, 3], sizes = [8, 97], strides = [1, 1]} : vector<8x101xf32> to vector<8x97xf32>
    %68 = vector.extract_strided_slice %63 {offsets = [0, 4], sizes = [8, 97], strides = [1, 1]} : vector<8x101xf32> to vector<8x97xf32>
    %69 = tpu.concatenate %64, %65, %66, %67, %68 in 0 : vector<8x97xf32>, vector<8x97xf32>, vector<8x97xf32>, vector<8x97xf32>, vector<8x97xf32> -> vector<40x97xf32>
    %cst_77 = arith.constant dense<0.000000e+00> : vector<16x97xf32>
    %70 = tpu.matmul %2, %69, %cst_77 {dimension_numbers = #tpu.dot_dimension_numbers<[1], [0], [0], [1], [0, 0, 1, 1], [], []>} : vector<16x40xf32>, vector<40x97xf32>, vector<16x97xf32> -> vector<16x97xf32>
    %71 = vector.broadcast %3 : vector<16x1xf32> to vector<16x97xf32>
    %72 = arith.addf %70, %71 : vector<16x97xf32>
    %cst_78 = arith.constant 0.000000e+00 : f32
    %73 = vector.broadcast %cst_78 : f32 to vector<16x97xf32>
    %74 = arith.cmpf oge, %72, %73 : vector<16x97xf32>
    %cst_79 = arith.constant 0.00999999977 : f32
    %75 = vector.broadcast %cst_79 : f32 to vector<16x97xf32>
    %76 = arith.mulf %75, %72 : vector<16x97xf32>
    %77 = arith.select %74, %72, %76 : vector<16x97xi1>, vector<16x97xf32>
    %78 = vector.extract_strided_slice %77 {offsets = [0, 0], sizes = [16, 93], strides = [1, 1]} : vector<16x97xf32> to vector<16x93xf32>
    %79 = vector.extract_strided_slice %77 {offsets = [0, 1], sizes = [16, 93], strides = [1, 1]} : vector<16x97xf32> to vector<16x93xf32>
    %80 = vector.extract_strided_slice %77 {offsets = [0, 2], sizes = [16, 93], strides = [1, 1]} : vector<16x97xf32> to vector<16x93xf32>
    %81 = vector.extract_strided_slice %77 {offsets = [0, 3], sizes = [16, 93], strides = [1, 1]} : vector<16x97xf32> to vector<16x93xf32>
    %82 = vector.extract_strided_slice %77 {offsets = [0, 4], sizes = [16, 93], strides = [1, 1]} : vector<16x97xf32> to vector<16x93xf32>
    %83 = tpu.concatenate %78, %79, %80, %81, %82 in 0 : vector<16x93xf32>, vector<16x93xf32>, vector<16x93xf32>, vector<16x93xf32>, vector<16x93xf32> -> vector<80x93xf32>
    %cst_80 = arith.constant dense<0.000000e+00> : vector<16x93xf32>
    %84 = tpu.matmul %4, %83, %cst_80 {dimension_numbers = #tpu.dot_dimension_numbers<[1], [0], [0], [1], [0, 0, 1, 1], [], []>} : vector<16x80xf32>, vector<80x93xf32>, vector<16x93xf32> -> vector<16x93xf32>
    %85 = vector.broadcast %5 : vector<16x1xf32> to vector<16x93xf32>
    %86 = arith.addf %84, %85 : vector<16x93xf32>
    %cst_81 = arith.constant 0.000000e+00 : f32
    %87 = vector.broadcast %cst_81 : f32 to vector<16x93xf32>
    %88 = arith.cmpf oge, %86, %87 : vector<16x93xf32>
    %cst_82 = arith.constant 0.00999999977 : f32
    %89 = vector.broadcast %cst_82 : f32 to vector<16x93xf32>
    %90 = arith.mulf %89, %86 : vector<16x93xf32>
    %91 = arith.select %88, %86, %90 : vector<16x93xi1>, vector<16x93xf32>
    %cst_83 = arith.constant dense<0.000000e+00> : vector<16x47xf32>
    %92 = tpu.matmul %91, %6, %cst_83 {dimension_numbers = #tpu.dot_dimension_numbers<[1], [0], [0], [1], [0, 0, 1, 1], [], []>} : vector<16x93xf32>, vector<93x47xf32>, vector<16x47xf32> -> vector<16x47xf32>
    %93 = vector.extract_strided_slice %92 {offsets = [0, 0], sizes = [16, 43], strides = [1, 1]} : vector<16x47xf32> to vector<16x43xf32>
    %94 = vector.extract_strided_slice %92 {offsets = [0, 1], sizes = [16, 43], strides = [1, 1]} : vector<16x47xf32> to vector<16x43xf32>
    %95 = vector.extract_strided_slice %92 {offsets = [0, 2], sizes = [16, 43], strides = [1, 1]} : vector<16x47xf32> to vector<16x43xf32>
    %96 = vector.extract_strided_slice %92 {offsets = [0, 3], sizes = [16, 43], strides = [1, 1]} : vector<16x47xf32> to vector<16x43xf32>
    %97 = vector.extract_strided_slice %92 {offsets = [0, 4], sizes = [16, 43], strides = [1, 1]} : vector<16x47xf32> to vector<16x43xf32>
    %98 = tpu.concatenate %93, %94, %95, %96, %97 in 0 : vector<16x43xf32>, vector<16x43xf32>, vector<16x43xf32>, vector<16x43xf32>, vector<16x43xf32> -> vector<80x43xf32>
    %cst_84 = arith.constant dense<0.000000e+00> : vector<16x43xf32>
    %99 = tpu.matmul %7, %98, %cst_84 {dimension_numbers = #tpu.dot_dimension_numbers<[1], [0], [0], [1], [0, 0, 1, 1], [], []>} : vector<16x80xf32>, vector<80x43xf32>, vector<16x43xf32> -> vector<16x43xf32>
    %100 = vector.broadcast %8 : vector<16x1xf32> to vector<16x43xf32>
    %101 = arith.addf %99, %100 : vector<16x43xf32>
    %cst_85 = arith.constant 0.000000e+00 : f32
    %102 = vector.broadcast %cst_85 : f32 to vector<16x43xf32>
    %103 = arith.cmpf oge, %101, %102 : vector<16x43xf32>
    %cst_86 = arith.constant 0.00999999977 : f32
    %104 = vector.broadcast %cst_86 : f32 to vector<16x43xf32>
    %105 = arith.mulf %104, %101 : vector<16x43xf32>
    %106 = arith.select %103, %101, %105 : vector<16x43xi1>, vector<16x43xf32>
    %107 = vector.extract_strided_slice %106 {offsets = [0, 0], sizes = [16, 39], strides = [1, 1]} : vector<16x43xf32> to vector<16x39xf32>
    %108 = vector.extract_strided_slice %106 {offsets = [0, 1], sizes = [16, 39], strides = [1, 1]} : vector<16x43xf32> to vector<16x39xf32>
    %109 = vector.extract_strided_slice %106 {offsets = [0, 2], sizes = [16, 39], strides = [1, 1]} : vector<16x43xf32> to vector<16x39xf32>
    %110 = vector.extract_strided_slice %106 {offsets = [0, 3], sizes = [16, 39], strides = [1, 1]} : vector<16x43xf32> to vector<16x39xf32>
    %111 = vector.extract_strided_slice %106 {offsets = [0, 4], sizes = [16, 39], strides = [1, 1]} : vector<16x43xf32> to vector<16x39xf32>
    %112 = tpu.concatenate %107, %108, %109, %110, %111 in 0 : vector<16x39xf32>, vector<16x39xf32>, vector<16x39xf32>, vector<16x39xf32>, vector<16x39xf32> -> vector<80x39xf32>
    %cst_87 = arith.constant dense<0.000000e+00> : vector<24x39xf32>
    %113 = tpu.matmul %9, %112, %cst_87 {dimension_numbers = #tpu.dot_dimension_numbers<[1], [0], [0], [1], [0, 0, 1, 1], [], []>} : vector<24x80xf32>, vector<80x39xf32>, vector<24x39xf32> -> vector<24x39xf32>
    %114 = vector.broadcast %10 : vector<24x1xf32> to vector<24x39xf32>
    %115 = arith.addf %113, %114 : vector<24x39xf32>
    %cst_88 = arith.constant 0.000000e+00 : f32
    %116 = vector.broadcast %cst_88 : f32 to vector<24x39xf32>
    %117 = arith.cmpf oge, %115, %116 : vector<24x39xf32>
    %cst_89 = arith.constant 0.00999999977 : f32
    %118 = vector.broadcast %cst_89 : f32 to vector<24x39xf32>
    %119 = arith.mulf %118, %115 : vector<24x39xf32>
    %120 = arith.select %117, %115, %119 : vector<24x39xi1>, vector<24x39xf32>
    %121 = vector.extract_strided_slice %120 {offsets = [0, 0], sizes = [24, 35], strides = [1, 1]} : vector<24x39xf32> to vector<24x35xf32>
    %122 = vector.extract_strided_slice %120 {offsets = [0, 1], sizes = [24, 35], strides = [1, 1]} : vector<24x39xf32> to vector<24x35xf32>
    %123 = vector.extract_strided_slice %120 {offsets = [0, 2], sizes = [24, 35], strides = [1, 1]} : vector<24x39xf32> to vector<24x35xf32>
    %124 = vector.extract_strided_slice %120 {offsets = [0, 3], sizes = [24, 35], strides = [1, 1]} : vector<24x39xf32> to vector<24x35xf32>
    %125 = vector.extract_strided_slice %120 {offsets = [0, 4], sizes = [24, 35], strides = [1, 1]} : vector<24x39xf32> to vector<24x35xf32>
    %126 = tpu.concatenate %121, %122, %123, %124, %125 in 0 : vector<24x35xf32>, vector<24x35xf32>, vector<24x35xf32>, vector<24x35xf32>, vector<24x35xf32> -> vector<120x35xf32>
    %cst_90 = arith.constant dense<0.000000e+00> : vector<24x35xf32>
    %127 = tpu.matmul %11, %126, %cst_90 {dimension_numbers = #tpu.dot_dimension_numbers<[1], [0], [0], [1], [0, 0, 1, 1], [], []>} : vector<24x120xf32>, vector<120x35xf32>, vector<24x35xf32> -> vector<24x35xf32>
    %128 = vector.broadcast %12 : vector<24x1xf32> to vector<24x35xf32>
    %129 = arith.addf %127, %128 : vector<24x35xf32>
    %cst_91 = arith.constant 0.000000e+00 : f32
    %130 = vector.broadcast %cst_91 : f32 to vector<24x35xf32>
    %131 = arith.cmpf oge, %129, %130 : vector<24x35xf32>
    %cst_92 = arith.constant 0.00999999977 : f32
    %132 = vector.broadcast %cst_92 : f32 to vector<24x35xf32>
    %133 = arith.mulf %132, %129 : vector<24x35xf32>
    %134 = arith.select %131, %129, %133 : vector<24x35xi1>, vector<24x35xf32>
    %cst_93 = arith.constant dense<0.000000e+00> : vector<24x18xf32>
    %135 = tpu.matmul %134, %13, %cst_93 {dimension_numbers = #tpu.dot_dimension_numbers<[1], [0], [0], [1], [0, 0, 1, 1], [], []>} : vector<24x35xf32>, vector<35x18xf32>, vector<24x18xf32> -> vector<24x18xf32>
    %136 = vector.extract_strided_slice %135 {offsets = [0, 0], sizes = [24, 14], strides = [1, 1]} : vector<24x18xf32> to vector<24x14xf32>
    %137 = vector.extract_strided_slice %135 {offsets = [0, 1], sizes = [24, 14], strides = [1, 1]} : vector<24x18xf32> to vector<24x14xf32>
    %138 = vector.extract_strided_slice %135 {offsets = [0, 2], sizes = [24, 14], strides = [1, 1]} : vector<24x18xf32> to vector<24x14xf32>
    %139 = vector.extract_strided_slice %135 {offsets = [0, 3], sizes = [24, 14], strides = [1, 1]} : vector<24x18xf32> to vector<24x14xf32>
    %140 = vector.extract_strided_slice %135 {offsets = [0, 4], sizes = [24, 14], strides = [1, 1]} : vector<24x18xf32> to vector<24x14xf32>
    %141 = tpu.concatenate %136, %137, %138, %139, %140 in 0 : vector<24x14xf32>, vector<24x14xf32>, vector<24x14xf32>, vector<24x14xf32>, vector<24x14xf32> -> vector<120x14xf32>
    %cst_94 = arith.constant dense<0.000000e+00> : vector<24x14xf32>
    %142 = tpu.matmul %14, %141, %cst_94 {dimension_numbers = #tpu.dot_dimension_numbers<[1], [0], [0], [1], [0, 0, 1, 1], [], []>} : vector<24x120xf32>, vector<120x14xf32>, vector<24x14xf32> -> vector<24x14xf32>
    %143 = vector.broadcast %15 : vector<24x1xf32> to vector<24x14xf32>
    %144 = arith.addf %142, %143 : vector<24x14xf32>
    %cst_95 = arith.constant 0.000000e+00 : f32
    %145 = vector.broadcast %cst_95 : f32 to vector<24x14xf32>
    %146 = arith.cmpf oge, %144, %145 : vector<24x14xf32>
    %cst_96 = arith.constant 0.00999999977 : f32
    %147 = vector.broadcast %cst_96 : f32 to vector<24x14xf32>
    %148 = arith.mulf %147, %144 : vector<24x14xf32>
    %149 = arith.select %146, %144, %148 : vector<24x14xi1>, vector<24x14xf32>
    %cst_97 = arith.constant dense<0.000000e+00> : vector<24x27xf32>
    %150 = tpu.matmul %149, %18, %cst_97 {dimension_numbers = #tpu.dot_dimension_numbers<[1], [0], [0], [1], [0, 0, 1, 1], [], []>} : vector<24x14xf32>, vector<14x27xf32>, vector<24x27xf32> -> vector<24x27xf32>
    %151 = vector.extract_strided_slice %150 {offsets = [0, 0], sizes = [24, 23], strides = [1, 1]} : vector<24x27xf32> to vector<24x23xf32>
    %152 = vector.extract_strided_slice %150 {offsets = [0, 1], sizes = [24, 23], strides = [1, 1]} : vector<24x27xf32> to vector<24x23xf32>
    %153 = vector.extract_strided_slice %150 {offsets = [0, 2], sizes = [24, 23], strides = [1, 1]} : vector<24x27xf32> to vector<24x23xf32>
    %154 = vector.extract_strided_slice %150 {offsets = [0, 3], sizes = [24, 23], strides = [1, 1]} : vector<24x27xf32> to vector<24x23xf32>
    %155 = vector.extract_strided_slice %150 {offsets = [0, 4], sizes = [24, 23], strides = [1, 1]} : vector<24x27xf32> to vector<24x23xf32>
    %156 = tpu.concatenate %151, %152, %153, %154, %155 in 0 : vector<24x23xf32>, vector<24x23xf32>, vector<24x23xf32>, vector<24x23xf32>, vector<24x23xf32> -> vector<120x23xf32>
    %cst_98 = arith.constant dense<0.000000e+00> : vector<24x23xf32>
    %157 = tpu.matmul %16, %156, %cst_98 {dimension_numbers = #tpu.dot_dimension_numbers<[1], [0], [0], [1], [0, 0, 1, 1], [], []>} : vector<24x120xf32>, vector<120x23xf32>, vector<24x23xf32> -> vector<24x23xf32>
    %158 = vector.broadcast %17 : vector<24x1xf32> to vector<24x23xf32>
    %159 = arith.addf %157, %158 : vector<24x23xf32>
    %cst_99 = arith.constant 0.000000e+00 : f32
    %160 = vector.broadcast %cst_99 : f32 to vector<24x23xf32>
    %161 = arith.cmpf oge, %159, %160 : vector<24x23xf32>
    %cst_100 = arith.constant 0.00999999977 : f32
    %162 = vector.broadcast %cst_100 : f32 to vector<24x23xf32>
    %163 = arith.mulf %162, %159 : vector<24x23xf32>
    %164 = arith.select %161, %159, %163 : vector<24x23xi1>, vector<24x23xf32>
    %165 = vector.extract_strided_slice %164 {offsets = [0, 0], sizes = [24, 19], strides = [1, 1]} : vector<24x23xf32> to vector<24x19xf32>
    %166 = vector.extract_strided_slice %164 {offsets = [0, 1], sizes = [24, 19], strides = [1, 1]} : vector<24x23xf32> to vector<24x19xf32>
    %167 = vector.extract_strided_slice %164 {offsets = [0, 2], sizes = [24, 19], strides = [1, 1]} : vector<24x23xf32> to vector<24x19xf32>
    %168 = vector.extract_strided_slice %164 {offsets = [0, 3], sizes = [24, 19], strides = [1, 1]} : vector<24x23xf32> to vector<24x19xf32>
    %169 = vector.extract_strided_slice %164 {offsets = [0, 4], sizes = [24, 19], strides = [1, 1]} : vector<24x23xf32> to vector<24x19xf32>
    %170 = tpu.concatenate %165, %166, %167, %168, %169 in 0 : vector<24x19xf32>, vector<24x19xf32>, vector<24x19xf32>, vector<24x19xf32>, vector<24x19xf32> -> vector<120x19xf32>
    %cst_101 = arith.constant dense<0.000000e+00> : vector<16x19xf32>
    %171 = tpu.matmul %19, %170, %cst_101 {dimension_numbers = #tpu.dot_dimension_numbers<[1], [0], [0], [1], [0, 0, 1, 1], [], []>} : vector<16x120xf32>, vector<120x19xf32>, vector<16x19xf32> -> vector<16x19xf32>
    %172 = vector.broadcast %20 : vector<16x1xf32> to vector<16x19xf32>
    %173 = arith.addf %171, %172 : vector<16x19xf32>
    %cst_102 = arith.constant 0.000000e+00 : f32
    %174 = vector.broadcast %cst_102 : f32 to vector<16x19xf32>
    %175 = arith.cmpf oge, %173, %174 : vector<16x19xf32>
    %cst_103 = arith.constant 0.00999999977 : f32
    %176 = vector.broadcast %cst_103 : f32 to vector<16x19xf32>
    %177 = arith.mulf %176, %173 : vector<16x19xf32>
    %178 = arith.select %175, %173, %177 : vector<16x19xi1>, vector<16x19xf32>
    %179 = vector.extract_strided_slice %106 {offsets = [0, 12], sizes = [16, 19], strides = [1, 1]} : vector<16x43xf32> to vector<16x19xf32>
    %180 = vector.extract_strided_slice %179 {offsets = [0, 0], sizes = [16, 15], strides = [1, 1]} : vector<16x19xf32> to vector<16x15xf32>
    %181 = vector.extract_strided_slice %179 {offsets = [0, 1], sizes = [16, 15], strides = [1, 1]} : vector<16x19xf32> to vector<16x15xf32>
    %182 = vector.extract_strided_slice %179 {offsets = [0, 2], sizes = [16, 15], strides = [1, 1]} : vector<16x19xf32> to vector<16x15xf32>
    %183 = vector.extract_strided_slice %179 {offsets = [0, 3], sizes = [16, 15], strides = [1, 1]} : vector<16x19xf32> to vector<16x15xf32>
    %184 = vector.extract_strided_slice %179 {offsets = [0, 4], sizes = [16, 15], strides = [1, 1]} : vector<16x19xf32> to vector<16x15xf32>
    %185 = tpu.concatenate %180, %181, %182, %183, %184 in 0 : vector<16x15xf32>, vector<16x15xf32>, vector<16x15xf32>, vector<16x15xf32>, vector<16x15xf32> -> vector<80x15xf32>
    %cst_104 = arith.constant dense<0.000000e+00> : vector<16x15xf32>
    %186 = tpu.matmul %21, %185, %cst_104 {dimension_numbers = #tpu.dot_dimension_numbers<[1], [0], [0], [1], [0, 0, 1, 1], [], []>} : vector<16x80xf32>, vector<80x15xf32>, vector<16x15xf32> -> vector<16x15xf32>
    %187 = vector.extract_strided_slice %178 {offsets = [0, 0], sizes = [16, 15], strides = [1, 1]} : vector<16x19xf32> to vector<16x15xf32>
    %188 = vector.extract_strided_slice %178 {offsets = [0, 1], sizes = [16, 15], strides = [1, 1]} : vector<16x19xf32> to vector<16x15xf32>
    %189 = vector.extract_strided_slice %178 {offsets = [0, 2], sizes = [16, 15], strides = [1, 1]} : vector<16x19xf32> to vector<16x15xf32>
    %190 = vector.extract_strided_slice %178 {offsets = [0, 3], sizes = [16, 15], strides = [1, 1]} : vector<16x19xf32> to vector<16x15xf32>
    %191 = vector.extract_strided_slice %178 {offsets = [0, 4], sizes = [16, 15], strides = [1, 1]} : vector<16x19xf32> to vector<16x15xf32>
    %192 = tpu.concatenate %187, %188, %189, %190, %191 in 0 : vector<16x15xf32>, vector<16x15xf32>, vector<16x15xf32>, vector<16x15xf32>, vector<16x15xf32> -> vector<80x15xf32>
    %cst_105 = arith.constant dense<0.000000e+00> : vector<16x15xf32>
    %193 = tpu.matmul %22, %192, %cst_105 {dimension_numbers = #tpu.dot_dimension_numbers<[1], [0], [0], [1], [0, 0, 1, 1], [], []>} : vector<16x80xf32>, vector<80x15xf32>, vector<16x15xf32> -> vector<16x15xf32>
    %194 = arith.addf %186, %193 : vector<16x15xf32>
    %195 = vector.broadcast %23 : vector<16x1xf32> to vector<16x15xf32>
    %196 = arith.addf %194, %195 : vector<16x15xf32>
    %cst_106 = arith.constant 0.000000e+00 : f32
    %197 = vector.broadcast %cst_106 : f32 to vector<16x15xf32>
    %198 = arith.cmpf oge, %196, %197 : vector<16x15xf32>
    %cst_107 = arith.constant 0.00999999977 : f32
    %199 = vector.broadcast %cst_107 : f32 to vector<16x15xf32>
    %200 = arith.mulf %199, %196 : vector<16x15xf32>
    %201 = arith.select %198, %196, %200 : vector<16x15xi1>, vector<16x15xf32>
    %cst_108 = arith.constant dense<0.000000e+00> : vector<16x29xf32>
    %202 = tpu.matmul %201, %26, %cst_108 {dimension_numbers = #tpu.dot_dimension_numbers<[1], [0], [0], [1], [0, 0, 1, 1], [], []>} : vector<16x15xf32>, vector<15x29xf32>, vector<16x29xf32> -> vector<16x29xf32>
    %203 = vector.extract_strided_slice %202 {offsets = [0, 0], sizes = [16, 25], strides = [1, 1]} : vector<16x29xf32> to vector<16x25xf32>
    %204 = vector.extract_strided_slice %202 {offsets = [0, 1], sizes = [16, 25], strides = [1, 1]} : vector<16x29xf32> to vector<16x25xf32>
    %205 = vector.extract_strided_slice %202 {offsets = [0, 2], sizes = [16, 25], strides = [1, 1]} : vector<16x29xf32> to vector<16x25xf32>
    %206 = vector.extract_strided_slice %202 {offsets = [0, 3], sizes = [16, 25], strides = [1, 1]} : vector<16x29xf32> to vector<16x25xf32>
    %207 = vector.extract_strided_slice %202 {offsets = [0, 4], sizes = [16, 25], strides = [1, 1]} : vector<16x29xf32> to vector<16x25xf32>
    %208 = tpu.concatenate %203, %204, %205, %206, %207 in 0 : vector<16x25xf32>, vector<16x25xf32>, vector<16x25xf32>, vector<16x25xf32>, vector<16x25xf32> -> vector<80x25xf32>
    %cst_109 = arith.constant dense<0.000000e+00> : vector<16x25xf32>
    %209 = tpu.matmul %24, %208, %cst_109 {dimension_numbers = #tpu.dot_dimension_numbers<[1], [0], [0], [1], [0, 0, 1, 1], [], []>} : vector<16x80xf32>, vector<80x25xf32>, vector<16x25xf32> -> vector<16x25xf32>
    %210 = vector.broadcast %25 : vector<16x1xf32> to vector<16x25xf32>
    %211 = arith.addf %209, %210 : vector<16x25xf32>
    %cst_110 = arith.constant 0.000000e+00 : f32
    %212 = vector.broadcast %cst_110 : f32 to vector<16x25xf32>
    %213 = arith.cmpf oge, %211, %212 : vector<16x25xf32>
    %cst_111 = arith.constant 0.00999999977 : f32
    %214 = vector.broadcast %cst_111 : f32 to vector<16x25xf32>
    %215 = arith.mulf %214, %211 : vector<16x25xf32>
    %216 = arith.select %213, %211, %215 : vector<16x25xi1>, vector<16x25xf32>
    %217 = vector.extract_strided_slice %216 {offsets = [0, 0], sizes = [16, 21], strides = [1, 1]} : vector<16x25xf32> to vector<16x21xf32>
    %218 = vector.extract_strided_slice %216 {offsets = [0, 1], sizes = [16, 21], strides = [1, 1]} : vector<16x25xf32> to vector<16x21xf32>
    %219 = vector.extract_strided_slice %216 {offsets = [0, 2], sizes = [16, 21], strides = [1, 1]} : vector<16x25xf32> to vector<16x21xf32>
    %220 = vector.extract_strided_slice %216 {offsets = [0, 3], sizes = [16, 21], strides = [1, 1]} : vector<16x25xf32> to vector<16x21xf32>
    %221 = vector.extract_strided_slice %216 {offsets = [0, 4], sizes = [16, 21], strides = [1, 1]} : vector<16x25xf32> to vector<16x21xf32>
    %222 = tpu.concatenate %217, %218, %219, %220, %221 in 0 : vector<16x21xf32>, vector<16x21xf32>, vector<16x21xf32>, vector<16x21xf32>, vector<16x21xf32> -> vector<80x21xf32>
    %cst_112 = arith.constant dense<0.000000e+00> : vector<8x21xf32>
    %223 = tpu.matmul %27, %222, %cst_112 {dimension_numbers = #tpu.dot_dimension_numbers<[1], [0], [0], [1], [0, 0, 1, 1], [], []>} : vector<8x80xf32>, vector<80x21xf32>, vector<8x21xf32> -> vector<8x21xf32>
    %224 = vector.broadcast %28 : vector<8x1xf32> to vector<8x21xf32>
    %225 = arith.addf %223, %224 : vector<8x21xf32>
    %cst_113 = arith.constant 0.000000e+00 : f32
    %226 = vector.broadcast %cst_113 : f32 to vector<8x21xf32>
    %227 = arith.cmpf oge, %225, %226 : vector<8x21xf32>
    %cst_114 = arith.constant 0.00999999977 : f32
    %228 = vector.broadcast %cst_114 : f32 to vector<8x21xf32>
    %229 = arith.mulf %228, %225 : vector<8x21xf32>
    %230 = arith.select %227, %225, %229 : vector<8x21xi1>, vector<8x21xf32>
    %231 = vector.extract_strided_slice %63 {offsets = [0, 40], sizes = [8, 21], strides = [1, 1]} : vector<8x101xf32> to vector<8x21xf32>
    %232 = vector.extract_strided_slice %231 {offsets = [0, 0], sizes = [8, 17], strides = [1, 1]} : vector<8x21xf32> to vector<8x17xf32>
    %233 = vector.extract_strided_slice %231 {offsets = [0, 1], sizes = [8, 17], strides = [1, 1]} : vector<8x21xf32> to vector<8x17xf32>
    %234 = vector.extract_strided_slice %231 {offsets = [0, 2], sizes = [8, 17], strides = [1, 1]} : vector<8x21xf32> to vector<8x17xf32>
    %235 = vector.extract_strided_slice %231 {offsets = [0, 3], sizes = [8, 17], strides = [1, 1]} : vector<8x21xf32> to vector<8x17xf32>
    %236 = vector.extract_strided_slice %231 {offsets = [0, 4], sizes = [8, 17], strides = [1, 1]} : vector<8x21xf32> to vector<8x17xf32>
    %237 = tpu.concatenate %232, %233, %234, %235, %236 in 0 : vector<8x17xf32>, vector<8x17xf32>, vector<8x17xf32>, vector<8x17xf32>, vector<8x17xf32> -> vector<40x17xf32>
    %cst_115 = arith.constant dense<0.000000e+00> : vector<8x17xf32>
    %238 = tpu.matmul %29, %237, %cst_115 {dimension_numbers = #tpu.dot_dimension_numbers<[1], [0], [0], [1], [0, 0, 1, 1], [], []>} : vector<8x40xf32>, vector<40x17xf32>, vector<8x17xf32> -> vector<8x17xf32>
    %239 = vector.extract_strided_slice %230 {offsets = [0, 0], sizes = [8, 17], strides = [1, 1]} : vector<8x21xf32> to vector<8x17xf32>
    %240 = vector.extract_strided_slice %230 {offsets = [0, 1], sizes = [8, 17], strides = [1, 1]} : vector<8x21xf32> to vector<8x17xf32>
    %241 = vector.extract_strided_slice %230 {offsets = [0, 2], sizes = [8, 17], strides = [1, 1]} : vector<8x21xf32> to vector<8x17xf32>
    %242 = vector.extract_strided_slice %230 {offsets = [0, 3], sizes = [8, 17], strides = [1, 1]} : vector<8x21xf32> to vector<8x17xf32>
    %243 = vector.extract_strided_slice %230 {offsets = [0, 4], sizes = [8, 17], strides = [1, 1]} : vector<8x21xf32> to vector<8x17xf32>
    %244 = tpu.concatenate %239, %240, %241, %242, %243 in 0 : vector<8x17xf32>, vector<8x17xf32>, vector<8x17xf32>, vector<8x17xf32>, vector<8x17xf32> -> vector<40x17xf32>
    %cst_116 = arith.constant dense<0.000000e+00> : vector<8x17xf32>
    %245 = tpu.matmul %30, %244, %cst_116 {dimension_numbers = #tpu.dot_dimension_numbers<[1], [0], [0], [1], [0, 0, 1, 1], [], []>} : vector<8x40xf32>, vector<40x17xf32>, vector<8x17xf32> -> vector<8x17xf32>
    %246 = arith.addf %238, %245 : vector<8x17xf32>
    %247 = vector.broadcast %31 : vector<8x1xf32> to vector<8x17xf32>
    %248 = arith.addf %246, %247 : vector<8x17xf32>
    %cst_117 = arith.constant 0.000000e+00 : f32
    %249 = vector.broadcast %cst_117 : f32 to vector<8x17xf32>
    %250 = arith.cmpf oge, %248, %249 : vector<8x17xf32>
    %cst_118 = arith.constant 0.00999999977 : f32
    %251 = vector.broadcast %cst_118 : f32 to vector<8x17xf32>
    %252 = arith.mulf %251, %248 : vector<8x17xf32>
    %253 = arith.select %250, %248, %252 : vector<8x17xi1>, vector<8x17xf32>
    %cst_119 = arith.constant dense<0.000000e+00> : vector<4x17xf32>
    %254 = tpu.matmul %32, %253, %cst_119 {dimension_numbers = #tpu.dot_dimension_numbers<[1], [0], [0], [1], [0, 0, 1, 1], [], []>} : vector<4x8xf32>, vector<8x17xf32>, vector<4x17xf32> -> vector<4x17xf32>
    %255 = vector.broadcast %33 : vector<4x1xf32> to vector<4x17xf32>
    %256 = arith.addf %254, %255 : vector<4x17xf32>
    %cst_120 = arith.constant -1.000000e+00 : f32
    %cst_121 = arith.constant 1.000000e+00 : f32
    %257 = vector.broadcast %cst_120 : f32 to vector<4x17xf32>
    %258 = arith.maximumf %257, %256 : vector<4x17xf32>
    %259 = vector.broadcast %cst_121 : f32 to vector<4x17xf32>
    %260 = arith.minimumf %259, %258 : vector<4x17xf32>
    %c0_122 = arith.constant 0 : index
    %c0_123 = arith.constant 0 : index
    %c0_124 = arith.constant 0 : index
    %261 = vector.load %arg35[%c0_122, %c0_123, %c0_124] : memref<2x4x17xf32, #tpu.memory_space<vmem>>, vector<1x4x17xf32>
    %262 = vector.shape_cast %261 : vector<1x4x17xf32> to vector<4x17xf32>
    %263 = vector.shape_cast %260 : vector<4x17xf32> to vector<1x4x17xf32>
    tpu.vector_store %arg35[%c0_122, %c0_123, %c0_124], %263 {strides = array<i32>} : memref<2x4x17xf32, #tpu.memory_space<vmem>>, vector<1x4x17xf32>,
    %c1 = arith.constant 1 : index
    %c0_125 = arith.constant 0 : index
    %c0_126 = arith.constant 0 : index
    %264 = vector.load %arg0[%c1, %c0_125, %c0_126] : memref<2x2x105xf32, #tpu.memory_space<vmem>>, vector<1x2x105xf32>
    %265 = vector.shape_cast %264 : vector<1x2x105xf32> to vector<2x105xf32>
    %cst_127 = arith.constant 0.000000e+00 : f32
    %266 = vector.broadcast %cst_127 : f32 to vector<8x101xf32>
    %267 = vector.extract_strided_slice %0 {offsets = [0, 0], sizes = [8, 2], strides = [1, 1]} : vector<8x10xf32> to vector<8x2xf32>
    %268 = vector.extract_strided_slice %265 {offsets = [0, 0], sizes = [2, 101], strides = [1, 1]} : vector<2x105xf32> to vector<2x101xf32>
    %cst_128 = arith.constant dense<0.000000e+00> : vector<8x101xf32>
    %269 = tpu.matmul %267, %268, %cst_128 {dimension_numbers = #tpu.dot_dimension_numbers<[1], [0], [0], [1], [0, 0, 1, 1], [], []>} : vector<8x2xf32>, vector<2x101xf32>, vector<8x101xf32> -> vector<8x101xf32>
    %270 = arith.addf %266, %269 : vector<8x101xf32>
    %271 = vector.extract_strided_slice %0 {offsets = [0, 2], sizes = [8, 2], strides = [1, 1]} : vector<8x10xf32> to vector<8x2xf32>
    %272 = vector.extract_strided_slice %265 {offsets = [0, 1], sizes = [2, 101], strides = [1, 1]} : vector<2x105xf32> to vector<2x101xf32>
    %cst_129 = arith.constant dense<0.000000e+00> : vector<8x101xf32>
    %273 = tpu.matmul %271, %272, %cst_129 {dimension_numbers = #tpu.dot_dimension_numbers<[1], [0], [0], [1], [0, 0, 1, 1], [], []>} : vector<8x2xf32>, vector<2x101xf32>, vector<8x101xf32> -> vector<8x101xf32>
    %274 = arith.addf %270, %273 : vector<8x101xf32>
    %275 = vector.extract_strided_slice %0 {offsets = [0, 4], sizes = [8, 2], strides = [1, 1]} : vector<8x10xf32> to vector<8x2xf32>
    %276 = vector.extract_strided_slice %265 {offsets = [0, 2], sizes = [2, 101], strides = [1, 1]} : vector<2x105xf32> to vector<2x101xf32>
    %cst_130 = arith.constant dense<0.000000e+00> : vector<8x101xf32>
    %277 = tpu.matmul %275, %276, %cst_130 {dimension_numbers = #tpu.dot_dimension_numbers<[1], [0], [0], [1], [0, 0, 1, 1], [], []>} : vector<8x2xf32>, vector<2x101xf32>, vector<8x101xf32> -> vector<8x101xf32>
    %278 = arith.addf %274, %277 : vector<8x101xf32>
    %279 = vector.extract_strided_slice %0 {offsets = [0, 6], sizes = [8, 2], strides = [1, 1]} : vector<8x10xf32> to vector<8x2xf32>
    %280 = vector.extract_strided_slice %265 {offsets = [0, 3], sizes = [2, 101], strides = [1, 1]} : vector<2x105xf32> to vector<2x101xf32>
    %cst_131 = arith.constant dense<0.000000e+00> : vector<8x101xf32>
    %281 = tpu.matmul %279, %280, %cst_131 {dimension_numbers = #tpu.dot_dimension_numbers<[1], [0], [0], [1], [0, 0, 1, 1], [], []>} : vector<8x2xf32>, vector<2x101xf32>, vector<8x101xf32> -> vector<8x101xf32>
    %282 = arith.addf %278, %281 : vector<8x101xf32>
    %283 = vector.extract_strided_slice %0 {offsets = [0, 8], sizes = [8, 2], strides = [1, 1]} : vector<8x10xf32> to vector<8x2xf32>
    %284 = vector.extract_strided_slice %265 {offsets = [0, 4], sizes = [2, 101], strides = [1, 1]} : vector<2x105xf32> to vector<2x101xf32>
    %cst_132 = arith.constant dense<0.000000e+00> : vector<8x101xf32>
    %285 = tpu.matmul %283, %284, %cst_132 {dimension_numbers = #tpu.dot_dimension_numbers<[1], [0], [0], [1], [0, 0, 1, 1], [], []>} : vector<8x2xf32>, vector<2x101xf32>, vector<8x101xf32> -> vector<8x101xf32>
    %286 = arith.addf %282, %285 : vector<8x101xf32>
    %287 = vector.broadcast %1 : vector<8x1xf32> to vector<8x101xf32>
    %288 = arith.addf %286, %287 : vector<8x101xf32>
    %cst_133 = arith.constant 0.000000e+00 : f32
    %289 = vector.broadcast %cst_133 : f32 to vector<8x101xf32>
    %290 = arith.cmpf oge, %288, %289 : vector<8x101xf32>
    %cst_134 = arith.constant 0.00999999977 : f32
    %291 = vector.broadcast %cst_134 : f32 to vector<8x101xf32>
    %292 = arith.mulf %291, %288 : vector<8x101xf32>
    %293 = arith.select %290, %288, %292 : vector<8x101xi1>, vector<8x101xf32>
    %294 = vector.extract_strided_slice %293 {offsets = [0, 0], sizes = [8, 97], strides = [1, 1]} : vector<8x101xf32> to vector<8x97xf32>
    %295 = vector.extract_strided_slice %293 {offsets = [0, 1], sizes = [8, 97], strides = [1, 1]} : vector<8x101xf32> to vector<8x97xf32>
    %296 = vector.extract_strided_slice %293 {offsets = [0, 2], sizes = [8, 97], strides = [1, 1]} : vector<8x101xf32> to vector<8x97xf32>
    %297 = vector.extract_strided_slice %293 {offsets = [0, 3], sizes = [8, 97], strides = [1, 1]} : vector<8x101xf32> to vector<8x97xf32>
    %298 = vector.extract_strided_slice %293 {offsets = [0, 4], sizes = [8, 97], strides = [1, 1]} : vector<8x101xf32> to vector<8x97xf32>
    %299 = tpu.concatenate %294, %295, %296, %297, %298 in 0 : vector<8x97xf32>, vector<8x97xf32>, vector<8x97xf32>, vector<8x97xf32>, vector<8x97xf32> -> vector<40x97xf32>
    %cst_135 = arith.constant dense<0.000000e+00> : vector<16x97xf32>
    %300 = tpu.matmul %2, %299, %cst_135 {dimension_numbers = #tpu.dot_dimension_numbers<[1], [0], [0], [1], [0, 0, 1, 1], [], []>} : vector<16x40xf32>, vector<40x97xf32>, vector<16x97xf32> -> vector<16x97xf32>
    %301 = vector.broadcast %3 : vector<16x1xf32> to vector<16x97xf32>
    %302 = arith.addf %300, %301 : vector<16x97xf32>
    %cst_136 = arith.constant 0.000000e+00 : f32
    %303 = vector.broadcast %cst_136 : f32 to vector<16x97xf32>
    %304 = arith.cmpf oge, %302, %303 : vector<16x97xf32>
    %cst_137 = arith.constant 0.00999999977 : f32
    %305 = vector.broadcast %cst_137 : f32 to vector<16x97xf32>
    %306 = arith.mulf %305, %302 : vector<16x97xf32>
    %307 = arith.select %304, %302, %306 : vector<16x97xi1>, vector<16x97xf32>
    %308 = vector.extract_strided_slice %307 {offsets = [0, 0], sizes = [16, 93], strides = [1, 1]} : vector<16x97xf32> to vector<16x93xf32>
    %309 = vector.extract_strided_slice %307 {offsets = [0, 1], sizes = [16, 93], strides = [1, 1]} : vector<16x97xf32> to vector<16x93xf32>
    %310 = vector.extract_strided_slice %307 {offsets = [0, 2], sizes = [16, 93], strides = [1, 1]} : vector<16x97xf32> to vector<16x93xf32>
    %311 = vector.extract_strided_slice %307 {offsets = [0, 3], sizes = [16, 93], strides = [1, 1]} : vector<16x97xf32> to vector<16x93xf32>
    %312 = vector.extract_strided_slice %307 {offsets = [0, 4], sizes = [16, 93], strides = [1, 1]} : vector<16x97xf32> to vector<16x93xf32>
    %313 = tpu.concatenate %308, %309, %310, %311, %312 in 0 : vector<16x93xf32>, vector<16x93xf32>, vector<16x93xf32>, vector<16x93xf32>, vector<16x93xf32> -> vector<80x93xf32>
    %cst_138 = arith.constant dense<0.000000e+00> : vector<16x93xf32>
    %314 = tpu.matmul %4, %313, %cst_138 {dimension_numbers = #tpu.dot_dimension_numbers<[1], [0], [0], [1], [0, 0, 1, 1], [], []>} : vector<16x80xf32>, vector<80x93xf32>, vector<16x93xf32> -> vector<16x93xf32>
    %315 = vector.broadcast %5 : vector<16x1xf32> to vector<16x93xf32>
    %316 = arith.addf %314, %315 : vector<16x93xf32>
    %cst_139 = arith.constant 0.000000e+00 : f32
    %317 = vector.broadcast %cst_139 : f32 to vector<16x93xf32>
    %318 = arith.cmpf oge, %316, %317 : vector<16x93xf32>
    %cst_140 = arith.constant 0.00999999977 : f32
    %319 = vector.broadcast %cst_140 : f32 to vector<16x93xf32>
    %320 = arith.mulf %319, %316 : vector<16x93xf32>
    %321 = arith.select %318, %316, %320 : vector<16x93xi1>, vector<16x93xf32>
    %cst_141 = arith.constant dense<0.000000e+00> : vector<16x47xf32>
    %322 = tpu.matmul %321, %6, %cst_141 {dimension_numbers = #tpu.dot_dimension_numbers<[1], [0], [0], [1], [0, 0, 1, 1], [], []>} : vector<16x93xf32>, vector<93x47xf32>, vector<16x47xf32> -> vector<16x47xf32>
    %323 = vector.extract_strided_slice %322 {offsets = [0, 0], sizes = [16, 43], strides = [1, 1]} : vector<16x47xf32> to vector<16x43xf32>
    %324 = vector.extract_strided_slice %322 {offsets = [0, 1], sizes = [16, 43], strides = [1, 1]} : vector<16x47xf32> to vector<16x43xf32>
    %325 = vector.extract_strided_slice %322 {offsets = [0, 2], sizes = [16, 43], strides = [1, 1]} : vector<16x47xf32> to vector<16x43xf32>
    %326 = vector.extract_strided_slice %322 {offsets = [0, 3], sizes = [16, 43], strides = [1, 1]} : vector<16x47xf32> to vector<16x43xf32>
    %327 = vector.extract_strided_slice %322 {offsets = [0, 4], sizes = [16, 43], strides = [1, 1]} : vector<16x47xf32> to vector<16x43xf32>
    %328 = tpu.concatenate %323, %324, %325, %326, %327 in 0 : vector<16x43xf32>, vector<16x43xf32>, vector<16x43xf32>, vector<16x43xf32>, vector<16x43xf32> -> vector<80x43xf32>
    %cst_142 = arith.constant dense<0.000000e+00> : vector<16x43xf32>
    %329 = tpu.matmul %7, %328, %cst_142 {dimension_numbers = #tpu.dot_dimension_numbers<[1], [0], [0], [1], [0, 0, 1, 1], [], []>} : vector<16x80xf32>, vector<80x43xf32>, vector<16x43xf32> -> vector<16x43xf32>
    %330 = vector.broadcast %8 : vector<16x1xf32> to vector<16x43xf32>
    %331 = arith.addf %329, %330 : vector<16x43xf32>
    %cst_143 = arith.constant 0.000000e+00 : f32
    %332 = vector.broadcast %cst_143 : f32 to vector<16x43xf32>
    %333 = arith.cmpf oge, %331, %332 : vector<16x43xf32>
    %cst_144 = arith.constant 0.00999999977 : f32
    %334 = vector.broadcast %cst_144 : f32 to vector<16x43xf32>
    %335 = arith.mulf %334, %331 : vector<16x43xf32>
    %336 = arith.select %333, %331, %335 : vector<16x43xi1>, vector<16x43xf32>
    %337 = vector.extract_strided_slice %336 {offsets = [0, 0], sizes = [16, 39], strides = [1, 1]} : vector<16x43xf32> to vector<16x39xf32>
    %338 = vector.extract_strided_slice %336 {offsets = [0, 1], sizes = [16, 39], strides = [1, 1]} : vector<16x43xf32> to vector<16x39xf32>
    %339 = vector.extract_strided_slice %336 {offsets = [0, 2], sizes = [16, 39], strides = [1, 1]} : vector<16x43xf32> to vector<16x39xf32>
    %340 = vector.extract_strided_slice %336 {offsets = [0, 3], sizes = [16, 39], strides = [1, 1]} : vector<16x43xf32> to vector<16x39xf32>
    %341 = vector.extract_strided_slice %336 {offsets = [0, 4], sizes = [16, 39], strides = [1, 1]} : vector<16x43xf32> to vector<16x39xf32>
    %342 = tpu.concatenate %337, %338, %339, %340, %341 in 0 : vector<16x39xf32>, vector<16x39xf32>, vector<16x39xf32>, vector<16x39xf32>, vector<16x39xf32> -> vector<80x39xf32>
    %cst_145 = arith.constant dense<0.000000e+00> : vector<24x39xf32>
    %343 = tpu.matmul %9, %342, %cst_145 {dimension_numbers = #tpu.dot_dimension_numbers<[1], [0], [0], [1], [0, 0, 1, 1], [], []>} : vector<24x80xf32>, vector<80x39xf32>, vector<24x39xf32> -> vector<24x39xf32>
    %344 = vector.broadcast %10 : vector<24x1xf32> to vector<24x39xf32>
    %345 = arith.addf %343, %344 : vector<24x39xf32>
    %cst_146 = arith.constant 0.000000e+00 : f32
    %346 = vector.broadcast %cst_146 : f32 to vector<24x39xf32>
    %347 = arith.cmpf oge, %345, %346 : vector<24x39xf32>
    %cst_147 = arith.constant 0.00999999977 : f32
    %348 = vector.broadcast %cst_147 : f32 to vector<24x39xf32>
    %349 = arith.mulf %348, %345 : vector<24x39xf32>
    %350 = arith.select %347, %345, %349 : vector<24x39xi1>, vector<24x39xf32>
    %351 = vector.extract_strided_slice %350 {offsets = [0, 0], sizes = [24, 35], strides = [1, 1]} : vector<24x39xf32> to vector<24x35xf32>
    %352 = vector.extract_strided_slice %350 {offsets = [0, 1], sizes = [24, 35], strides = [1, 1]} : vector<24x39xf32> to vector<24x35xf32>
    %353 = vector.extract_strided_slice %350 {offsets = [0, 2], sizes = [24, 35], strides = [1, 1]} : vector<24x39xf32> to vector<24x35xf32>
    %354 = vector.extract_strided_slice %350 {offsets = [0, 3], sizes = [24, 35], strides = [1, 1]} : vector<24x39xf32> to vector<24x35xf32>
    %355 = vector.extract_strided_slice %350 {offsets = [0, 4], sizes = [24, 35], strides = [1, 1]} : vector<24x39xf32> to vector<24x35xf32>
    %356 = tpu.concatenate %351, %352, %353, %354, %355 in 0 : vector<24x35xf32>, vector<24x35xf32>, vector<24x35xf32>, vector<24x35xf32>, vector<24x35xf32> -> vector<120x35xf32>
    %cst_148 = arith.constant dense<0.000000e+00> : vector<24x35xf32>
    %357 = tpu.matmul %11, %356, %cst_148 {dimension_numbers = #tpu.dot_dimension_numbers<[1], [0], [0], [1], [0, 0, 1, 1], [], []>} : vector<24x120xf32>, vector<120x35xf32>, vector<24x35xf32> -> vector<24x35xf32>
    %358 = vector.broadcast %12 : vector<24x1xf32> to vector<24x35xf32>
    %359 = arith.addf %357, %358 : vector<24x35xf32>
    %cst_149 = arith.constant 0.000000e+00 : f32
    %360 = vector.broadcast %cst_149 : f32 to vector<24x35xf32>
    %361 = arith.cmpf oge, %359, %360 : vector<24x35xf32>
    %cst_150 = arith.constant 0.00999999977 : f32
    %362 = vector.broadcast %cst_150 : f32 to vector<24x35xf32>
    %363 = arith.mulf %362, %359 : vector<24x35xf32>
    %364 = arith.select %361, %359, %363 : vector<24x35xi1>, vector<24x35xf32>
    %cst_151 = arith.constant dense<0.000000e+00> : vector<24x18xf32>
    %365 = tpu.matmul %364, %13, %cst_151 {dimension_numbers = #tpu.dot_dimension_numbers<[1], [0], [0], [1], [0, 0, 1, 1], [], []>} : vector<24x35xf32>, vector<35x18xf32>, vector<24x18xf32> -> vector<24x18xf32>
    %366 = vector.extract_strided_slice %365 {offsets = [0, 0], sizes = [24, 14], strides = [1, 1]} : vector<24x18xf32> to vector<24x14xf32>
    %367 = vector.extract_strided_slice %365 {offsets = [0, 1], sizes = [24, 14], strides = [1, 1]} : vector<24x18xf32> to vector<24x14xf32>
    %368 = vector.extract_strided_slice %365 {offsets = [0, 2], sizes = [24, 14], strides = [1, 1]} : vector<24x18xf32> to vector<24x14xf32>
    %369 = vector.extract_strided_slice %365 {offsets = [0, 3], sizes = [24, 14], strides = [1, 1]} : vector<24x18xf32> to vector<24x14xf32>
    %370 = vector.extract_strided_slice %365 {offsets = [0, 4], sizes = [24, 14], strides = [1, 1]} : vector<24x18xf32> to vector<24x14xf32>
    %371 = tpu.concatenate %366, %367, %368, %369, %370 in 0 : vector<24x14xf32>, vector<24x14xf32>, vector<24x14xf32>, vector<24x14xf32>, vector<24x14xf32> -> vector<120x14xf32>
    %cst_152 = arith.constant dense<0.000000e+00> : vector<24x14xf32>
    %372 = tpu.matmul %14, %371, %cst_152 {dimension_numbers = #tpu.dot_dimension_numbers<[1], [0], [0], [1], [0, 0, 1, 1], [], []>} : vector<24x120xf32>, vector<120x14xf32>, vector<24x14xf32> -> vector<24x14xf32>
    %373 = vector.broadcast %15 : vector<24x1xf32> to vector<24x14xf32>
    %374 = arith.addf %372, %373 : vector<24x14xf32>
    %cst_153 = arith.constant 0.000000e+00 : f32
    %375 = vector.broadcast %cst_153 : f32 to vector<24x14xf32>
    %376 = arith.cmpf oge, %374, %375 : vector<24x14xf32>
    %cst_154 = arith.constant 0.00999999977 : f32
    %377 = vector.broadcast %cst_154 : f32 to vector<24x14xf32>
    %378 = arith.mulf %377, %374 : vector<24x14xf32>
    %379 = arith.select %376, %374, %378 : vector<24x14xi1>, vector<24x14xf32>
    %cst_155 = arith.constant dense<0.000000e+00> : vector<24x27xf32>
    %380 = tpu.matmul %379, %18, %cst_155 {dimension_numbers = #tpu.dot_dimension_numbers<[1], [0], [0], [1], [0, 0, 1, 1], [], []>} : vector<24x14xf32>, vector<14x27xf32>, vector<24x27xf32> -> vector<24x27xf32>
    %381 = vector.extract_strided_slice %380 {offsets = [0, 0], sizes = [24, 23], strides = [1, 1]} : vector<24x27xf32> to vector<24x23xf32>
    %382 = vector.extract_strided_slice %380 {offsets = [0, 1], sizes = [24, 23], strides = [1, 1]} : vector<24x27xf32> to vector<24x23xf32>
    %383 = vector.extract_strided_slice %380 {offsets = [0, 2], sizes = [24, 23], strides = [1, 1]} : vector<24x27xf32> to vector<24x23xf32>
    %384 = vector.extract_strided_slice %380 {offsets = [0, 3], sizes = [24, 23], strides = [1, 1]} : vector<24x27xf32> to vector<24x23xf32>
    %385 = vector.extract_strided_slice %380 {offsets = [0, 4], sizes = [24, 23], strides = [1, 1]} : vector<24x27xf32> to vector<24x23xf32>
    %386 = tpu.concatenate %381, %382, %383, %384, %385 in 0 : vector<24x23xf32>, vector<24x23xf32>, vector<24x23xf32>, vector<24x23xf32>, vector<24x23xf32> -> vector<120x23xf32>
    %cst_156 = arith.constant dense<0.000000e+00> : vector<24x23xf32>
    %387 = tpu.matmul %16, %386, %cst_156 {dimension_numbers = #tpu.dot_dimension_numbers<[1], [0], [0], [1], [0, 0, 1, 1], [], []>} : vector<24x120xf32>, vector<120x23xf32>, vector<24x23xf32> -> vector<24x23xf32>
    %388 = vector.broadcast %17 : vector<24x1xf32> to vector<24x23xf32>
    %389 = arith.addf %387, %388 : vector<24x23xf32>
    %cst_157 = arith.constant 0.000000e+00 : f32
    %390 = vector.broadcast %cst_157 : f32 to vector<24x23xf32>
    %391 = arith.cmpf oge, %389, %390 : vector<24x23xf32>
    %cst_158 = arith.constant 0.00999999977 : f32
    %392 = vector.broadcast %cst_158 : f32 to vector<24x23xf32>
    %393 = arith.mulf %392, %389 : vector<24x23xf32>
    %394 = arith.select %391, %389, %393 : vector<24x23xi1>, vector<24x23xf32>
    %395 = vector.extract_strided_slice %394 {offsets = [0, 0], sizes = [24, 19], strides = [1, 1]} : vector<24x23xf32> to vector<24x19xf32>
    %396 = vector.extract_strided_slice %394 {offsets = [0, 1], sizes = [24, 19], strides = [1, 1]} : vector<24x23xf32> to vector<24x19xf32>
    %397 = vector.extract_strided_slice %394 {offsets = [0, 2], sizes = [24, 19], strides = [1, 1]} : vector<24x23xf32> to vector<24x19xf32>
    %398 = vector.extract_strided_slice %394 {offsets = [0, 3], sizes = [24, 19], strides = [1, 1]} : vector<24x23xf32> to vector<24x19xf32>
    %399 = vector.extract_strided_slice %394 {offsets = [0, 4], sizes = [24, 19], strides = [1, 1]} : vector<24x23xf32> to vector<24x19xf32>
    %400 = tpu.concatenate %395, %396, %397, %398, %399 in 0 : vector<24x19xf32>, vector<24x19xf32>, vector<24x19xf32>, vector<24x19xf32>, vector<24x19xf32> -> vector<120x19xf32>
    %cst_159 = arith.constant dense<0.000000e+00> : vector<16x19xf32>
    %401 = tpu.matmul %19, %400, %cst_159 {dimension_numbers = #tpu.dot_dimension_numbers<[1], [0], [0], [1], [0, 0, 1, 1], [], []>} : vector<16x120xf32>, vector<120x19xf32>, vector<16x19xf32> -> vector<16x19xf32>
    %402 = vector.broadcast %20 : vector<16x1xf32> to vector<16x19xf32>
    %403 = arith.addf %401, %402 : vector<16x19xf32>
    %cst_160 = arith.constant 0.000000e+00 : f32
    %404 = vector.broadcast %cst_160 : f32 to vector<16x19xf32>
    %405 = arith.cmpf oge, %403, %404 : vector<16x19xf32>
    %cst_161 = arith.constant 0.00999999977 : f32
    %406 = vector.broadcast %cst_161 : f32 to vector<16x19xf32>
    %407 = arith.mulf %406, %403 : vector<16x19xf32>
    %408 = arith.select %405, %403, %407 : vector<16x19xi1>, vector<16x19xf32>
    %409 = vector.extract_strided_slice %336 {offsets = [0, 12], sizes = [16, 19], strides = [1, 1]} : vector<16x43xf32> to vector<16x19xf32>
    %410 = vector.extract_strided_slice %409 {offsets = [0, 0], sizes = [16, 15], strides = [1, 1]} : vector<16x19xf32> to vector<16x15xf32>
    %411 = vector.extract_strided_slice %409 {offsets = [0, 1], sizes = [16, 15], strides = [1, 1]} : vector<16x19xf32> to vector<16x15xf32>
    %412 = vector.extract_strided_slice %409 {offsets = [0, 2], sizes = [16, 15], strides = [1, 1]} : vector<16x19xf32> to vector<16x15xf32>
    %413 = vector.extract_strided_slice %409 {offsets = [0, 3], sizes = [16, 15], strides = [1, 1]} : vector<16x19xf32> to vector<16x15xf32>
    %414 = vector.extract_strided_slice %409 {offsets = [0, 4], sizes = [16, 15], strides = [1, 1]} : vector<16x19xf32> to vector<16x15xf32>
    %415 = tpu.concatenate %410, %411, %412, %413, %414 in 0 : vector<16x15xf32>, vector<16x15xf32>, vector<16x15xf32>, vector<16x15xf32>, vector<16x15xf32> -> vector<80x15xf32>
    %cst_162 = arith.constant dense<0.000000e+00> : vector<16x15xf32>
    %416 = tpu.matmul %21, %415, %cst_162 {dimension_numbers = #tpu.dot_dimension_numbers<[1], [0], [0], [1], [0, 0, 1, 1], [], []>} : vector<16x80xf32>, vector<80x15xf32>, vector<16x15xf32> -> vector<16x15xf32>
    %417 = vector.extract_strided_slice %408 {offsets = [0, 0], sizes = [16, 15], strides = [1, 1]} : vector<16x19xf32> to vector<16x15xf32>
    %418 = vector.extract_strided_slice %408 {offsets = [0, 1], sizes = [16, 15], strides = [1, 1]} : vector<16x19xf32> to vector<16x15xf32>
    %419 = vector.extract_strided_slice %408 {offsets = [0, 2], sizes = [16, 15], strides = [1, 1]} : vector<16x19xf32> to vector<16x15xf32>
    %420 = vector.extract_strided_slice %408 {offsets = [0, 3], sizes = [16, 15], strides = [1, 1]} : vector<16x19xf32> to vector<16x15xf32>
    %421 = vector.extract_strided_slice %408 {offsets = [0, 4], sizes = [16, 15], strides = [1, 1]} : vector<16x19xf32> to vector<16x15xf32>
    %422 = tpu.concatenate %417, %418, %419, %420, %421 in 0 : vector<16x15xf32>, vector<16x15xf32>, vector<16x15xf32>, vector<16x15xf32>, vector<16x15xf32> -> vector<80x15xf32>
    %cst_163 = arith.constant dense<0.000000e+00> : vector<16x15xf32>
    %423 = tpu.matmul %22, %422, %cst_163 {dimension_numbers = #tpu.dot_dimension_numbers<[1], [0], [0], [1], [0, 0, 1, 1], [], []>} : vector<16x80xf32>, vector<80x15xf32>, vector<16x15xf32> -> vector<16x15xf32>
    %424 = arith.addf %416, %423 : vector<16x15xf32>
    %425 = vector.broadcast %23 : vector<16x1xf32> to vector<16x15xf32>
    %426 = arith.addf %424, %425 : vector<16x15xf32>
    %cst_164 = arith.constant 0.000000e+00 : f32
    %427 = vector.broadcast %cst_164 : f32 to vector<16x15xf32>
    %428 = arith.cmpf oge, %426, %427 : vector<16x15xf32>
    %cst_165 = arith.constant 0.00999999977 : f32
    %429 = vector.broadcast %cst_165 : f32 to vector<16x15xf32>
    %430 = arith.mulf %429, %426 : vector<16x15xf32>
    %431 = arith.select %428, %426, %430 : vector<16x15xi1>, vector<16x15xf32>
    %cst_166 = arith.constant dense<0.000000e+00> : vector<16x29xf32>
    %432 = tpu.matmul %431, %26, %cst_166 {dimension_numbers = #tpu.dot_dimension_numbers<[1], [0], [0], [1], [0, 0, 1, 1], [], []>} : vector<16x15xf32>, vector<15x29xf32>, vector<16x29xf32> -> vector<16x29xf32>
    %433 = vector.extract_strided_slice %432 {offsets = [0, 0], sizes = [16, 25], strides = [1, 1]} : vector<16x29xf32> to vector<16x25xf32>
    %434 = vector.extract_strided_slice %432 {offsets = [0, 1], sizes = [16, 25], strides = [1, 1]} : vector<16x29xf32> to vector<16x25xf32>
    %435 = vector.extract_strided_slice %432 {offsets = [0, 2], sizes = [16, 25], strides = [1, 1]} : vector<16x29xf32> to vector<16x25xf32>
    %436 = vector.extract_strided_slice %432 {offsets = [0, 3], sizes = [16, 25], strides = [1, 1]} : vector<16x29xf32> to vector<16x25xf32>
    %437 = vector.extract_strided_slice %432 {offsets = [0, 4], sizes = [16, 25], strides = [1, 1]} : vector<16x29xf32> to vector<16x25xf32>
    %438 = tpu.concatenate %433, %434, %435, %436, %437 in 0 : vector<16x25xf32>, vector<16x25xf32>, vector<16x25xf32>, vector<16x25xf32>, vector<16x25xf32> -> vector<80x25xf32>
    %cst_167 = arith.constant dense<0.000000e+00> : vector<16x25xf32>
    %439 = tpu.matmul %24, %438, %cst_167 {dimension_numbers = #tpu.dot_dimension_numbers<[1], [0], [0], [1], [0, 0, 1, 1], [], []>} : vector<16x80xf32>, vector<80x25xf32>, vector<16x25xf32> -> vector<16x25xf32>
    %440 = vector.broadcast %25 : vector<16x1xf32> to vector<16x25xf32>
    %441 = arith.addf %439, %440 : vector<16x25xf32>
    %cst_168 = arith.constant 0.000000e+00 : f32
    %442 = vector.broadcast %cst_168 : f32 to vector<16x25xf32>
    %443 = arith.cmpf oge, %441, %442 : vector<16x25xf32>
    %cst_169 = arith.constant 0.00999999977 : f32
    %444 = vector.broadcast %cst_169 : f32 to vector<16x25xf32>
    %445 = arith.mulf %444, %441 : vector<16x25xf32>
    %446 = arith.select %443, %441, %445 : vector<16x25xi1>, vector<16x25xf32>
    %447 = vector.extract_strided_slice %446 {offsets = [0, 0], sizes = [16, 21], strides = [1, 1]} : vector<16x25xf32> to vector<16x21xf32>
    %448 = vector.extract_strided_slice %446 {offsets = [0, 1], sizes = [16, 21], strides = [1, 1]} : vector<16x25xf32> to vector<16x21xf32>
    %449 = vector.extract_strided_slice %446 {offsets = [0, 2], sizes = [16, 21], strides = [1, 1]} : vector<16x25xf32> to vector<16x21xf32>
    %450 = vector.extract_strided_slice %446 {offsets = [0, 3], sizes = [16, 21], strides = [1, 1]} : vector<16x25xf32> to vector<16x21xf32>
    %451 = vector.extract_strided_slice %446 {offsets = [0, 4], sizes = [16, 21], strides = [1, 1]} : vector<16x25xf32> to vector<16x21xf32>
    %452 = tpu.concatenate %447, %448, %449, %450, %451 in 0 : vector<16x21xf32>, vector<16x21xf32>, vector<16x21xf32>, vector<16x21xf32>, vector<16x21xf32> -> vector<80x21xf32>
    %cst_170 = arith.constant dense<0.000000e+00> : vector<8x21xf32>
    %453 = tpu.matmul %27, %452, %cst_170 {dimension_numbers = #tpu.dot_dimension_numbers<[1], [0], [0], [1], [0, 0, 1, 1], [], []>} : vector<8x80xf32>, vector<80x21xf32>, vector<8x21xf32> -> vector<8x21xf32>
    %454 = vector.broadcast %28 : vector<8x1xf32> to vector<8x21xf32>
    %455 = arith.addf %453, %454 : vector<8x21xf32>
    %cst_171 = arith.constant 0.000000e+00 : f32
    %456 = vector.broadcast %cst_171 : f32 to vector<8x21xf32>
    %457 = arith.cmpf oge, %455, %456 : vector<8x21xf32>
    %cst_172 = arith.constant 0.00999999977 : f32
    %458 = vector.broadcast %cst_172 : f32 to vector<8x21xf32>
    %459 = arith.mulf %458, %455 : vector<8x21xf32>
    %460 = arith.select %457, %455, %459 : vector<8x21xi1>, vector<8x21xf32>
    %461 = vector.extract_strided_slice %293 {offsets = [0, 40], sizes = [8, 21], strides = [1, 1]} : vector<8x101xf32> to vector<8x21xf32>
    %462 = vector.extract_strided_slice %461 {offsets = [0, 0], sizes = [8, 17], strides = [1, 1]} : vector<8x21xf32> to vector<8x17xf32>
    %463 = vector.extract_strided_slice %461 {offsets = [0, 1], sizes = [8, 17], strides = [1, 1]} : vector<8x21xf32> to vector<8x17xf32>
    %464 = vector.extract_strided_slice %461 {offsets = [0, 2], sizes = [8, 17], strides = [1, 1]} : vector<8x21xf32> to vector<8x17xf32>
    %465 = vector.extract_strided_slice %461 {offsets = [0, 3], sizes = [8, 17], strides = [1, 1]} : vector<8x21xf32> to vector<8x17xf32>
    %466 = vector.extract_strided_slice %461 {offsets = [0, 4], sizes = [8, 17], strides = [1, 1]} : vector<8x21xf32> to vector<8x17xf32>
    %467 = tpu.concatenate %462, %463, %464, %465, %466 in 0 : vector<8x17xf32>, vector<8x17xf32>, vector<8x17xf32>, vector<8x17xf32>, vector<8x17xf32> -> vector<40x17xf32>
    %cst_173 = arith.constant dense<0.000000e+00> : vector<8x17xf32>
    %468 = tpu.matmul %29, %467, %cst_173 {dimension_numbers = #tpu.dot_dimension_numbers<[1], [0], [0], [1], [0, 0, 1, 1], [], []>} : vector<8x40xf32>, vector<40x17xf32>, vector<8x17xf32> -> vector<8x17xf32>
    %469 = vector.extract_strided_slice %460 {offsets = [0, 0], sizes = [8, 17], strides = [1, 1]} : vector<8x21xf32> to vector<8x17xf32>
    %470 = vector.extract_strided_slice %460 {offsets = [0, 1], sizes = [8, 17], strides = [1, 1]} : vector<8x21xf32> to vector<8x17xf32>
    %471 = vector.extract_strided_slice %460 {offsets = [0, 2], sizes = [8, 17], strides = [1, 1]} : vector<8x21xf32> to vector<8x17xf32>
    %472 = vector.extract_strided_slice %460 {offsets = [0, 3], sizes = [8, 17], strides = [1, 1]} : vector<8x21xf32> to vector<8x17xf32>
    %473 = vector.extract_strided_slice %460 {offsets = [0, 4], sizes = [8, 17], strides = [1, 1]} : vector<8x21xf32> to vector<8x17xf32>
    %474 = tpu.concatenate %469, %470, %471, %472, %473 in 0 : vector<8x17xf32>, vector<8x17xf32>, vector<8x17xf32>, vector<8x17xf32>, vector<8x17xf32> -> vector<40x17xf32>
    %cst_174 = arith.constant dense<0.000000e+00> : vector<8x17xf32>
    %475 = tpu.matmul %30, %474, %cst_174 {dimension_numbers = #tpu.dot_dimension_numbers<[1], [0], [0], [1], [0, 0, 1, 1], [], []>} : vector<8x40xf32>, vector<40x17xf32>, vector<8x17xf32> -> vector<8x17xf32>
    %476 = arith.addf %468, %475 : vector<8x17xf32>
    %477 = vector.broadcast %31 : vector<8x1xf32> to vector<8x17xf32>
    %478 = arith.addf %476, %477 : vector<8x17xf32>
    %cst_175 = arith.constant 0.000000e+00 : f32
    %479 = vector.broadcast %cst_175 : f32 to vector<8x17xf32>
    %480 = arith.cmpf oge, %478, %479 : vector<8x17xf32>
    %cst_176 = arith.constant 0.00999999977 : f32
    %481 = vector.broadcast %cst_176 : f32 to vector<8x17xf32>
    %482 = arith.mulf %481, %478 : vector<8x17xf32>
    %483 = arith.select %480, %478, %482 : vector<8x17xi1>, vector<8x17xf32>
    %cst_177 = arith.constant dense<0.000000e+00> : vector<4x17xf32>
    %484 = tpu.matmul %32, %483, %cst_177 {dimension_numbers = #tpu.dot_dimension_numbers<[1], [0], [0], [1], [0, 0, 1, 1], [], []>} : vector<4x8xf32>, vector<8x17xf32>, vector<4x17xf32> -> vector<4x17xf32>
    %485 = vector.broadcast %33 : vector<4x1xf32> to vector<4x17xf32>
    %486 = arith.addf %484, %485 : vector<4x17xf32>
    %cst_178 = arith.constant -1.000000e+00 : f32
    %cst_179 = arith.constant 1.000000e+00 : f32
    %487 = vector.broadcast %cst_178 : f32 to vector<4x17xf32>
    %488 = arith.maximumf %487, %486 : vector<4x17xf32>
    %489 = vector.broadcast %cst_179 : f32 to vector<4x17xf32>
    %490 = arith.minimumf %489, %488 : vector<4x17xf32>
    %c1_180 = arith.constant 1 : index
    %c0_181 = arith.constant 0 : index
    %c0_182 = arith.constant 0 : index
    %491 = vector.load %arg35[%c1_180, %c0_181, %c0_182] : memref<2x4x17xf32, #tpu.memory_space<vmem>>, vector<1x4x17xf32>
    %492 = vector.shape_cast %491 : vector<1x4x17xf32> to vector<4x17xf32>
    %493 = vector.shape_cast %490 : vector<4x17xf32> to vector<1x4x17xf32>
    tpu.vector_store %arg35[%c1_180, %c0_181, %c0_182], %493 {strides = array<i32>} : memref<2x4x17xf32, #tpu.memory_space<vmem>>, vector<1x4x17xf32>,
    return
  }
}

</mosaic_0001>

<llo_original>
// kernel: waveunet_forward.1
$region0: #{waveunet_forward.1}
  #allocation0 [shape = 'u32[]', space=smem, size = 0x4, offset = 0x4, fixed_abs, tag = 'smem constant byte address 0x4 - core index']
  #allocation1 [shape = 'u32[72,128]{1,0:T(1,128)}', space=vmem, size = 0x9000, scoped, tag = 'internal scratch']
  %s0 = inlined_call_operand.smem [shape: u32[36], index: -1, kind: input, shape index: {}]
  %s1 = sld [smem:[%s0]]
  %s2 = scalar_lea.smem %s0, 1
  %s3 = sld [smem:[%s2]]
  %s4 = scalar_lea.smem %s0, 2
  %s5 = sld [smem:[%s4]]
  %s6 = scalar_lea.smem %s0, 3
  %s7 = sld [smem:[%s6]]
  %s8 = scalar_lea.smem %s0, 4
  %s9 = sld [smem:[%s8]]
  %s10 = scalar_lea.smem %s0, 5
  %s11 = sld [smem:[%s10]]
  %s12 = scalar_lea.smem %s0, 6
  %s13 = sld [smem:[%s12]]
  %s14 = scalar_lea.smem %s0, 7
  %s15 = sld [smem:[%s14]]
  %s16 = scalar_lea.smem %s0, 8
  %s17 = sld [smem:[%s16]]
  %s18 = scalar_lea.smem %s0, 9
  %s19 = sld [smem:[%s18]]
  %s20 = scalar_lea.smem %s0, 10
  %s21 = sld [smem:[%s20]]
  %s22 = scalar_lea.smem %s0, 11
  %s23 = sld [smem:[%s22]]
  %s24 = scalar_lea.smem %s0, 12
  %s25 = sld [smem:[%s24]]
  %s26 = scalar_lea.smem %s0, 13
  %s27 = sld [smem:[%s26]]
  %s28 = scalar_lea.smem %s0, 14
  %s29 = sld [smem:[%s28]]
  %s30 = scalar_lea.smem %s0, 15
  %s31 = sld [smem:[%s30]]
  %s32 = scalar_lea.smem %s0, 16
  %s33 = sld [smem:[%s32]]
  %s34 = scalar_lea.smem %s0, 17
  %s35 = sld [smem:[%s34]]
  %s36 = scalar_lea.smem %s0, 18
  %s37 = sld [smem:[%s36]]
  %s38 = scalar_lea.smem %s0, 19
  %s39 = sld [smem:[%s38]]
  %s40 = scalar_lea.smem %s0, 20
  %s41 = sld [smem:[%s40]]
  %s42 = scalar_lea.smem %s0, 21
  %s43 = sld [smem:[%s42]]
  %s44 = scalar_lea.smem %s0, 22
  %s45 = sld [smem:[%s44]]
  %s46 = scalar_lea.smem %s0, 23
  %s47 = sld [smem:[%s46]]
  %s48 = scalar_lea.smem %s0, 24
  %s49 = sld [smem:[%s48]]
  %s50 = scalar_lea.smem %s0, 25
  %s51 = sld [smem:[%s50]]
  %s52 = scalar_lea.smem %s0, 26
  %s53 = sld [smem:[%s52]]
  %s54 = scalar_lea.smem %s0, 27
  %s55 = sld [smem:[%s54]]
  %s56 = scalar_lea.smem %s0, 28
  %s57 = sld [smem:[%s56]]
  %s58 = scalar_lea.smem %s0, 29
  %s59 = sld [smem:[%s58]]
  %s60 = scalar_lea.smem %s0, 30
  %s61 = sld [smem:[%s60]]
  %s62 = scalar_lea.smem %s0, 31
  %s63 = sld [smem:[%s62]]
  %s64 = scalar_lea.smem %s0, 32
  %s65 = sld [smem:[%s64]]
  %s66 = scalar_lea.smem %s0, 33
  %s67 = sld [smem:[%s66]]
  %s68 = scalar_lea.smem %s0, 34
  %s69 = sld [smem:[%s68]]
  %s70 = scalar_lea.smem %s0, 35
  %s71 = sld [smem:[%s70]]
  %s72 = sld [smem:[#allocation0]]
  $region150: #{waveunet_forward.1} parent=0
    _
  %s74 = ssub.s32 1, %s72
  %s75 = scalar_select 0, %s74, %s72
  // Predicated region
  $region2: #{waveunet_forward.1} parent=0 // pred_check
    _
  $region3: #{waveunet_forward.1} parent=0 // pred_check_branch
    %77 = sbr.rel (0) target = $region5
  $region4: #{waveunet_forward.1} parent=0 // pred_region
    _
  $region5: #{waveunet_forward.1} parent=0 // pred_fallthru
    _
  // Predicated region
  $region6: #{waveunet_forward.1} parent=0 // pred_check
    _
  $region7: #{waveunet_forward.1} parent=0 // pred_check_branch
    %79 = sbr.rel (0) target = $region9
  $region8: #{waveunet_forward.1} parent=0 // pred_region
    _
  $region9: #{waveunet_forward.1} parent=0 // pred_fallthru
    _
  // Predicated region
  $region10: #{waveunet_forward.1} parent=0 // pred_check
    _
  $region11: #{waveunet_forward.1} parent=0 // pred_check_branch
    %81 = sbr.rel (0) target = $region13
  $region12: #{waveunet_forward.1} parent=0 // pred_region
    _
  $region13: #{waveunet_forward.1} parent=0 // pred_fallthru
    _
  // Predicated region
  $region14: #{waveunet_forward.1} parent=0 // pred_check
    _
  $region15: #{waveunet_forward.1} parent=0 // pred_check_branch
    %83 = sbr.rel (0) target = $region17
  $region16: #{waveunet_forward.1} parent=0 // pred_region
    _
  $region17: #{waveunet_forward.1} parent=0 // pred_fallthru
    _
  // Predicated region
  $region18: #{waveunet_forward.1} parent=0 // pred_check
    _
  $region19: #{waveunet_forward.1} parent=0 // pred_check_branch
    %85 = sbr.rel (0) target = $region21
  $region20: #{waveunet_forward.1} parent=0 // pred_region
    _
  $region21: #{waveunet_forward.1} parent=0 // pred_fallthru
    _
  // Predicated region
  $region22: #{waveunet_forward.1} parent=0 // pred_check
    _
  $region23: #{waveunet_forward.1} parent=0 // pred_check_branch
    %87 = sbr.rel (0) target = $region25
  $region24: #{waveunet_forward.1} parent=0 // pred_region
    _
  $region25: #{waveunet_forward.1} parent=0 // pred_fallthru
    _
  // Predicated region
  $region26: #{waveunet_forward.1} parent=0 // pred_check
    _
  $region27: #{waveunet_forward.1} parent=0 // pred_check_branch
    %89 = sbr.rel (0) target = $region29
  $region28: #{waveunet_forward.1} parent=0 // pred_region
    _
  $region29: #{waveunet_forward.1} parent=0 // pred_fallthru
    _
  // Predicated region
  $region30: #{waveunet_forward.1} parent=0 // pred_check
    _
  $region31: #{waveunet_forward.1} parent=0 // pred_check_branch
    %91 = sbr.rel (0) target = $region33
  $region32: #{waveunet_forward.1} parent=0 // pred_region
    _
  $region33: #{waveunet_forward.1} parent=0 // pred_fallthru
    _
  // Predicated region
  $region34: #{waveunet_forward.1} parent=0 // pred_check
    _
  $region35: #{waveunet_forward.1} parent=0 // pred_check_branch
    %93 = sbr.rel (0) target = $region37
  $region36: #{waveunet_forward.1} parent=0 // pred_region
    _
  $region37: #{waveunet_forward.1} parent=0 // pred_fallthru
    _
  // Predicated region
  $region38: #{waveunet_forward.1} parent=0 // pred_check
    _
  $region39: #{waveunet_forward.1} parent=0 // pred_check_branch
    %95 = sbr.rel (0) target = $region41
  $region40: #{waveunet_forward.1} parent=0 // pred_region
    _
  $region41: #{waveunet_forward.1} parent=0 // pred_fallthru
    _
  // Predicated region
  $region42: #{waveunet_forward.1} parent=0 // pred_check
    _
  $region43: #{waveunet_forward.1} parent=0 // pred_check_branch
    %97 = sbr.rel (0) target = $region45
  $region44: #{waveunet_forward.1} parent=0 // pred_region
    _
  $region45: #{waveunet_forward.1} parent=0 // pred_fallthru
    _
  // Predicated region
  $region46: #{waveunet_forward.1} parent=0 // pred_check
    _
  $region47: #{waveunet_forward.1} parent=0 // pred_check_branch
    %99 = sbr.rel (0) target = $region49
  $region48: #{waveunet_forward.1} parent=0 // pred_region
    _
  $region49: #{waveunet_forward.1} parent=0 // pred_fallthru
    _
  // Predicated region
  $region50: #{waveunet_forward.1} parent=0 // pred_check
    _
  $region51: #{waveunet_forward.1} parent=0 // pred_check_branch
    %101 = sbr.rel (0) target = $region53
  $region52: #{waveunet_forward.1} parent=0 // pred_region
    _
  $region53: #{waveunet_forward.1} parent=0 // pred_fallthru
    _
  // Predicated region
  $region54: #{waveunet_forward.1} parent=0 // pred_check
    _
  $region55: #{waveunet_forward.1} parent=0 // pred_check_branch
    %103 = sbr.rel (0) target = $region57
  $region56: #{waveunet_forward.1} parent=0 // pred_region
    _
  $region57: #{waveunet_forward.1} parent=0 // pred_fallthru
    _
  // Predicated region
  $region58: #{waveunet_forward.1} parent=0 // pred_check
    _
  $region59: #{waveunet_forward.1} parent=0 // pred_check_branch
    %105 = sbr.rel (0) target = $region61
  $region60: #{waveunet_forward.1} parent=0 // pred_region
    _
  $region61: #{waveunet_forward.1} parent=0 // pred_fallthru
    _
  // Predicated region
  $region62: #{waveunet_forward.1} parent=0 // pred_check
    _
  $region63: #{waveunet_forward.1} parent=0 // pred_check_branch
    %107 = sbr.rel (0) target = $region65
  $region64: #{waveunet_forward.1} parent=0 // pred_region
    _
  $region65: #{waveunet_forward.1} parent=0 // pred_fallthru
    _
  // Predicated region
  $region66: #{waveunet_forward.1} parent=0 // pred_check
    _
  $region67: #{waveunet_forward.1} parent=0 // pred_check_branch
    %109 = sbr.rel (0) target = $region69
  $region68: #{waveunet_forward.1} parent=0 // pred_region
    _
  $region69: #{waveunet_forward.1} parent=0 // pred_fallthru
    _
  // Predicated region
  $region70: #{waveunet_forward.1} parent=0 // pred_check
    _
  $region71: #{waveunet_forward.1} parent=0 // pred_check_branch
    %111 = sbr.rel (0) target = $region73
  $region72: #{waveunet_forward.1} parent=0 // pred_region
    _
  $region73: #{waveunet_forward.1} parent=0 // pred_fallthru
    _
  // Predicated region
  $region74: #{waveunet_forward.1} parent=0 // pred_check
    _
  $region75: #{waveunet_forward.1} parent=0 // pred_check_branch
    %113 = sbr.rel (0) target = $region77
  $region76: #{waveunet_forward.1} parent=0 // pred_region
    _
  $region77: #{waveunet_forward.1} parent=0 // pred_fallthru
    _
  // Predicated region
  $region78: #{waveunet_forward.1} parent=0 // pred_check
    _
  $region79: #{waveunet_forward.1} parent=0 // pred_check_branch
    %115 = sbr.rel (0) target = $region81
  $region80: #{waveunet_forward.1} parent=0 // pred_region
    _
  $region81: #{waveunet_forward.1} parent=0 // pred_fallthru
    _
  // Predicated region
  $region82: #{waveunet_forward.1} parent=0 // pred_check
    _
  $region83: #{waveunet_forward.1} parent=0 // pred_check_branch
    %117 = sbr.rel (0) target = $region85
  $region84: #{waveunet_forward.1} parent=0 // pred_region
    _
  $region85: #{waveunet_forward.1} parent=0 // pred_fallthru
    _
  // Predicated region
  $region86: #{waveunet_forward.1} parent=0 // pred_check
    _
  $region87: #{waveunet_forward.1} parent=0 // pred_check_branch
    %119 = sbr.rel (0) target = $region89
  $region88: #{waveunet_forward.1} parent=0 // pred_region
    _
  $region89: #{waveunet_forward.1} parent=0 // pred_fallthru
    _
  // Predicated region
  $region90: #{waveunet_forward.1} parent=0 // pred_check
    _
  $region91: #{waveunet_forward.1} parent=0 // pred_check_branch
    %121 = sbr.rel (0) target = $region93
  $region92: #{waveunet_forward.1} parent=0 // pred_region
    _
  $region93: #{waveunet_forward.1} parent=0 // pred_fallthru
    _
  // Predicated region
  $region94: #{waveunet_forward.1} parent=0 // pred_check
    _
  $region95: #{waveunet_forward.1} parent=0 // pred_check_branch
    %123 = sbr.rel (0) target = $region97
  $region96: #{waveunet_forward.1} parent=0 // pred_region
    _
  $region97: #{waveunet_forward.1} parent=0 // pred_fallthru
    _
  // Predicated region
  $region98: #{waveunet_forward.1} parent=0 // pred_check
    _
  $region99: #{waveunet_forward.1} parent=0 // pred_check_branch
    %125 = sbr.rel (0) target = $region101
  $region100: #{waveunet_forward.1} parent=0 // pred_region
    _
  $region101: #{waveunet_forward.1} parent=0 // pred_fallthru
    _
  // Predicated region
  $region102: #{waveunet_forward.1} parent=0 // pred_check
    _
  $region103: #{waveunet_forward.1} parent=0 // pred_check_branch
    %127 = sbr.rel (0) target = $region105
  $region104: #{waveunet_forward.1} parent=0 // pred_region
    _
  $region105: #{waveunet_forward.1} parent=0 // pred_fallthru
    _
  // Predicated region
  $region106: #{waveunet_forward.1} parent=0 // pred_check
    _
  $region107: #{waveunet_forward.1} parent=0 // pred_check_branch
    %129 = sbr.rel (0) target = $region109
  $region108: #{waveunet_forward.1} parent=0 // pred_region
    _
  $region109: #{waveunet_forward.1} parent=0 // pred_fallthru
    _
  // Predicated region
  $region110: #{waveunet_forward.1} parent=0 // pred_check
    _
  $region111: #{waveunet_forward.1} parent=0 // pred_check_branch
    %131 = sbr.rel (0) target = $region113
  $region112: #{waveunet_forward.1} parent=0 // pred_region
    _
  $region113: #{waveunet_forward.1} parent=0 // pred_fallthru
    _
  // Predicated region
  $region114: #{waveunet_forward.1} parent=0 // pred_check
    _
  $region115: #{waveunet_forward.1} parent=0 // pred_check_branch
    %133 = sbr.rel (0) target = $region117
  $region116: #{waveunet_forward.1} parent=0 // pred_region
    _
  $region117: #{waveunet_forward.1} parent=0 // pred_fallthru
    _
  // Predicated region
  $region118: #{waveunet_forward.1} parent=0 // pred_check
    _
  $region119: #{waveunet_forward.1} parent=0 // pred_check_branch
    %135 = sbr.rel (0) target = $region121
  $region120: #{waveunet_forward.1} parent=0 // pred_region
    _
  $region121: #{waveunet_forward.1} parent=0 // pred_fallthru
    _
  // Predicated region
  $region122: #{waveunet_forward.1} parent=0 // pred_check
    _
  $region123: #{waveunet_forward.1} parent=0 // pred_check_branch
    %137 = sbr.rel (0) target = $region125
  $region124: #{waveunet_forward.1} parent=0 // pred_region
    _
  $region125: #{waveunet_forward.1} parent=0 // pred_fallthru
    _
  // Predicated region
  $region126: #{waveunet_forward.1} parent=0 // pred_check
    _
  $region127: #{waveunet_forward.1} parent=0 // pred_check_branch
    %139 = sbr.rel (0) target = $region129
  $region128: #{waveunet_forward.1} parent=0 // pred_region
    _
  $region129: #{waveunet_forward.1} parent=0 // pred_fallthru
    _
  // Predicated region
  $region130: #{waveunet_forward.1} parent=0 // pred_check
    _
  $region131: #{waveunet_forward.1} parent=0 // pred_check_branch
    %141 = sbr.rel (0) target = $region133
  $region132: #{waveunet_forward.1} parent=0 // pred_region
    _
  $region133: #{waveunet_forward.1} parent=0 // pred_fallthru
    _
  // Predicated region
  $region134: #{waveunet_forward.1} parent=0 // pred_check
    _
  $region135: #{waveunet_forward.1} parent=0 // pred_check_branch
    %143 = sbr.rel (0) target = $region137
  $region136: #{waveunet_forward.1} parent=0 // pred_region
    _
  $region137: #{waveunet_forward.1} parent=0 // pred_fallthru
    _
  // Predicated region
  $region138: #{waveunet_forward.1} parent=0 // pred_check
    _
  $region139: #{waveunet_forward.1} parent=0 // pred_check_branch
    %145 = sbr.rel (0) target = $region141
  $region140: #{waveunet_forward.1} parent=0 // pred_region
    _
  $region141: #{waveunet_forward.1} parent=0 // pred_fallthru
    _
  %v146 = vld [vmem:[%s3] sm:$0xff]
  %v147 = vld [vmem:[%s5] sm:$0xff]
  %v148 = vld [vmem:[%s7] sm:$0xff]
  %v149 = vld [vmem:[%s7 + $0x8] sm:$0xff]
  %v150 = vld [vmem:[%s9] sm:$0xff]
  %v151 = vld [vmem:[%s9 + $0x8] sm:$0xff]
  %v152 = vld [vmem:[%s11] sm:$0xff]
  %v153 = vld [vmem:[%s11 + $0x8] sm:$0xff]
  %v154 = vld [vmem:[%s13] sm:$0xff]
  %v155 = vld [vmem:[%s13 + $0x8] sm:$0xff]
  %v156 = vld [vmem:[%s15] sm:$0xff]
  %v157 = vld [vmem:[%s15 + $0x8] sm:$0xff]
  %v158 = vld [vmem:[%s15 + $0x10] sm:$0xff]
  %v159 = vld [vmem:[%s15 + $0x18] sm:$0xff]
  %v160 = vld [vmem:[%s15 + $0x20] sm:$0xff]
  %v161 = vld [vmem:[%s15 + $0x28] sm:$0xff]
  %v162 = vld [vmem:[%s15 + $0x30] sm:$0xff]
  %v163 = vld [vmem:[%s15 + $0x38] sm:$0xff]
  %v164 = vld [vmem:[%s15 + $0x40] sm:$0xff]
  %v165 = vld [vmem:[%s15 + $0x48] sm:$0xff]
  %v166 = vld [vmem:[%s15 + $0x50] sm:$0xff]
  %v167 = vld [vmem:[%s15 + $0x58] sm:$0x1f]
  %v168 = vld [vmem:[%s17] sm:$0xff]
  %v169 = vld [vmem:[%s17 + $0x8] sm:$0xff]
  %v170 = vld [vmem:[%s19] sm:$0xff]
  %v171 = vld [vmem:[%s19 + $0x8] sm:$0xff]
  %v172 = vld [vmem:[%s21] sm:$0xff]
  %v173 = vld [vmem:[%s21 + $0x8] sm:$0xff]
  %v174 = vld [vmem:[%s21 + $0x10] sm:$0xff]
  %v175 = vld [vmem:[%s23] sm:$0xff]
  %v176 = vld [vmem:[%s23 + $0x8] sm:$0xff]
  %v177 = vld [vmem:[%s23 + $0x10] sm:$0xff]
  %v178 = vld [vmem:[%s25] sm:$0xff]
  %v179 = vld [vmem:[%s25 + $0x8] sm:$0xff]
  %v180 = vld [vmem:[%s25 + $0x10] sm:$0xff]
  %v181 = vld [vmem:[%s27] sm:$0xff]
  %v182 = vld [vmem:[%s27 + $0x8] sm:$0xff]
  %v183 = vld [vmem:[%s27 + $0x10] sm:$0xff]
  %v184 = vld [vmem:[%s29] sm:$0xff]
  %v185 = vld [vmem:[%s29 + $0x8] sm:$0xff]
  %v186 = vld [vmem:[%s29 + $0x10] sm:$0xff]
  %v187 = vld [vmem:[%s29 + $0x18] sm:$0xff]
  %v188 = vld [vmem:[%s29 + $0x20] sm:$0x7]
  %v189 = vld [vmem:[%s31] sm:$0xff]
  %v190 = vld [vmem:[%s31 + $0x8] sm:$0xff]
  %v191 = vld [vmem:[%s31 + $0x10] sm:$0xff]
  %v192 = vld [vmem:[%s33] sm:$0xff]
  %v193 = vld [vmem:[%s33 + $0x8] sm:$0xff]
  %v194 = vld [vmem:[%s33 + $0x10] sm:$0xff]
  %v195 = vld [vmem:[%s35] sm:$0xff]
  %v196 = vld [vmem:[%s35 + $0x8] sm:$0xff]
  %v197 = vld [vmem:[%s35 + $0x10] sm:$0xff]
  %v198 = vld [vmem:[%s37] sm:$0xff]
  %v199 = vld [vmem:[%s37 + $0x8] sm:$0xff]
  %v200 = vld [vmem:[%s37 + $0x10] sm:$0xff]
  %v201 = vld [vmem:[%s39] sm:$0xff]
  %v202 = vld [vmem:[%s39 + $0x8] sm:$0x3f]
  %v203 = vld [vmem:[%s41] sm:$0xff]
  %v204 = vld [vmem:[%s41 + $0x8] sm:$0xff]
  %v205 = vld [vmem:[%s43] sm:$0xff]
  %v206 = vld [vmem:[%s43 + $0x8] sm:$0xff]
  %v207 = vld [vmem:[%s45] sm:$0xff]
  %v208 = vld [vmem:[%s45 + $0x8] sm:$0xff]
  %v209 = vld [vmem:[%s47] sm:$0xff]
  %v210 = vld [vmem:[%s47 + $0x8] sm:$0xff]
  %v211 = vld [vmem:[%s49] sm:$0xff]
  %v212 = vld [vmem:[%s49 + $0x8] sm:$0xff]
  %v213 = vld [vmem:[%s51] sm:$0xff]
  %v214 = vld [vmem:[%s51 + $0x8] sm:$0xff]
  %v215 = vld [vmem:[%s53] sm:$0xff]
  %v216 = vld [vmem:[%s53 + $0x8] sm:$0xff]
  %v217 = vld [vmem:[%s55] sm:$0xff]
  %v218 = vld [vmem:[%s55 + $0x8] sm:$0x7f]
  %v219 = vld [vmem:[%s57] sm:$0xff]
  %v220 = vld [vmem:[%s59] sm:$0xff]
  %v221 = vld [vmem:[%s61] sm:$0xff]
  %v222 = vld [vmem:[%s63] sm:$0xff]
  %v223 = vld [vmem:[%s65] sm:$0xff]
  %v224 = vld [vmem:[%s67] sm:$0xf]
  %v225 = vld [vmem:[%s69] sm:$0xf]
  %v226 = vld [vmem:[%s1] sm:$0x3]
  %228 = vrot.lane.b32.xlu0 %v146, 126
  %v229 = vpop.permute.xlu0 %228
  %231 = vrot.lane.b32.xlu0 %v226, 127
  %v232 = vpop.permute.xlu0 %231
  %vm233 = vcmask 15360
  %v234 = vsel %vm233, %v229, 0
  %vm236 = vcmask 1041408
  %v237 = vsel %vm236, %v232, 0
  %239 = vmatpush.msra.mxu0 0.0
  %240 = vmatpush.msra.mxu0 0.0
  %241 = vmatpush.msra.mxu0 0.0
  %242 = vmatpush.msra.mxu0 0.0
  %243 = vmatpush.msra.mxu0 0.0
  %244 = vmatpush.msra.mxu0 0.0
  %245 = vmatpush.msra.mxu0 0.0
  %246 = vmatpush.msra.mxu0 0.0
  %247 = vmatpush.msra.mxu0 0.0
  %248 = vmatpush.msra.mxu0 0.0
  %249 = vmatpush.msra.mxu0 0.0
  %250 = vmatpush.msra.mxu0 0.0
  %251 = vmatpush.msra.mxu0 0.0
  %252 = vmatpush.msra.mxu0 0.0
  %253 = vmatpush.msra.mxu0 0.0
  %254 = vmatpush.msra.mxu0 %v237
  %255 = vmatmul.f32.gmra.mxu0 %v234
  %v256 = vpop.f32.mrf.mxu0
  %v257 = vadd.f32 0.0, %v256
  %258 = vdwg.mxu0
  %v259 = vsel %vm233, %v146, 0
  %v261 = vsel %vm236, %v226, 0
  %263 = vmatpush.msra.mxu0 0.0
  %264 = vmatpush.msra.mxu0 0.0
  %265 = vmatpush.msra.mxu0 0.0
  %266 = vmatpush.msra.mxu0 0.0
  %267 = vmatpush.msra.mxu0 0.0
  %268 = vmatpush.msra.mxu0 0.0
  %269 = vmatpush.msra.mxu0 0.0
  %270 = vmatpush.msra.mxu0 0.0
  %271 = vmatpush.msra.mxu0 0.0
  %272 = vmatpush.msra.mxu0 0.0
  %273 = vmatpush.msra.mxu0 0.0
  %274 = vmatpush.msra.mxu0 0.0
  %275 = vmatpush.msra.mxu0 0.0
  %276 = vmatpush.msra.mxu0 0.0
  %277 = vmatpush.msra.mxu0 0.0
  %278 = vmatpush.msra.mxu0 %v261
  %279 = vmatmul.f32.gmra.mxu0 %v259
  %v280 = vpop.f32.mrf.mxu0
  %v281 = vadd.f32 %v257, %v280
  %282 = vdwg.mxu0
  %283 = vrot.lane.b32.xlu0 %v146, 124
  %v284 = vpop.permute.xlu0 %283
  %285 = vrot.lane.b32.xlu0 %v226, 126
  %v286 = vpop.permute.xlu0 %285
  %v287 = vsel %vm233, %v284, 0
  %v289 = vsel %vm236, %v286, 0
  %291 = vmatpush.msra.mxu0 0.0
  %292 = vmatpush.msra.mxu0 0.0
  %293 = vmatpush.msra.mxu0 0.0
  %294 = vmatpush.msra.mxu0 0.0
  %295 = vmatpush.msra.mxu0 0.0
  %296 = vmatpush.msra.mxu0 0.0
  %297 = vmatpush.msra.mxu0 0.0
  %298 = vmatpush.msra.mxu0 0.0
  %299 = vmatpush.msra.mxu0 0.0
  %300 = vmatpush.msra.mxu0 0.0
  %301 = vmatpush.msra.mxu0 0.0
  %302 = vmatpush.msra.mxu0 0.0
  %303 = vmatpush.msra.mxu0 0.0
  %304 = vmatpush.msra.mxu0 0.0
  %305 = vmatpush.msra.mxu0 0.0
  %306 = vmatpush.msra.mxu0 %v289
  %307 = vmatmul.f32.gmra.mxu0 %v287
  %v308 = vpop.f32.mrf.mxu0
  %v309 = vadd.f32 0.0, %v308
  %310 = vdwg.mxu0
  %v311 = vadd.f32 %v281, %v309
  %312 = vrot.lane.b32.xlu0 %v146, 122
  %v313 = vpop.permute.xlu0 %312
  %314 = vrot.lane.b32.xlu0 %v226, 125
  %v315 = vpop.permute.xlu0 %314
  %v316 = vsel %vm233, %v313, 0
  %v318 = vsel %vm236, %v315, 0
  %320 = vmatpush.msra.mxu0 0.0
  %321 = vmatpush.msra.mxu0 0.0
  %322 = vmatpush.msra.mxu0 0.0
  %323 = vmatpush.msra.mxu0 0.0
  %324 = vmatpush.msra.mxu0 0.0
  %325 = vmatpush.msra.mxu0 0.0
  %326 = vmatpush.msra.mxu0 0.0
  %327 = vmatpush.msra.mxu0 0.0
  %328 = vmatpush.msra.mxu0 0.0
  %329 = vmatpush.msra.mxu0 0.0
  %330 = vmatpush.msra.mxu0 0.0
  %331 = vmatpush.msra.mxu0 0.0
  %332 = vmatpush.msra.mxu0 0.0
  %333 = vmatpush.msra.mxu0 0.0
  %334 = vmatpush.msra.mxu0 0.0
  %335 = vmatpush.msra.mxu0 %v318
  %336 = vmatmul.f32.gmra.mxu0 %v316
  %v337 = vpop.f32.mrf.mxu0
  %v338 = vadd.f32 0.0, %v337
  %339 = vdwg.mxu0
  %v340 = vadd.f32 %v311, %v338
  %341 = vrot.lane.b32.xlu0 %v146, 120
  %v342 = vpop.permute.xlu0 %341
  %343 = vrot.lane.b32.xlu0 %v226, 124
  %v344 = vpop.permute.xlu0 %343
  %v345 = vsel %vm233, %v342, 0
  %v347 = vsel %vm236, %v344, 0
  %349 = vmatpush.msra.mxu0 0.0
  %350 = vmatpush.msra.mxu0 0.0
  %351 = vmatpush.msra.mxu0 0.0
  %352 = vmatpush.msra.mxu0 0.0
  %353 = vmatpush.msra.mxu0 0.0
  %354 = vmatpush.msra.mxu0 0.0
  %355 = vmatpush.msra.mxu0 0.0
  %356 = vmatpush.msra.mxu0 0.0
  %357 = vmatpush.msra.mxu0 0.0
  %358 = vmatpush.msra.mxu0 0.0
  %359 = vmatpush.msra.mxu0 0.0
  %360 = vmatpush.msra.mxu0 0.0
  %361 = vmatpush.msra.mxu0 0.0
  %362 = vmatpush.msra.mxu0 0.0
  %363 = vmatpush.msra.mxu0 0.0
  %364 = vmatpush.msra.mxu0 %v347
  %365 = vmatmul.f32.gmra.mxu0 %v345
  %v366 = vpop.f32.mrf.mxu0
  %v367 = vadd.f32 0.0, %v366
  %368 = vdwg.mxu0
  %v369 = vadd.f32 %v340, %v367
  %371 = vset.pattern.permute.xlu0 0
  %372 = vperm.xlu0 %371, %v147
  %v373 = vpop.permute.xlu0 %372
  %v375 = vadd.f32 %v369, %v373
  %vm376 = vcmp.ge.f32.partialorder %v375, 0.0
  %v377 = vmul.f32 %v375, 0.01
  %v378 = vsel %vm376, %v375, %v377
  %380 = vrot.lane.b32.xlu0 %v378, 127
  %v381 = vpop.permute.xlu0 %380
  %383 = vrot.lane.b32.xlu0 %v378, 126
  %v384 = vpop.permute.xlu0 %383
  %386 = vrot.lane.b32.xlu0 %v378, 125
  %v387 = vpop.permute.xlu0 %386
  %389 = vrot.lane.b32.xlu0 %v378, 124
  %v390 = vpop.permute.xlu0 %389
  %393 = vset.pattern.permute.xlu0 0
  %394 = vperm.xlu0 %393, %v150
  %v395 = vpop.permute.xlu0 %394
  %398 = vset.pattern.permute.xlu0 0
  %399 = vperm.xlu0 %398, %v151
  %v400 = vpop.permute.xlu0 %399
  %vm402 = vcmask 326656
  %v404 = vsel %vm402, %v148, 0
  %v407 = vsel %vm402, %v149, 0
  %409 = vmatpush.msra.mxu0 0.0
  %410 = vmatpush.msra.mxu0 0.0
  %411 = vmatpush.msra.mxu0 0.0
  %412 = vmatpush.msra.mxu0 0.0
  %413 = vmatpush.msra.mxu0 0.0
  %414 = vmatpush.msra.mxu0 0.0
  %415 = vmatpush.msra.mxu0 0.0
  %416 = vmatpush.msra.mxu0 0.0
  %417 = vmatpush.msra.mxu0 0.0
  %418 = vmatpush.msra.mxu0 0.0
  %419 = vmatpush.msra.mxu0 0.0
  %420 = vmatpush.msra.mxu0 %v390
  %421 = vmatpush.msra.mxu0 %v387
  %422 = vmatpush.msra.mxu0 %v384
  %423 = vmatpush.msra.mxu0 %v381
  %424 = vmatpush.msra.mxu0 %v378
  %425 = vmatmul.f32.gmra.mxu0 %v404
  %v426 = vpop.f32.mrf.mxu0
  %v427 = vadd.f32 %v395, %v426
  %428 = vmatmul.f32.gmra.mxu0 %v407
  %v429 = vpop.f32.mrf.mxu0
  %v430 = vadd.f32 %v400, %v429
  %431 = vdwg.mxu0
  %vm432 = vcmp.ge.f32.partialorder %v427, 0.0
  %vm433 = vcmp.ge.f32.partialorder %v430, 0.0
  %v434 = vmul.f32 %v427, 0.01
  %v435 = vmul.f32 %v430, 0.01
  %v436 = vsel %vm432, %v427, %v434
  %v437 = vsel %vm433, %v430, %v435
  %440 = vrot.lane.b32.xlu0 %v436, 127
  %v441 = vpop.permute.xlu0 %440
  %442 = vrot.lane.b32.xlu0 %v437, 127
  %v443 = vpop.permute.xlu0 %442
  %446 = vrot.lane.b32.xlu0 %v436, 126
  %v447 = vpop.permute.xlu0 %446
  %448 = vrot.lane.b32.xlu0 %v437, 126
  %v449 = vpop.permute.xlu0 %448
  %452 = vrot.lane.b32.xlu0 %v436, 125
  %v453 = vpop.permute.xlu0 %452
  %454 = vrot.lane.b32.xlu0 %v437, 125
  %v455 = vpop.permute.xlu0 %454
  %458 = vrot.lane.b32.xlu0 %v436, 124
  %v459 = vpop.permute.xlu0 %458
  %460 = vrot.lane.b32.xlu0 %v437, 124
  %v461 = vpop.permute.xlu0 %460
  %465 = vset.pattern.permute.xlu0 0
  %466 = vperm.xlu0 %465, %v154
  %v467 = vpop.permute.xlu0 %466
  %470 = vset.pattern.permute.xlu0 0
  %471 = vperm.xlu0 %470, %v155
  %v472 = vpop.permute.xlu0 %471
  %vm474 = vcmask 654336
  %v476 = vsel %vm474, %v152, 0
  %v479 = vsel %vm474, %v153, 0
  %481 = vmatpush.msra.mxu0 0.0
  %482 = vmatpush.msra.mxu0 0.0
  %483 = vmatpush.msra.mxu0 0.0
  %484 = vmatpush.msra.mxu0 0.0
  %485 = vmatpush.msra.mxu0 0.0
  %486 = vmatpush.msra.mxu0 0.0
  %487 = vmatpush.msra.mxu0 %v461
  %488 = vmatpush.msra.mxu0 %v459
  %489 = vmatpush.msra.mxu0 %v455
  %490 = vmatpush.msra.mxu0 %v453
  %491 = vmatpush.msra.mxu0 %v449
  %492 = vmatpush.msra.mxu0 %v447
  %493 = vmatpush.msra.mxu0 %v443
  %494 = vmatpush.msra.mxu0 %v441
  %495 = vmatpush.msra.mxu0 %v437
  %496 = vmatpush.msra.mxu0 %v436
  %497 = vmatmul.f32.gmra.mxu0 %v476
  %v498 = vpop.f32.mrf.mxu0
  %v499 = vadd.f32 %v467, %v498
  %500 = vmatmul.f32.gmra.mxu0 %v479
  %v501 = vpop.f32.mrf.mxu0
  %v502 = vadd.f32 %v472, %v501
  %503 = vdwg.mxu0
  %vm504 = vcmp.ge.f32.partialorder %v499, 0.0
  %vm505 = vcmp.ge.f32.partialorder %v502, 0.0
  %v506 = vmul.f32 %v499, 0.01
  %v507 = vmul.f32 %v502, 0.01
  %v508 = vsel %vm504, %v499, %v506
  %v509 = vsel %vm505, %v502, %v507
  %vm510 = vcmask 760832
  %v512 = vsel %vm510, %v508, 0
  %v515 = vsel %vm510, %v509, 0
  %vm517 = vcmask 1044480
  %v519 = vsel %vm517, %v167, 0
  %521 = vmatpush.msra.mxu0 0.0
  %522 = vmatpush.msra.mxu0 0.0
  %523 = vmatpush.msra.mxu0 0.0
  %524 = vmatpush.msra.mxu0 0.0
  %525 = vmatpush.msra.mxu0 %v519
  %526 = vmatpush.msra.mxu0 %v166
  %527 = vmatpush.msra.mxu0 %v165
  %528 = vmatpush.msra.mxu0 %v164
  %529 = vmatpush.msra.mxu0 %v163
  %530 = vmatpush.msra.mxu0 %v162
  %531 = vmatpush.msra.mxu0 %v161
  %532 = vmatpush.msra.mxu0 %v160
  %533 = vmatpush.msra.mxu0 %v159
  %534 = vmatpush.msra.mxu0 %v158
  %535 = vmatpush.msra.mxu0 %v157
  %536 = vmatpush.msra.mxu0 %v156
  %537 = vmatmul.f32.gmra.mxu0 %v512
  %v538 = vpop.f32.mrf.mxu0
  %v539 = vadd.f32 0.0, %v538
  %540 = vmatmul.f32.gmra.mxu0 %v515
  %v541 = vpop.f32.mrf.mxu0
  %v542 = vadd.f32 0.0, %v541
  %543 = vdwg.mxu0
  %546 = vrot.lane.b32.xlu0 %v539, 127
  %v547 = vpop.permute.xlu0 %546
  %548 = vrot.lane.b32.xlu0 %v542, 127
  %v549 = vpop.permute.xlu0 %548
  %552 = vrot.lane.b32.xlu0 %v539, 126
  %v553 = vpop.permute.xlu0 %552
  %554 = vrot.lane.b32.xlu0 %v542, 126
  %v555 = vpop.permute.xlu0 %554
  %558 = vrot.lane.b32.xlu0 %v539, 125
  %v559 = vpop.permute.xlu0 %558
  %560 = vrot.lane.b32.xlu0 %v542, 125
  %v561 = vpop.permute.xlu0 %560
  %564 = vrot.lane.b32.xlu0 %v539, 124
  %v565 = vpop.permute.xlu0 %564
  %566 = vrot.lane.b32.xlu0 %v542, 124
  %v567 = vpop.permute.xlu0 %566
  %571 = vset.pattern.permute.xlu0 0
  %572 = vperm.xlu0 %571, %v170
  %v573 = vpop.permute.xlu0 %572
  %576 = vset.pattern.permute.xlu0 0
  %577 = vperm.xlu0 %576, %v171
  %v578 = vpop.permute.xlu0 %577
  %v581 = vsel %vm474, %v168, 0
  %v584 = vsel %vm474, %v169, 0
  %586 = vmatpush.msra.mxu0 0.0
  %587 = vmatpush.msra.mxu0 0.0
  %588 = vmatpush.msra.mxu0 0.0
  %589 = vmatpush.msra.mxu0 0.0
  %590 = vmatpush.msra.mxu0 0.0
  %591 = vmatpush.msra.mxu0 0.0
  %592 = vmatpush.msra.mxu0 %v567
  %593 = vmatpush.msra.mxu0 %v565
  %594 = vmatpush.msra.mxu0 %v561
  %595 = vmatpush.msra.mxu0 %v559
  %596 = vmatpush.msra.mxu0 %v555
  %597 = vmatpush.msra.mxu0 %v553
  %598 = vmatpush.msra.mxu0 %v549
  %599 = vmatpush.msra.mxu0 %v547
  %600 = vmatpush.msra.mxu0 %v542
  %601 = vmatpush.msra.mxu0 %v539
  %602 = vmatmul.f32.gmra.mxu0 %v581
  %v603 = vpop.f32.mrf.mxu0
  %v604 = vadd.f32 %v573, %v603
  %605 = vmatmul.f32.gmra.mxu0 %v584
  %v606 = vpop.f32.mrf.mxu0
  %v607 = vadd.f32 %v578, %v606
  %608 = vdwg.mxu0
  %vm609 = vcmp.ge.f32.partialorder %v604, 0.0
  %vm610 = vcmp.ge.f32.partialorder %v607, 0.0
  %v611 = vmul.f32 %v604, 0.01
  %v612 = vmul.f32 %v607, 0.01
  %v613 = vsel %vm609, %v604, %v611
  %v614 = vsel %vm610, %v607, %v612
  %617 = vrot.lane.b32.xlu0 %v613, 127
  %v618 = vpop.permute.xlu0 %617
  %619 = vrot.lane.b32.xlu0 %v614, 127
  %v620 = vpop.permute.xlu0 %619
  %623 = vrot.lane.b32.xlu0 %v613, 126
  %v624 = vpop.permute.xlu0 %623
  %625 = vrot.lane.b32.xlu0 %v614, 126
  %v626 = vpop.permute.xlu0 %625
  %629 = vrot.lane.b32.xlu0 %v613, 125
  %v630 = vpop.permute.xlu0 %629
  %631 = vrot.lane.b32.xlu0 %v614, 125
  %v632 = vpop.permute.xlu0 %631
  %635 = vrot.lane.b32.xlu0 %v613, 124
  %v636 = vpop.permute.xlu0 %635
  %637 = vrot.lane.b32.xlu0 %v614, 124
  %v638 = vpop.permute.xlu0 %637
  %642 = vset.pattern.permute.xlu0 0
  %643 = vperm.xlu0 %642, %v175
  %v644 = vpop.permute.xlu0 %643
  %647 = vset.pattern.permute.xlu0 0
  %648 = vperm.xlu0 %647, %v176
  %v649 = vpop.permute.xlu0 %648
  %652 = vset.pattern.permute.xlu0 0
  %653 = vperm.xlu0 %652, %v177
  %v654 = vpop.permute.xlu0 %653
  %v657 = vsel %vm474, %v172, 0
  %v660 = vsel %vm474, %v173, 0
  %v663 = vsel %vm474, %v174, 0
  %665 = vmatpush.msra.mxu0 0.0
  %666 = vmatpush.msra.mxu0 0.0
  %667 = vmatpush.msra.mxu0 0.0
  %668 = vmatpush.msra.mxu0 0.0
  %669 = vmatpush.msra.mxu0 0.0
  %670 = vmatpush.msra.mxu0 0.0
  %671 = vmatpush.msra.mxu0 %v638
  %672 = vmatpush.msra.mxu0 %v636
  %673 = vmatpush.msra.mxu0 %v632
  %674 = vmatpush.msra.mxu0 %v630
  %675 = vmatpush.msra.mxu0 %v626
  %676 = vmatpush.msra.mxu0 %v624
  %677 = vmatpush.msra.mxu0 %v620
  %678 = vmatpush.msra.mxu0 %v618
  %679 = vmatpush.msra.mxu0 %v614
  %680 = vmatpush.msra.mxu0 %v613
  %681 = vmatmul.f32.gmra.mxu0 %v657
  %v682 = vpop.f32.mrf.mxu0
  %v683 = vadd.f32 %v644, %v682
  %684 = vmatmul.f32.gmra.mxu0 %v660
  %v685 = vpop.f32.mrf.mxu0
  %v686 = vadd.f32 %v649, %v685
  %687 = vmatmul.f32.gmra.mxu0 %v663
  %v688 = vpop.f32.mrf.mxu0
  %v689 = vadd.f32 %v654, %v688
  %690 = vdwg.mxu0
  %vm691 = vcmp.ge.f32.partialorder %v683, 0.0
  %vm692 = vcmp.ge.f32.partialorder %v686, 0.0
  %vm693 = vcmp.ge.f32.partialorder %v689, 0.0
  %v694 = vmul.f32 %v683, 0.01
  %v695 = vmul.f32 %v686, 0.01
  %v696 = vmul.f32 %v689, 0.01
  %v697 = vsel %vm691, %v683, %v694
  %v698 = vsel %vm692, %v686, %v695
  %v699 = vsel %vm693, %v689, %v696
  %703 = vrot.lane.b32.xlu0 %v697, 127
  %v704 = vpop.permute.xlu0 %703
  %705 = vrot.lane.b32.xlu0 %v698, 127
  %v706 = vpop.permute.xlu0 %705
  %707 = vrot.lane.b32.xlu0 %v699, 127
  %v708 = vpop.permute.xlu0 %707
  %712 = vrot.lane.b32.xlu0 %v697, 126
  %v713 = vpop.permute.xlu0 %712
  %714 = vrot.lane.b32.xlu0 %v698, 126
  %v715 = vpop.permute.xlu0 %714
  %716 = vrot.lane.b32.xlu0 %v699, 126
  %v717 = vpop.permute.xlu0 %716
  %721 = vrot.lane.b32.xlu0 %v697, 125
  %v722 = vpop.permute.xlu0 %721
  %723 = vrot.lane.b32.xlu0 %v698, 125
  %v724 = vpop.permute.xlu0 %723
  %725 = vrot.lane.b32.xlu0 %v699, 125
  %v726 = vpop.permute.xlu0 %725
  %730 = vrot.lane.b32.xlu0 %v697, 124
  %v731 = vpop.permute.xlu0 %730
  %732 = vrot.lane.b32.xlu0 %v698, 124
  %v733 = vpop.permute.xlu0 %732
  %734 = vrot.lane.b32.xlu0 %v699, 124
  %v735 = vpop.permute.xlu0 %734
  %740 = vset.pattern.permute.xlu0 0
  %741 = vperm.xlu0 %740, %v181
  %v742 = vpop.permute.xlu0 %741
  %745 = vset.pattern.permute.xlu0 0
  %746 = vperm.xlu0 %745, %v182
  %v747 = vpop.permute.xlu0 %746
  %750 = vset.pattern.permute.xlu0 0
  %751 = vperm.xlu0 %750, %v183
  %v752 = vpop.permute.xlu0 %751
  %vm754 = vcmask 982016
  %v756 = vsel %vm754, %v178, 0
  %v759 = vsel %vm754, %v179, 0
  %v762 = vsel %vm754, %v180, 0
  %764 = vmatpush.msra.mxu0 0.0
  %765 = vmatpush.msra.mxu0 %v735
  %766 = vmatpush.msra.mxu0 %v733
  %767 = vmatpush.msra.mxu0 %v731
  %768 = vmatpush.msra.mxu0 %v726
  %769 = vmatpush.msra.mxu0 %v724
  %770 = vmatpush.msra.mxu0 %v722
  %771 = vmatpush.msra.mxu0 %v717
  %772 = vmatpush.msra.mxu0 %v715
  %773 = vmatpush.msra.mxu0 %v713
  %774 = vmatpush.msra.mxu0 %v708
  %775 = vmatpush.msra.mxu0 %v706
  %776 = vmatpush.msra.mxu0 %v704
  %777 = vmatpush.msra.mxu0 %v699
  %778 = vmatpush.msra.mxu0 %v698
  %779 = vmatpush.msra.mxu0 %v697
  %780 = vmatmul.f32.gmra.mxu0 %v756
  %v781 = vpop.f32.mrf.mxu0
  %v782 = vadd.f32 %v742, %v781
  %783 = vmatmul.f32.gmra.mxu0 %v759
  %v784 = vpop.f32.mrf.mxu0
  %v785 = vadd.f32 %v747, %v784
  %786 = vmatmul.f32.gmra.mxu0 %v762
  %v787 = vpop.f32.mrf.mxu0
  %v788 = vadd.f32 %v752, %v787
  %789 = vdwg.mxu0
  %vm790 = vcmp.ge.f32.partialorder %v782, 0.0
  %vm791 = vcmp.ge.f32.partialorder %v785, 0.0
  %vm792 = vcmp.ge.f32.partialorder %v788, 0.0
  %v793 = vmul.f32 %v782, 0.01
  %v794 = vmul.f32 %v785, 0.01
  %v795 = vmul.f32 %v788, 0.01
  %v796 = vsel %vm790, %v782, %v793
  %v797 = vsel %vm791, %v785, %v794
  %v798 = vsel %vm792, %v788, %v795
  %vm799 = vcmask 285696
  %v801 = vsel %vm799, %v796, 0
  %v804 = vsel %vm799, %v797, 0
  %v807 = vsel %vm799, %v798, 0
  %vm809 = vcmask 1042432
  %v811 = vsel %vm809, %v188, 0
  %813 = vmatpush.msra.mxu0 0.0
  %814 = vmatpush.msra.mxu0 0.0
  %815 = vmatpush.msra.mxu0 0.0
  %816 = vmatpush.msra.mxu0 0.0
  %817 = vmatpush.msra.mxu0 0.0
  %818 = vmatpush.msra.mxu0 0.0
  %819 = vmatpush.msra.mxu0 0.0
  %820 = vmatpush.msra.mxu0 0.0
  %821 = vmatpush.msra.mxu0 0.0
  %822 = vmatpush.msra.mxu0 0.0
  %823 = vmatpush.msra.mxu0 0.0
  %824 = vmatpush.msra.mxu0 %v811
  %825 = vmatpush.msra.mxu0 %v187
  %826 = vmatpush.msra.mxu0 %v186
  %827 = vmatpush.msra.mxu0 %v185
  %828 = vmatpush.msra.mxu0 %v184
  %829 = vmatmul.f32.gmra.mxu0 %v801
  %v830 = vpop.f32.mrf.mxu0
  %v831 = vadd.f32 0.0, %v830
  %832 = vmatmul.f32.gmra.mxu0 %v804
  %v833 = vpop.f32.mrf.mxu0
  %v834 = vadd.f32 0.0, %v833
  %835 = vmatmul.f32.gmra.mxu0 %v807
  %v836 = vpop.f32.mrf.mxu0
  %v837 = vadd.f32 0.0, %v836
  %838 = vdwg.mxu0
  %842 = vrot.lane.b32.xlu0 %v831, 127
  %v843 = vpop.permute.xlu0 %842
  %844 = vrot.lane.b32.xlu0 %v834, 127
  %v845 = vpop.permute.xlu0 %844
  %846 = vrot.lane.b32.xlu0 %v837, 127
  %v847 = vpop.permute.xlu0 %846
  %851 = vrot.lane.b32.xlu0 %v831, 126
  %v852 = vpop.permute.xlu0 %851
  %853 = vrot.lane.b32.xlu0 %v834, 126
  %v854 = vpop.permute.xlu0 %853
  %855 = vrot.lane.b32.xlu0 %v837, 126
  %v856 = vpop.permute.xlu0 %855
  %860 = vrot.lane.b32.xlu0 %v831, 125
  %v861 = vpop.permute.xlu0 %860
  %862 = vrot.lane.b32.xlu0 %v834, 125
  %v863 = vpop.permute.xlu0 %862
  %864 = vrot.lane.b32.xlu0 %v837, 125
  %v865 = vpop.permute.xlu0 %864
  %869 = vrot.lane.b32.xlu0 %v831, 124
  %v870 = vpop.permute.xlu0 %869
  %871 = vrot.lane.b32.xlu0 %v834, 124
  %v872 = vpop.permute.xlu0 %871
  %873 = vrot.lane.b32.xlu0 %v837, 124
  %v874 = vpop.permute.xlu0 %873
  %879 = vset.pattern.permute.xlu0 0
  %880 = vperm.xlu0 %879, %v192
  %v881 = vpop.permute.xlu0 %880
  %884 = vset.pattern.permute.xlu0 0
  %885 = vperm.xlu0 %884, %v193
  %v886 = vpop.permute.xlu0 %885
  %889 = vset.pattern.permute.xlu0 0
  %890 = vperm.xlu0 %889, %v194
  %v891 = vpop.permute.xlu0 %890
  %v894 = vsel %vm754, %v189, 0
  %v897 = vsel %vm754, %v190, 0
  %v900 = vsel %vm754, %v191, 0
  %902 = vmatpush.msra.mxu0 0.0
  %903 = vmatpush.msra.mxu0 %v874
  %904 = vmatpush.msra.mxu0 %v872
  %905 = vmatpush.msra.mxu0 %v870
  %906 = vmatpush.msra.mxu0 %v865
  %907 = vmatpush.msra.mxu0 %v863
  %908 = vmatpush.msra.mxu0 %v861
  %909 = vmatpush.msra.mxu0 %v856
  %910 = vmatpush.msra.mxu0 %v854
  %911 = vmatpush.msra.mxu0 %v852
  %912 = vmatpush.msra.mxu0 %v847
  %913 = vmatpush.msra.mxu0 %v845
  %914 = vmatpush.msra.mxu0 %v843
  %915 = vmatpush.msra.mxu0 %v837
  %916 = vmatpush.msra.mxu0 %v834
  %917 = vmatpush.msra.mxu0 %v831
  %918 = vmatmul.f32.gmra.mxu0 %v894
  %v919 = vpop.f32.mrf.mxu0
  %v920 = vadd.f32 %v881, %v919
  %921 = vmatmul.f32.gmra.mxu0 %v897
  %v922 = vpop.f32.mrf.mxu0
  %v923 = vadd.f32 %v886, %v922
  %924 = vmatmul.f32.gmra.mxu0 %v900
  %v925 = vpop.f32.mrf.mxu0
  %v926 = vadd.f32 %v891, %v925
  %927 = vdwg.mxu0
  %vm928 = vcmp.ge.f32.partialorder %v920, 0.0
  %vm929 = vcmp.ge.f32.partialorder %v923, 0.0
  %vm930 = vcmp.ge.f32.partialorder %v926, 0.0
  %v931 = vmul.f32 %v920, 0.01
  %v932 = vmul.f32 %v923, 0.01
  %v933 = vmul.f32 %v926, 0.01
  %v934 = vsel %vm928, %v920, %v931
  %v935 = vsel %vm929, %v923, %v932
  %v936 = vsel %vm930, %v926, %v933
  %vm937 = vcmask 113664
  %v939 = vsel %vm937, %v934, 0
  %v942 = vsel %vm937, %v935, 0
  %v945 = vsel %vm937, %v936, 0
  %vm947 = vcmask 1045504
  %v949 = vsel %vm947, %v202, 0
  %951 = vmatpush.msra.mxu0 0.0
  %952 = vmatpush.msra.mxu0 0.0
  %953 = vmatpush.msra.mxu0 0.0
  %954 = vmatpush.msra.mxu0 0.0
  %955 = vmatpush.msra.mxu0 0.0
  %956 = vmatpush.msra.mxu0 0.0
  %957 = vmatpush.msra.mxu0 0.0
  %958 = vmatpush.msra.mxu0 0.0
  %959 = vmatpush.msra.mxu0 0.0
  %960 = vmatpush.msra.mxu0 0.0
  %961 = vmatpush.msra.mxu0 0.0
  %962 = vmatpush.msra.mxu0 0.0
  %963 = vmatpush.msra.mxu0 0.0
  %964 = vmatpush.msra.mxu0 0.0
  %965 = vmatpush.msra.mxu0 %v949
  %966 = vmatpush.msra.mxu0 %v201
  %967 = vmatmul.f32.gmra.mxu0 %v939
  %v968 = vpop.f32.mrf.mxu0
  %v969 = vadd.f32 0.0, %v968
  %970 = vmatmul.f32.gmra.mxu0 %v942
  %v971 = vpop.f32.mrf.mxu0
  %v972 = vadd.f32 0.0, %v971
  %973 = vmatmul.f32.gmra.mxu0 %v945
  %v974 = vpop.f32.mrf.mxu0
  %v975 = vadd.f32 0.0, %v974
  %976 = vdwg.mxu0
  %980 = vrot.lane.b32.xlu0 %v969, 127
  %v981 = vpop.permute.xlu0 %980
  %982 = vrot.lane.b32.xlu0 %v972, 127
  %v983 = vpop.permute.xlu0 %982
  %984 = vrot.lane.b32.xlu0 %v975, 127
  %v985 = vpop.permute.xlu0 %984
  %989 = vrot.lane.b32.xlu0 %v969, 126
  %v990 = vpop.permute.xlu0 %989
  %991 = vrot.lane.b32.xlu0 %v972, 126
  %v992 = vpop.permute.xlu0 %991
  %993 = vrot.lane.b32.xlu0 %v975, 126
  %v994 = vpop.permute.xlu0 %993
  %998 = vrot.lane.b32.xlu0 %v969, 125
  %v999 = vpop.permute.xlu0 %998
  %1000 = vrot.lane.b32.xlu0 %v972, 125
  %v1001 = vpop.permute.xlu0 %1000
  %1002 = vrot.lane.b32.xlu0 %v975, 125
  %v1003 = vpop.permute.xlu0 %1002
  %1007 = vrot.lane.b32.xlu0 %v969, 124
  %v1008 = vpop.permute.xlu0 %1007
  %1009 = vrot.lane.b32.xlu0 %v972, 124
  %v1010 = vpop.permute.xlu0 %1009
  %1011 = vrot.lane.b32.xlu0 %v975, 124
  %v1012 = vpop.permute.xlu0 %1011
  %1017 = vset.pattern.permute.xlu0 0
  %1018 = vperm.xlu0 %1017, %v198
  %v1019 = vpop.permute.xlu0 %1018
  %1022 = vset.pattern.permute.xlu0 0
  %1023 = vperm.xlu0 %1022, %v199
  %v1024 = vpop.permute.xlu0 %1023
  %1027 = vset.pattern.permute.xlu0 0
  %1028 = vperm.xlu0 %1027, %v200
  %v1029 = vpop.permute.xlu0 %1028
  %v1032 = vsel %vm754, %v195, 0
  %v1035 = vsel %vm754, %v196, 0
  %v1038 = vsel %vm754, %v197, 0
  %1040 = vmatpush.msra.mxu0 0.0
  %1041 = vmatpush.msra.mxu0 %v1012
  %1042 = vmatpush.msra.mxu0 %v1010
  %1043 = vmatpush.msra.mxu0 %v1008
  %1044 = vmatpush.msra.mxu0 %v1003
  %1045 = vmatpush.msra.mxu0 %v1001
  %1046 = vmatpush.msra.mxu0 %v999
  %1047 = vmatpush.msra.mxu0 %v994
  %1048 = vmatpush.msra.mxu0 %v992
  %1049 = vmatpush.msra.mxu0 %v990
  %1050 = vmatpush.msra.mxu0 %v985
  %1051 = vmatpush.msra.mxu0 %v983
  %1052 = vmatpush.msra.mxu0 %v981
  %1053 = vmatpush.msra.mxu0 %v975
  %1054 = vmatpush.msra.mxu0 %v972
  %1055 = vmatpush.msra.mxu0 %v969
  %1056 = vmatmul.f32.gmra.mxu0 %v1032
  %v1057 = vpop.f32.mrf.mxu0
  %v1058 = vadd.f32 %v1019, %v1057
  %1059 = vmatmul.f32.gmra.mxu0 %v1035
  %v1060 = vpop.f32.mrf.mxu0
  %v1061 = vadd.f32 %v1024, %v1060
  %1062 = vmatmul.f32.gmra.mxu0 %v1038
  %v1063 = vpop.f32.mrf.mxu0
  %v1064 = vadd.f32 %v1029, %v1063
  %1065 = vdwg.mxu0
  %vm1066 = vcmp.ge.f32.partialorder %v1058, 0.0
  %vm1067 = vcmp.ge.f32.partialorder %v1061, 0.0
  %vm1068 = vcmp.ge.f32.partialorder %v1064, 0.0
  %v1069 = vmul.f32 %v1058, 0.01
  %v1070 = vmul.f32 %v1061, 0.01
  %v1071 = vmul.f32 %v1064, 0.01
  %v1072 = vsel %vm1066, %v1058, %v1069
  %v1073 = vsel %vm1067, %v1061, %v1070
  %v1074 = vsel %vm1068, %v1064, %v1071
  %1078 = vrot.lane.b32.xlu0 %v1072, 127
  %v1079 = vpop.permute.xlu0 %1078
  %1080 = vrot.lane.b32.xlu0 %v1073, 127
  %v1081 = vpop.permute.xlu0 %1080
  %1082 = vrot.lane.b32.xlu0 %v1074, 127
  %v1083 = vpop.permute.xlu0 %1082
  %1087 = vrot.lane.b32.xlu0 %v1072, 126
  %v1088 = vpop.permute.xlu0 %1087
  %1089 = vrot.lane.b32.xlu0 %v1073, 126
  %v1090 = vpop.permute.xlu0 %1089
  %1091 = vrot.lane.b32.xlu0 %v1074, 126
  %v1092 = vpop.permute.xlu0 %1091
  %1096 = vrot.lane.b32.xlu0 %v1072, 125
  %v1097 = vpop.permute.xlu0 %1096
  %1098 = vrot.lane.b32.xlu0 %v1073, 125
  %v1099 = vpop.permute.xlu0 %1098
  %1100 = vrot.lane.b32.xlu0 %v1074, 125
  %v1101 = vpop.permute.xlu0 %1100
  %1105 = vrot.lane.b32.xlu0 %v1072, 124
  %v1106 = vpop.permute.xlu0 %1105
  %1107 = vrot.lane.b32.xlu0 %v1073, 124
  %v1108 = vpop.permute.xlu0 %1107
  %1109 = vrot.lane.b32.xlu0 %v1074, 124
  %v1110 = vpop.permute.xlu0 %1109
  %1115 = vset.pattern.permute.xlu0 0
  %1116 = vperm.xlu0 %1115, %v205
  %v1117 = vpop.permute.xlu0 %1116
  %1120 = vset.pattern.permute.xlu0 0
  %1121 = vperm.xlu0 %1120, %v206
  %v1122 = vpop.permute.xlu0 %1121
  %v1125 = vsel %vm754, %v203, 0
  %v1128 = vsel %vm754, %v204, 0
  %1130 = vmatpush.msra.mxu0 0.0
  %1131 = vmatpush.msra.mxu0 %v1110
  %1132 = vmatpush.msra.mxu0 %v1108
  %1133 = vmatpush.msra.mxu0 %v1106
  %1134 = vmatpush.msra.mxu0 %v1101
  %1135 = vmatpush.msra.mxu0 %v1099
  %1136 = vmatpush.msra.mxu0 %v1097
  %1137 = vmatpush.msra.mxu0 %v1092
  %1138 = vmatpush.msra.mxu0 %v1090
  %1139 = vmatpush.msra.mxu0 %v1088
  %1140 = vmatpush.msra.mxu0 %v1083
  %1141 = vmatpush.msra.mxu0 %v1081
  %1142 = vmatpush.msra.mxu0 %v1079
  %1143 = vmatpush.msra.mxu0 %v1074
  %1144 = vmatpush.msra.mxu0 %v1073
  %1145 = vmatpush.msra.mxu0 %v1072
  %1146 = vmatmul.f32.gmra.mxu0 %v1125
  %v1147 = vpop.f32.mrf.mxu0
  %v1148 = vadd.f32 %v1117, %v1147
  %1149 = vmatmul.f32.gmra.mxu0 %v1128
  %v1150 = vpop.f32.mrf.mxu0
  %v1151 = vadd.f32 %v1122, %v1150
  %1152 = vdwg.mxu0
  %vm1153 = vcmp.ge.f32.partialorder %v1148, 0.0
  %vm1154 = vcmp.ge.f32.partialorder %v1151, 0.0
  %v1155 = vmul.f32 %v1148, 0.01
  %v1156 = vmul.f32 %v1151, 0.01
  %v1157 = vsel %vm1153, %v1148, %v1155
  %v1158 = vsel %vm1154, %v1151, %v1156
  %1161 = vrot.lane.b32.xlu0 %v1157, 127
  %v1162 = vpop.permute.xlu0 %1161
  %1163 = vrot.lane.b32.xlu0 %v1158, 127
  %v1164 = vpop.permute.xlu0 %1163
  %1167 = vrot.lane.b32.xlu0 %v1157, 126
  %v1168 = vpop.permute.xlu0 %1167
  %1169 = vrot.lane.b32.xlu0 %v1158, 126
  %v1170 = vpop.permute.xlu0 %1169
  %1173 = vrot.lane.b32.xlu0 %v1157, 125
  %v1174 = vpop.permute.xlu0 %1173
  %1175 = vrot.lane.b32.xlu0 %v1158, 125
  %v1176 = vpop.permute.xlu0 %1175
  %1179 = vrot.lane.b32.xlu0 %v1157, 124
  %v1180 = vpop.permute.xlu0 %1179
  %1181 = vrot.lane.b32.xlu0 %v1158, 124
  %v1182 = vpop.permute.xlu0 %1181
  %v1186 = vsel %vm474, %v209, 0
  %v1189 = vsel %vm474, %v210, 0
  %1191 = vmatpush.msra.mxu0 0.0
  %1192 = vmatpush.msra.mxu0 0.0
  %1193 = vmatpush.msra.mxu0 0.0
  %1194 = vmatpush.msra.mxu0 0.0
  %1195 = vmatpush.msra.mxu0 0.0
  %1196 = vmatpush.msra.mxu0 0.0
  %1197 = vmatpush.msra.mxu0 %v1182
  %1198 = vmatpush.msra.mxu0 %v1180
  %1199 = vmatpush.msra.mxu0 %v1176
  %1200 = vmatpush.msra.mxu0 %v1174
  %1201 = vmatpush.msra.mxu0 %v1170
  %1202 = vmatpush.msra.mxu0 %v1168
  %1203 = vmatpush.msra.mxu0 %v1164
  %1204 = vmatpush.msra.mxu0 %v1162
  %1205 = vmatpush.msra.mxu0 %v1158
  %1206 = vmatpush.msra.mxu0 %v1157
  %1207 = vmatmul.f32.gmra.mxu0 %v1186
  %v1208 = vpop.f32.mrf.mxu0
  %v1209 = vadd.f32 0.0, %v1208
  %1210 = vmatmul.f32.gmra.mxu0 %v1189
  %v1211 = vpop.f32.mrf.mxu0
  %v1212 = vadd.f32 0.0, %v1211
  %1213 = vdwg.mxu0
  %1214 = vrot.lane.b32.xlu0 %v613, 116
  %v1215 = vpop.permute.xlu0 %1214
  %1216 = vrot.lane.b32.xlu0 %v614, 116
  %v1217 = vpop.permute.xlu0 %1216
  %1218 = vrot.lane.b32.xlu0 %v618, 116
  %v1219 = vpop.permute.xlu0 %1218
  %1220 = vrot.lane.b32.xlu0 %v620, 116
  %v1221 = vpop.permute.xlu0 %1220
  %1222 = vrot.lane.b32.xlu0 %v624, 116
  %v1223 = vpop.permute.xlu0 %1222
  %1224 = vrot.lane.b32.xlu0 %v626, 116
  %v1225 = vpop.permute.xlu0 %1224
  %1226 = vrot.lane.b32.xlu0 %v630, 116
  %v1227 = vpop.permute.xlu0 %1226
  %1228 = vrot.lane.b32.xlu0 %v632, 116
  %v1229 = vpop.permute.xlu0 %1228
  %1230 = vrot.lane.b32.xlu0 %v636, 116
  %v1231 = vpop.permute.xlu0 %1230
  %1232 = vrot.lane.b32.xlu0 %v638, 116
  %v1233 = vpop.permute.xlu0 %1232
  %v1245 = vsel %vm474, %v207, 0
  %v1248 = vsel %vm474, %v208, 0
  %1250 = vmatpush.msra.mxu0 0.0
  %1251 = vmatpush.msra.mxu0 0.0
  %1252 = vmatpush.msra.mxu0 0.0
  %1253 = vmatpush.msra.mxu0 0.0
  %1254 = vmatpush.msra.mxu0 0.0
  %1255 = vmatpush.msra.mxu0 0.0
  %1256 = vmatpush.msra.mxu0 %v1233
  %1257 = vmatpush.msra.mxu0 %v1231
  %1258 = vmatpush.msra.mxu0 %v1229
  %1259 = vmatpush.msra.mxu0 %v1227
  %1260 = vmatpush.msra.mxu0 %v1225
  %1261 = vmatpush.msra.mxu0 %v1223
  %1262 = vmatpush.msra.mxu0 %v1221
  %1263 = vmatpush.msra.mxu0 %v1219
  %1264 = vmatpush.msra.mxu0 %v1217
  %1265 = vmatpush.msra.mxu0 %v1215
  %1266 = vmatmul.f32.gmra.mxu0 %v1245
  %v1267 = vpop.f32.mrf.mxu0
  %v1268 = vadd.f32 %v1209, %v1267
  %1269 = vmatmul.f32.gmra.mxu0 %v1248
  %v1270 = vpop.f32.mrf.mxu0
  %v1271 = vadd.f32 %v1212, %v1270
  %1272 = vdwg.mxu0
  %1274 = vset.pattern.permute.xlu0 0
  %1275 = vperm.xlu0 %1274, %v211
  %v1276 = vpop.permute.xlu0 %1275
  %1279 = vset.pattern.permute.xlu0 0
  %1280 = vperm.xlu0 %1279, %v212
  %v1281 = vpop.permute.xlu0 %1280
  %v1283 = vadd.f32 %v1268, %v1276
  %v1284 = vadd.f32 %v1271, %v1281
  %vm1285 = vcmp.ge.f32.partialorder %v1283, 0.0
  %vm1286 = vcmp.ge.f32.partialorder %v1284, 0.0
  %v1287 = vmul.f32 %v1283, 0.01
  %v1288 = vmul.f32 %v1284, 0.01
  %v1289 = vsel %vm1285, %v1283, %v1287
  %v1290 = vsel %vm1286, %v1284, %v1288
  %vm1291 = vcmask 121856
  %v1293 = vsel %vm1291, %v1289, 0
  %v1296 = vsel %vm1291, %v1290, 0
  %vm1298 = vcmask 1046528
  %v1300 = vsel %vm1298, %v218, 0
  %1302 = vmatpush.msra.mxu0 0.0
  %1303 = vmatpush.msra.mxu0 0.0
  %1304 = vmatpush.msra.mxu0 0.0
  %1305 = vmatpush.msra.mxu0 0.0
  %1306 = vmatpush.msra.mxu0 0.0
  %1307 = vmatpush.msra.mxu0 0.0
  %1308 = vmatpush.msra.mxu0 0.0
  %1309 = vmatpush.msra.mxu0 0.0
  %1310 = vmatpush.msra.mxu0 0.0
  %1311 = vmatpush.msra.mxu0 0.0
  %1312 = vmatpush.msra.mxu0 0.0
  %1313 = vmatpush.msra.mxu0 0.0
  %1314 = vmatpush.msra.mxu0 0.0
  %1315 = vmatpush.msra.mxu0 0.0
  %1316 = vmatpush.msra.mxu0 %v1300
  %1317 = vmatpush.msra.mxu0 %v217
  %1318 = vmatmul.f32.gmra.mxu0 %v1293
  %v1319 = vpop.f32.mrf.mxu0
  %v1320 = vadd.f32 0.0, %v1319
  %1321 = vmatmul.f32.gmra.mxu0 %v1296
  %v1322 = vpop.f32.mrf.mxu0
  %v1323 = vadd.f32 0.0, %v1322
  %1324 = vdwg.mxu0
  %1327 = vrot.lane.b32.xlu0 %v1320, 127
  %v1328 = vpop.permute.xlu0 %1327
  %1329 = vrot.lane.b32.xlu0 %v1323, 127
  %v1330 = vpop.permute.xlu0 %1329
  %1333 = vrot.lane.b32.xlu0 %v1320, 126
  %v1334 = vpop.permute.xlu0 %1333
  %1335 = vrot.lane.b32.xlu0 %v1323, 126
  %v1336 = vpop.permute.xlu0 %1335
  %1339 = vrot.lane.b32.xlu0 %v1320, 125
  %v1340 = vpop.permute.xlu0 %1339
  %1341 = vrot.lane.b32.xlu0 %v1323, 125
  %v1342 = vpop.permute.xlu0 %1341
  %1345 = vrot.lane.b32.xlu0 %v1320, 124
  %v1346 = vpop.permute.xlu0 %1345
  %1347 = vrot.lane.b32.xlu0 %v1323, 124
  %v1348 = vpop.permute.xlu0 %1347
  %1352 = vset.pattern.permute.xlu0 0
  %1353 = vperm.xlu0 %1352, %v215
  %v1354 = vpop.permute.xlu0 %1353
  %1357 = vset.pattern.permute.xlu0 0
  %1358 = vperm.xlu0 %1357, %v216
  %v1359 = vpop.permute.xlu0 %1358
  %v1362 = vsel %vm474, %v213, 0
  %v1365 = vsel %vm474, %v214, 0
  %1367 = vmatpush.msra.mxu0 0.0
  %1368 = vmatpush.msra.mxu0 0.0
  %1369 = vmatpush.msra.mxu0 0.0
  %1370 = vmatpush.msra.mxu0 0.0
  %1371 = vmatpush.msra.mxu0 0.0
  %1372 = vmatpush.msra.mxu0 0.0
  %1373 = vmatpush.msra.mxu0 %v1348
  %1374 = vmatpush.msra.mxu0 %v1346
  %1375 = vmatpush.msra.mxu0 %v1342
  %1376 = vmatpush.msra.mxu0 %v1340
  %1377 = vmatpush.msra.mxu0 %v1336
  %1378 = vmatpush.msra.mxu0 %v1334
  %1379 = vmatpush.msra.mxu0 %v1330
  %1380 = vmatpush.msra.mxu0 %v1328
  %1381 = vmatpush.msra.mxu0 %v1323
  %1382 = vmatpush.msra.mxu0 %v1320
  %1383 = vmatmul.f32.gmra.mxu0 %v1362
  %v1384 = vpop.f32.mrf.mxu0
  %v1385 = vadd.f32 %v1354, %v1384
  %1386 = vmatmul.f32.gmra.mxu0 %v1365
  %v1387 = vpop.f32.mrf.mxu0
  %v1388 = vadd.f32 %v1359, %v1387
  %1389 = vdwg.mxu0
  %vm1390 = vcmp.ge.f32.partialorder %v1385, 0.0
  %vm1391 = vcmp.ge.f32.partialorder %v1388, 0.0
  %v1392 = vmul.f32 %v1385, 0.01
  %v1393 = vmul.f32 %v1388, 0.01
  %v1394 = vsel %vm1390, %v1385, %v1392
  %v1395 = vsel %vm1391, %v1388, %v1393
  %1398 = vrot.lane.b32.xlu0 %v1394, 127
  %v1399 = vpop.permute.xlu0 %1398
  %1400 = vrot.lane.b32.xlu0 %v1395, 127
  %v1401 = vpop.permute.xlu0 %1400
  %1404 = vrot.lane.b32.xlu0 %v1394, 126
  %v1405 = vpop.permute.xlu0 %1404
  %1406 = vrot.lane.b32.xlu0 %v1395, 126
  %v1407 = vpop.permute.xlu0 %1406
  %1410 = vrot.lane.b32.xlu0 %v1394, 125
  %v1411 = vpop.permute.xlu0 %1410
  %1412 = vrot.lane.b32.xlu0 %v1395, 125
  %v1413 = vpop.permute.xlu0 %1412
  %1416 = vrot.lane.b32.xlu0 %v1394, 124
  %v1417 = vpop.permute.xlu0 %1416
  %1418 = vrot.lane.b32.xlu0 %v1395, 124
  %v1419 = vpop.permute.xlu0 %1418
  %1423 = vset.pattern.permute.xlu0 0
  %1424 = vperm.xlu0 %1423, %v220
  %v1425 = vpop.permute.xlu0 %1424
  %v1428 = vsel %vm474, %v219, 0
  %1430 = vmatpush.msra.mxu0 0.0
  %1431 = vmatpush.msra.mxu0 0.0
  %1432 = vmatpush.msra.mxu0 0.0
  %1433 = vmatpush.msra.mxu0 0.0
  %1434 = vmatpush.msra.mxu0 0.0
  %1435 = vmatpush.msra.mxu0 0.0
  %1436 = vmatpush.msra.mxu0 %v1419
  %1437 = vmatpush.msra.mxu0 %v1417
  %1438 = vmatpush.msra.mxu0 %v1413
  %1439 = vmatpush.msra.mxu0 %v1411
  %1440 = vmatpush.msra.mxu0 %v1407
  %1441 = vmatpush.msra.mxu0 %v1405
  %1442 = vmatpush.msra.mxu0 %v1401
  %1443 = vmatpush.msra.mxu0 %v1399
  %1444 = vmatpush.msra.mxu0 %v1395
  %1445 = vmatpush.msra.mxu0 %v1394
  %1446 = vmatmul.f32.gmra.mxu0 %v1428
  %v1447 = vpop.f32.mrf.mxu0
  %v1448 = vadd.f32 %v1425, %v1447
  %1449 = vdwg.mxu0
  %vm1450 = vcmp.ge.f32.partialorder %v1448, 0.0
  %v1451 = vmul.f32 %v1448, 0.01
  %v1452 = vsel %vm1450, %v1448, %v1451
  %1454 = vrot.lane.b32.xlu0 %v1452, 127
  %v1455 = vpop.permute.xlu0 %1454
  %1457 = vrot.lane.b32.xlu0 %v1452, 126
  %v1458 = vpop.permute.xlu0 %1457
  %1460 = vrot.lane.b32.xlu0 %v1452, 125
  %v1461 = vpop.permute.xlu0 %1460
  %1463 = vrot.lane.b32.xlu0 %v1452, 124
  %v1464 = vpop.permute.xlu0 %1463
  %v1467 = vsel %vm402, %v222, 0
  %1469 = vmatpush.msra.mxu0 0.0
  %1470 = vmatpush.msra.mxu0 0.0
  %1471 = vmatpush.msra.mxu0 0.0
  %1472 = vmatpush.msra.mxu0 0.0
  %1473 = vmatpush.msra.mxu0 0.0
  %1474 = vmatpush.msra.mxu0 0.0
  %1475 = vmatpush.msra.mxu0 0.0
  %1476 = vmatpush.msra.mxu0 0.0
  %1477 = vmatpush.msra.mxu0 0.0
  %1478 = vmatpush.msra.mxu0 0.0
  %1479 = vmatpush.msra.mxu0 0.0
  %1480 = vmatpush.msra.mxu0 %v1464
  %1481 = vmatpush.msra.mxu0 %v1461
  %1482 = vmatpush.msra.mxu0 %v1458
  %1483 = vmatpush.msra.mxu0 %v1455
  %1484 = vmatpush.msra.mxu0 %v1452
  %1485 = vmatmul.f32.gmra.mxu0 %v1467
  %v1486 = vpop.f32.mrf.mxu0
  %v1487 = vadd.f32 0.0, %v1486
  %1488 = vdwg.mxu0
  %1489 = vrot.lane.b32.xlu0 %v378, 88
  %v1490 = vpop.permute.xlu0 %1489
  %1491 = vrot.lane.b32.xlu0 %v381, 88
  %v1492 = vpop.permute.xlu0 %1491
  %1493 = vrot.lane.b32.xlu0 %v384, 88
  %v1494 = vpop.permute.xlu0 %1493
  %1495 = vrot.lane.b32.xlu0 %v387, 88
  %v1496 = vpop.permute.xlu0 %1495
  %1497 = vrot.lane.b32.xlu0 %v390, 88
  %v1498 = vpop.permute.xlu0 %1497
  %v1505 = vsel %vm402, %v221, 0
  %1507 = vmatpush.msra.mxu0 0.0
  %1508 = vmatpush.msra.mxu0 0.0
  %1509 = vmatpush.msra.mxu0 0.0
  %1510 = vmatpush.msra.mxu0 0.0
  %1511 = vmatpush.msra.mxu0 0.0
  %1512 = vmatpush.msra.mxu0 0.0
  %1513 = vmatpush.msra.mxu0 0.0
  %1514 = vmatpush.msra.mxu0 0.0
  %1515 = vmatpush.msra.mxu0 0.0
  %1516 = vmatpush.msra.mxu0 0.0
  %1517 = vmatpush.msra.mxu0 0.0
  %1518 = vmatpush.msra.mxu0 %v1498
  %1519 = vmatpush.msra.mxu0 %v1496
  %1520 = vmatpush.msra.mxu0 %v1494
  %1521 = vmatpush.msra.mxu0 %v1492
  %1522 = vmatpush.msra.mxu0 %v1490
  %1523 = vmatmul.f32.gmra.mxu0 %v1505
  %v1524 = vpop.f32.mrf.mxu0
  %v1525 = vadd.f32 %v1487, %v1524
  %1526 = vdwg.mxu0
  %1528 = vset.pattern.permute.xlu0 0
  %1529 = vperm.xlu0 %1528, %v223
  %v1530 = vpop.permute.xlu0 %1529
  %v1532 = vadd.f32 %v1525, %v1530
  %vm1533 = vcmp.ge.f32.partialorder %v1532, 0.0
  %v1534 = vmul.f32 %v1532, 0.01
  %v1535 = vsel %vm1533, %v1532, %v1534
  %1537 = vset.pattern.permute.xlu0 0
  %1538 = vperm.xlu0 %1537, %v225
  %v1539 = vpop.permute.xlu0 %1538
  %vm1541 = vcmask 64512
  %v1543 = vsel %vm1541, %v224, 0
  %1545 = vmatpush.msra.mxu0 0.0
  %1546 = vmatpush.msra.mxu0 0.0
  %1547 = vmatpush.msra.mxu0 0.0
  %1548 = vmatpush.msra.mxu0 0.0
  %1549 = vmatpush.msra.mxu0 0.0
  %1550 = vmatpush.msra.mxu0 0.0
  %1551 = vmatpush.msra.mxu0 0.0
  %1552 = vmatpush.msra.mxu0 0.0
  %1553 = vmatpush.msra.mxu0 0.0
  %1554 = vmatpush.msra.mxu0 0.0
  %1555 = vmatpush.msra.mxu0 0.0
  %1556 = vmatpush.msra.mxu0 0.0
  %1557 = vmatpush.msra.mxu0 0.0
  %1558 = vmatpush.msra.mxu0 0.0
  %1559 = vmatpush.msra.mxu0 0.0
  %1560 = vmatpush.msra.mxu0 %v1535
  %1561 = vmatmul.f32.gmra.mxu0 %v1543
  %v1562 = vpop.f32.mrf.mxu0
  %v1563 = vadd.f32 %v1539, %v1562
  %1564 = vdwg.mxu0
  %v1565 = vmax.f32 %v1563, -1.0
  %v1566 = vmin.f32 %v1565, 1.0
  %vm1567 = vcmask 134144
  %1568 = vst.msk [vmem:[%s71] sm:$0xf] %vm1567, %v1566
  %s1569 = scalar_lea.vmem %s1, 2
  %v1570 = vld [vmem:[%s1569] sm:$0x3]
  %1572 = vrot.lane.b32.xlu0 %v1570, 127
  %v1573 = vpop.permute.xlu0 %1572
  %v1574 = vsel %vm236, %v1573, 0
  %1576 = vmatpush.msra.mxu0 0.0
  %1577 = vmatpush.msra.mxu0 0.0
  %1578 = vmatpush.msra.mxu0 0.0
  %1579 = vmatpush.msra.mxu0 0.0
  %1580 = vmatpush.msra.mxu0 0.0
  %1581 = vmatpush.msra.mxu0 0.0
  %1582 = vmatpush.msra.mxu0 0.0
  %1583 = vmatpush.msra.mxu0 0.0
  %1584 = vmatpush.msra.mxu0 0.0
  %1585 = vmatpush.msra.mxu0 0.0
  %1586 = vmatpush.msra.mxu0 0.0
  %1587 = vmatpush.msra.mxu0 0.0
  %1588 = vmatpush.msra.mxu0 0.0
  %1589 = vmatpush.msra.mxu0 0.0
  %1590 = vmatpush.msra.mxu0 0.0
  %1591 = vmatpush.msra.mxu0 %v1574
  %1592 = vmatmul.f32.gmra.mxu0 %v234
  %v1593 = vpop.f32.mrf.mxu0
  %v1594 = vadd.f32 0.0, %v1593
  %1595 = vdwg.mxu0
  %v1596 = vsel %vm236, %v1570, 0
  %1598 = vmatpush.msra.mxu0 0.0
  %1599 = vmatpush.msra.mxu0 0.0
  %1600 = vmatpush.msra.mxu0 0.0
  %1601 = vmatpush.msra.mxu0 0.0
  %1602 = vmatpush.msra.mxu0 0.0
  %1603 = vmatpush.msra.mxu0 0.0
  %1604 = vmatpush.msra.mxu0 0.0
  %1605 = vmatpush.msra.mxu0 0.0
  %1606 = vmatpush.msra.mxu0 0.0
  %1607 = vmatpush.msra.mxu0 0.0
  %1608 = vmatpush.msra.mxu0 0.0
  %1609 = vmatpush.msra.mxu0 0.0
  %1610 = vmatpush.msra.mxu0 0.0
  %1611 = vmatpush.msra.mxu0 0.0
  %1612 = vmatpush.msra.mxu0 0.0
  %1613 = vmatpush.msra.mxu0 %v1596
  %1614 = vmatmul.f32.gmra.mxu0 %v259
  %v1615 = vpop.f32.mrf.mxu0
  %v1616 = vadd.f32 %v1594, %v1615
  %1617 = vdwg.mxu0
  %1618 = vrot.lane.b32.xlu0 %v1570, 126
  %v1619 = vpop.permute.xlu0 %1618
  %v1620 = vsel %vm236, %v1619, 0
  %1622 = vmatpush.msra.mxu0 0.0
  %1623 = vmatpush.msra.mxu0 0.0
  %1624 = vmatpush.msra.mxu0 0.0
  %1625 = vmatpush.msra.mxu0 0.0
  %1626 = vmatpush.msra.mxu0 0.0
  %1627 = vmatpush.msra.mxu0 0.0
  %1628 = vmatpush.msra.mxu0 0.0
  %1629 = vmatpush.msra.mxu0 0.0
  %1630 = vmatpush.msra.mxu0 0.0
  %1631 = vmatpush.msra.mxu0 0.0
  %1632 = vmatpush.msra.mxu0 0.0
  %1633 = vmatpush.msra.mxu0 0.0
  %1634 = vmatpush.msra.mxu0 0.0
  %1635 = vmatpush.msra.mxu0 0.0
  %1636 = vmatpush.msra.mxu0 0.0
  %1637 = vmatpush.msra.mxu0 %v1620
  %1638 = vmatmul.f32.gmra.mxu0 %v287
  %v1639 = vpop.f32.mrf.mxu0
  %v1640 = vadd.f32 0.0, %v1639
  %1641 = vdwg.mxu0
  %v1642 = vadd.f32 %v1616, %v1640
  %1643 = vrot.lane.b32.xlu0 %v1570, 125
  %v1644 = vpop.permute.xlu0 %1643
  %v1645 = vsel %vm236, %v1644, 0
  %1647 = vmatpush.msra.mxu0 0.0
  %1648 = vmatpush.msra.mxu0 0.0
  %1649 = vmatpush.msra.mxu0 0.0
  %1650 = vmatpush.msra.mxu0 0.0
  %1651 = vmatpush.msra.mxu0 0.0
  %1652 = vmatpush.msra.mxu0 0.0
  %1653 = vmatpush.msra.mxu0 0.0
  %1654 = vmatpush.msra.mxu0 0.0
  %1655 = vmatpush.msra.mxu0 0.0
  %1656 = vmatpush.msra.mxu0 0.0
  %1657 = vmatpush.msra.mxu0 0.0
  %1658 = vmatpush.msra.mxu0 0.0
  %1659 = vmatpush.msra.mxu0 0.0
  %1660 = vmatpush.msra.mxu0 0.0
  %1661 = vmatpush.msra.mxu0 0.0
  %1662 = vmatpush.msra.mxu0 %v1645
  %1663 = vmatmul.f32.gmra.mxu0 %v316
  %v1664 = vpop.f32.mrf.mxu0
  %v1665 = vadd.f32 0.0, %v1664
  %1666 = vdwg.mxu0
  %v1667 = vadd.f32 %v1642, %v1665
  %1668 = vrot.lane.b32.xlu0 %v1570, 124
  %v1669 = vpop.permute.xlu0 %1668
  %v1670 = vsel %vm236, %v1669, 0
  %1672 = vmatpush.msra.mxu0 0.0
  %1673 = vmatpush.msra.mxu0 0.0
  %1674 = vmatpush.msra.mxu0 0.0
  %1675 = vmatpush.msra.mxu0 0.0
  %1676 = vmatpush.msra.mxu0 0.0
  %1677 = vmatpush.msra.mxu0 0.0
  %1678 = vmatpush.msra.mxu0 0.0
  %1679 = vmatpush.msra.mxu0 0.0
  %1680 = vmatpush.msra.mxu0 0.0
  %1681 = vmatpush.msra.mxu0 0.0
  %1682 = vmatpush.msra.mxu0 0.0
  %1683 = vmatpush.msra.mxu0 0.0
  %1684 = vmatpush.msra.mxu0 0.0
  %1685 = vmatpush.msra.mxu0 0.0
  %1686 = vmatpush.msra.mxu0 0.0
  %1687 = vmatpush.msra.mxu0 %v1670
  %1688 = vmatmul.f32.gmra.mxu0 %v345
  %v1689 = vpop.f32.mrf.mxu0
  %v1690 = vadd.f32 0.0, %v1689
  %1691 = vdwg.mxu0
  %v1692 = vadd.f32 %v1667, %v1690
  %v1693 = vadd.f32 %v1692, %v373
  %vm1694 = vcmp.ge.f32.partialorder %v1693, 0.0
  %v1695 = vmul.f32 %v1693, 0.01
  %v1696 = vsel %vm1694, %v1693, %v1695
  %1698 = vrot.lane.b32.xlu0 %v1696, 127
  %v1699 = vpop.permute.xlu0 %1698
  %1701 = vrot.lane.b32.xlu0 %v1696, 126
  %v1702 = vpop.permute.xlu0 %1701
  %1704 = vrot.lane.b32.xlu0 %v1696, 125
  %v1705 = vpop.permute.xlu0 %1704
  %1707 = vrot.lane.b32.xlu0 %v1696, 124
  %v1708 = vpop.permute.xlu0 %1707
  %1710 = vmatpush.msra.mxu0 0.0
  %1711 = vmatpush.msra.mxu0 0.0
  %1712 = vmatpush.msra.mxu0 0.0
  %1713 = vmatpush.msra.mxu0 0.0
  %1714 = vmatpush.msra.mxu0 0.0
  %1715 = vmatpush.msra.mxu0 0.0
  %1716 = vmatpush.msra.mxu0 0.0
  %1717 = vmatpush.msra.mxu0 0.0
  %1718 = vmatpush.msra.mxu0 0.0
  %1719 = vmatpush.msra.mxu0 0.0
  %1720 = vmatpush.msra.mxu0 0.0
  %1721 = vmatpush.msra.mxu0 %v1708
  %1722 = vmatpush.msra.mxu0 %v1705
  %1723 = vmatpush.msra.mxu0 %v1702
  %1724 = vmatpush.msra.mxu0 %v1699
  %1725 = vmatpush.msra.mxu0 %v1696
  %1726 = vmatmul.f32.gmra.mxu0 %v404
  %v1727 = vpop.f32.mrf.mxu0
  %v1728 = vadd.f32 %v395, %v1727
  %1729 = vmatmul.f32.gmra.mxu0 %v407
  %v1730 = vpop.f32.mrf.mxu0
  %v1731 = vadd.f32 %v400, %v1730
  %1732 = vdwg.mxu0
  %vm1733 = vcmp.ge.f32.partialorder %v1728, 0.0
  %vm1734 = vcmp.ge.f32.partialorder %v1731, 0.0
  %v1735 = vmul.f32 %v1728, 0.01
  %v1736 = vmul.f32 %v1731, 0.01
  %v1737 = vsel %vm1733, %v1728, %v1735
  %v1738 = vsel %vm1734, %v1731, %v1736
  %1741 = vrot.lane.b32.xlu0 %v1737, 127
  %v1742 = vpop.permute.xlu0 %1741
  %1743 = vrot.lane.b32.xlu0 %v1738, 127
  %v1744 = vpop.permute.xlu0 %1743
  %1747 = vrot.lane.b32.xlu0 %v1737, 126
  %v1748 = vpop.permute.xlu0 %1747
  %1749 = vrot.lane.b32.xlu0 %v1738, 126
  %v1750 = vpop.permute.xlu0 %1749
  %1753 = vrot.lane.b32.xlu0 %v1737, 125
  %v1754 = vpop.permute.xlu0 %1753
  %1755 = vrot.lane.b32.xlu0 %v1738, 125
  %v1756 = vpop.permute.xlu0 %1755
  %1759 = vrot.lane.b32.xlu0 %v1737, 124
  %v1760 = vpop.permute.xlu0 %1759
  %1761 = vrot.lane.b32.xlu0 %v1738, 124
  %v1762 = vpop.permute.xlu0 %1761
  %1765 = vmatpush.msra.mxu0 0.0
  %1766 = vmatpush.msra.mxu0 0.0
  %1767 = vmatpush.msra.mxu0 0.0
  %1768 = vmatpush.msra.mxu0 0.0
  %1769 = vmatpush.msra.mxu0 0.0
  %1770 = vmatpush.msra.mxu0 0.0
  %1771 = vmatpush.msra.mxu0 %v1762
  %1772 = vmatpush.msra.mxu0 %v1760
  %1773 = vmatpush.msra.mxu0 %v1756
  %1774 = vmatpush.msra.mxu0 %v1754
  %1775 = vmatpush.msra.mxu0 %v1750
  %1776 = vmatpush.msra.mxu0 %v1748
  %1777 = vmatpush.msra.mxu0 %v1744
  %1778 = vmatpush.msra.mxu0 %v1742
  %1779 = vmatpush.msra.mxu0 %v1738
  %1780 = vmatpush.msra.mxu0 %v1737
  %1781 = vmatmul.f32.gmra.mxu0 %v476
  %v1782 = vpop.f32.mrf.mxu0
  %v1783 = vadd.f32 %v467, %v1782
  %1784 = vmatmul.f32.gmra.mxu0 %v479
  %v1785 = vpop.f32.mrf.mxu0
  %v1786 = vadd.f32 %v472, %v1785
  %1787 = vdwg.mxu0
  %vm1788 = vcmp.ge.f32.partialorder %v1783, 0.0
  %vm1789 = vcmp.ge.f32.partialorder %v1786, 0.0
  %v1790 = vmul.f32 %v1783, 0.01
  %v1791 = vmul.f32 %v1786, 0.01
  %v1792 = vsel %vm1788, %v1783, %v1790
  %v1793 = vsel %vm1789, %v1786, %v1791
  %v1795 = vsel %vm510, %v1792, 0
  %v1798 = vsel %vm510, %v1793, 0
  %1800 = vmatpush.msra.mxu0 0.0
  %1801 = vmatpush.msra.mxu0 0.0
  %1802 = vmatpush.msra.mxu0 0.0
  %1803 = vmatpush.msra.mxu0 0.0
  %1804 = vmatpush.msra.mxu0 %v519
  %1805 = vmatpush.msra.mxu0 %v166
  %1806 = vmatpush.msra.mxu0 %v165
  %1807 = vmatpush.msra.mxu0 %v164
  %1808 = vmatpush.msra.mxu0 %v163
  %1809 = vmatpush.msra.mxu0 %v162
  %1810 = vmatpush.msra.mxu0 %v161
  %1811 = vmatpush.msra.mxu0 %v160
  %1812 = vmatpush.msra.mxu0 %v159
  %1813 = vmatpush.msra.mxu0 %v158
  %1814 = vmatpush.msra.mxu0 %v157
  %1815 = vmatpush.msra.mxu0 %v156
  %1816 = vmatmul.f32.gmra.mxu0 %v1795
  %v1817 = vpop.f32.mrf.mxu0
  %v1818 = vadd.f32 0.0, %v1817
  %1819 = vmatmul.f32.gmra.mxu0 %v1798
  %v1820 = vpop.f32.mrf.mxu0
  %v1821 = vadd.f32 0.0, %v1820
  %1822 = vdwg.mxu0
  %1825 = vrot.lane.b32.xlu0 %v1818, 127
  %v1826 = vpop.permute.xlu0 %1825
  %1827 = vrot.lane.b32.xlu0 %v1821, 127
  %v1828 = vpop.permute.xlu0 %1827
  %1831 = vrot.lane.b32.xlu0 %v1818, 126
  %v1832 = vpop.permute.xlu0 %1831
  %1833 = vrot.lane.b32.xlu0 %v1821, 126
  %v1834 = vpop.permute.xlu0 %1833
  %1837 = vrot.lane.b32.xlu0 %v1818, 125
  %v1838 = vpop.permute.xlu0 %1837
  %1839 = vrot.lane.b32.xlu0 %v1821, 125
  %v1840 = vpop.permute.xlu0 %1839
  %1843 = vrot.lane.b32.xlu0 %v1818, 124
  %v1844 = vpop.permute.xlu0 %1843
  %1845 = vrot.lane.b32.xlu0 %v1821, 124
  %v1846 = vpop.permute.xlu0 %1845
  %1849 = vmatpush.msra.mxu0 0.0
  %1850 = vmatpush.msra.mxu0 0.0
  %1851 = vmatpush.msra.mxu0 0.0
  %1852 = vmatpush.msra.mxu0 0.0
  %1853 = vmatpush.msra.mxu0 0.0
  %1854 = vmatpush.msra.mxu0 0.0
  %1855 = vmatpush.msra.mxu0 %v1846
  %1856 = vmatpush.msra.mxu0 %v1844
  %1857 = vmatpush.msra.mxu0 %v1840
  %1858 = vmatpush.msra.mxu0 %v1838
  %1859 = vmatpush.msra.mxu0 %v1834
  %1860 = vmatpush.msra.mxu0 %v1832
  %1861 = vmatpush.msra.mxu0 %v1828
  %1862 = vmatpush.msra.mxu0 %v1826
  %1863 = vmatpush.msra.mxu0 %v1821
  %1864 = vmatpush.msra.mxu0 %v1818
  %1865 = vmatmul.f32.gmra.mxu0 %v581
  %v1866 = vpop.f32.mrf.mxu0
  %v1867 = vadd.f32 %v573, %v1866
  %1868 = vmatmul.f32.gmra.mxu0 %v584
  %v1869 = vpop.f32.mrf.mxu0
  %v1870 = vadd.f32 %v578, %v1869
  %1871 = vdwg.mxu0
  %vm1872 = vcmp.ge.f32.partialorder %v1867, 0.0
  %vm1873 = vcmp.ge.f32.partialorder %v1870, 0.0
  %v1874 = vmul.f32 %v1867, 0.01
  %v1875 = vmul.f32 %v1870, 0.01
  %v1876 = vsel %vm1872, %v1867, %v1874
  %v1877 = vsel %vm1873, %v1870, %v1875
  %1880 = vrot.lane.b32.xlu0 %v1876, 127
  %v1881 = vpop.permute.xlu0 %1880
  %1882 = vrot.lane.b32.xlu0 %v1877, 127
  %v1883 = vpop.permute.xlu0 %1882
  %1886 = vrot.lane.b32.xlu0 %v1876, 126
  %v1887 = vpop.permute.xlu0 %1886
  %1888 = vrot.lane.b32.xlu0 %v1877, 126
  %v1889 = vpop.permute.xlu0 %1888
  %1892 = vrot.lane.b32.xlu0 %v1876, 125
  %v1893 = vpop.permute.xlu0 %1892
  %1894 = vrot.lane.b32.xlu0 %v1877, 125
  %v1895 = vpop.permute.xlu0 %1894
  %1898 = vrot.lane.b32.xlu0 %v1876, 124
  %v1899 = vpop.permute.xlu0 %1898
  %1900 = vrot.lane.b32.xlu0 %v1877, 124
  %v1901 = vpop.permute.xlu0 %1900
  %1904 = vmatpush.msra.mxu0 0.0
  %1905 = vmatpush.msra.mxu0 0.0
  %1906 = vmatpush.msra.mxu0 0.0
  %1907 = vmatpush.msra.mxu0 0.0
  %1908 = vmatpush.msra.mxu0 0.0
  %1909 = vmatpush.msra.mxu0 0.0
  %1910 = vmatpush.msra.mxu0 %v1901
  %1911 = vmatpush.msra.mxu0 %v1899
  %1912 = vmatpush.msra.mxu0 %v1895
  %1913 = vmatpush.msra.mxu0 %v1893
  %1914 = vmatpush.msra.mxu0 %v1889
  %1915 = vmatpush.msra.mxu0 %v1887
  %1916 = vmatpush.msra.mxu0 %v1883
  %1917 = vmatpush.msra.mxu0 %v1881
  %1918 = vmatpush.msra.mxu0 %v1877
  %1919 = vmatpush.msra.mxu0 %v1876
  %1920 = vmatmul.f32.gmra.mxu0 %v657
  %v1921 = vpop.f32.mrf.mxu0
  %v1922 = vadd.f32 %v644, %v1921
  %1923 = vmatmul.f32.gmra.mxu0 %v660
  %v1924 = vpop.f32.mrf.mxu0
  %v1925 = vadd.f32 %v649, %v1924
  %1926 = vmatmul.f32.gmra.mxu0 %v663
  %v1927 = vpop.f32.mrf.mxu0
  %v1928 = vadd.f32 %v654, %v1927
  %1929 = vdwg.mxu0
  %vm1930 = vcmp.ge.f32.partialorder %v1922, 0.0
  %vm1931 = vcmp.ge.f32.partialorder %v1925, 0.0
  %vm1932 = vcmp.ge.f32.partialorder %v1928, 0.0
  %v1933 = vmul.f32 %v1922, 0.01
  %v1934 = vmul.f32 %v1925, 0.01
  %v1935 = vmul.f32 %v1928, 0.01
  %v1936 = vsel %vm1930, %v1922, %v1933
  %v1937 = vsel %vm1931, %v1925, %v1934
  %v1938 = vsel %vm1932, %v1928, %v1935
  %1942 = vrot.lane.b32.xlu0 %v1936, 127
  %v1943 = vpop.permute.xlu0 %1942
  %1944 = vrot.lane.b32.xlu0 %v1937, 127
  %v1945 = vpop.permute.xlu0 %1944
  %1946 = vrot.lane.b32.xlu0 %v1938, 127
  %v1947 = vpop.permute.xlu0 %1946
  %1951 = vrot.lane.b32.xlu0 %v1936, 126
  %v1952 = vpop.permute.xlu0 %1951
  %1953 = vrot.lane.b32.xlu0 %v1937, 126
  %v1954 = vpop.permute.xlu0 %1953
  %1955 = vrot.lane.b32.xlu0 %v1938, 126
  %v1956 = vpop.permute.xlu0 %1955
  %1960 = vrot.lane.b32.xlu0 %v1936, 125
  %v1961 = vpop.permute.xlu0 %1960
  %1962 = vrot.lane.b32.xlu0 %v1937, 125
  %v1963 = vpop.permute.xlu0 %1962
  %1964 = vrot.lane.b32.xlu0 %v1938, 125
  %v1965 = vpop.permute.xlu0 %1964
  %1969 = vrot.lane.b32.xlu0 %v1936, 124
  %v1970 = vpop.permute.xlu0 %1969
  %1971 = vrot.lane.b32.xlu0 %v1937, 124
  %v1972 = vpop.permute.xlu0 %1971
  %1973 = vrot.lane.b32.xlu0 %v1938, 124
  %v1974 = vpop.permute.xlu0 %1973
  %1978 = vmatpush.msra.mxu0 0.0
  %1979 = vmatpush.msra.mxu0 %v1974
  %1980 = vmatpush.msra.mxu0 %v1972
  %1981 = vmatpush.msra.mxu0 %v1970
  %1982 = vmatpush.msra.mxu0 %v1965
  %1983 = vmatpush.msra.mxu0 %v1963
  %1984 = vmatpush.msra.mxu0 %v1961
  %1985 = vmatpush.msra.mxu0 %v1956
  %1986 = vmatpush.msra.mxu0 %v1954
  %1987 = vmatpush.msra.mxu0 %v1952
  %1988 = vmatpush.msra.mxu0 %v1947
  %1989 = vmatpush.msra.mxu0 %v1945
  %1990 = vmatpush.msra.mxu0 %v1943
  %1991 = vmatpush.msra.mxu0 %v1938
  %1992 = vmatpush.msra.mxu0 %v1937
  %1993 = vmatpush.msra.mxu0 %v1936
  %1994 = vmatmul.f32.gmra.mxu0 %v756
  %v1995 = vpop.f32.mrf.mxu0
  %v1996 = vadd.f32 %v742, %v1995
  %1997 = vmatmul.f32.gmra.mxu0 %v759
  %v1998 = vpop.f32.mrf.mxu0
  %v1999 = vadd.f32 %v747, %v1998
  %2000 = vmatmul.f32.gmra.mxu0 %v762
  %v2001 = vpop.f32.mrf.mxu0
  %v2002 = vadd.f32 %v752, %v2001
  %2003 = vdwg.mxu0
  %vm2004 = vcmp.ge.f32.partialorder %v1996, 0.0
  %vm2005 = vcmp.ge.f32.partialorder %v1999, 0.0
  %vm2006 = vcmp.ge.f32.partialorder %v2002, 0.0
  %v2007 = vmul.f32 %v1996, 0.01
  %v2008 = vmul.f32 %v1999, 0.01
  %v2009 = vmul.f32 %v2002, 0.01
  %v2010 = vsel %vm2004, %v1996, %v2007
  %v2011 = vsel %vm2005, %v1999, %v2008
  %v2012 = vsel %vm2006, %v2002, %v2009
  %v2014 = vsel %vm799, %v2010, 0
  %v2017 = vsel %vm799, %v2011, 0
  %v2020 = vsel %vm799, %v2012, 0
  %2022 = vmatpush.msra.mxu0 0.0
  %2023 = vmatpush.msra.mxu0 0.0
  %2024 = vmatpush.msra.mxu0 0.0
  %2025 = vmatpush.msra.mxu0 0.0
  %2026 = vmatpush.msra.mxu0 0.0
  %2027 = vmatpush.msra.mxu0 0.0
  %2028 = vmatpush.msra.mxu0 0.0
  %2029 = vmatpush.msra.mxu0 0.0
  %2030 = vmatpush.msra.mxu0 0.0
  %2031 = vmatpush.msra.mxu0 0.0
  %2032 = vmatpush.msra.mxu0 0.0
  %2033 = vmatpush.msra.mxu0 %v811
  %2034 = vmatpush.msra.mxu0 %v187
  %2035 = vmatpush.msra.mxu0 %v186
  %2036 = vmatpush.msra.mxu0 %v185
  %2037 = vmatpush.msra.mxu0 %v184
  %2038 = vmatmul.f32.gmra.mxu0 %v2014
  %v2039 = vpop.f32.mrf.mxu0
  %v2040 = vadd.f32 0.0, %v2039
  %2041 = vmatmul.f32.gmra.mxu0 %v2017
  %v2042 = vpop.f32.mrf.mxu0
  %v2043 = vadd.f32 0.0, %v2042
  %2044 = vmatmul.f32.gmra.mxu0 %v2020
  %v2045 = vpop.f32.mrf.mxu0
  %v2046 = vadd.f32 0.0, %v2045
  %2047 = vdwg.mxu0
  %2051 = vrot.lane.b32.xlu0 %v2040, 127
  %v2052 = vpop.permute.xlu0 %2051
  %2053 = vrot.lane.b32.xlu0 %v2043, 127
  %v2054 = vpop.permute.xlu0 %2053
  %2055 = vrot.lane.b32.xlu0 %v2046, 127
  %v2056 = vpop.permute.xlu0 %2055
  %2060 = vrot.lane.b32.xlu0 %v2040, 126
  %v2061 = vpop.permute.xlu0 %2060
  %2062 = vrot.lane.b32.xlu0 %v2043, 126
  %v2063 = vpop.permute.xlu0 %2062
  %2064 = vrot.lane.b32.xlu0 %v2046, 126
  %v2065 = vpop.permute.xlu0 %2064
  %2069 = vrot.lane.b32.xlu0 %v2040, 125
  %v2070 = vpop.permute.xlu0 %2069
  %2071 = vrot.lane.b32.xlu0 %v2043, 125
  %v2072 = vpop.permute.xlu0 %2071
  %2073 = vrot.lane.b32.xlu0 %v2046, 125
  %v2074 = vpop.permute.xlu0 %2073
  %2078 = vrot.lane.b32.xlu0 %v2040, 124
  %v2079 = vpop.permute.xlu0 %2078
  %2080 = vrot.lane.b32.xlu0 %v2043, 124
  %v2081 = vpop.permute.xlu0 %2080
  %2082 = vrot.lane.b32.xlu0 %v2046, 124
  %v2083 = vpop.permute.xlu0 %2082
  %2087 = vmatpush.msra.mxu0 0.0
  %2088 = vmatpush.msra.mxu0 %v2083
  %2089 = vmatpush.msra.mxu0 %v2081
  %2090 = vmatpush.msra.mxu0 %v2079
  %2091 = vmatpush.msra.mxu0 %v2074
  %2092 = vmatpush.msra.mxu0 %v2072
  %2093 = vmatpush.msra.mxu0 %v2070
  %2094 = vmatpush.msra.mxu0 %v2065
  %2095 = vmatpush.msra.mxu0 %v2063
  %2096 = vmatpush.msra.mxu0 %v2061
  %2097 = vmatpush.msra.mxu0 %v2056
  %2098 = vmatpush.msra.mxu0 %v2054
  %2099 = vmatpush.msra.mxu0 %v2052
  %2100 = vmatpush.msra.mxu0 %v2046
  %2101 = vmatpush.msra.mxu0 %v2043
  %2102 = vmatpush.msra.mxu0 %v2040
  %2103 = vmatmul.f32.gmra.mxu0 %v894
  %v2104 = vpop.f32.mrf.mxu0
  %v2105 = vadd.f32 %v881, %v2104
  %2106 = vmatmul.f32.gmra.mxu0 %v897
  %v2107 = vpop.f32.mrf.mxu0
  %v2108 = vadd.f32 %v886, %v2107
  %2109 = vmatmul.f32.gmra.mxu0 %v900
  %v2110 = vpop.f32.mrf.mxu0
  %v2111 = vadd.f32 %v891, %v2110
  %2112 = vdwg.mxu0
  %vm2113 = vcmp.ge.f32.partialorder %v2105, 0.0
  %vm2114 = vcmp.ge.f32.partialorder %v2108, 0.0
  %vm2115 = vcmp.ge.f32.partialorder %v2111, 0.0
  %v2116 = vmul.f32 %v2105, 0.01
  %v2117 = vmul.f32 %v2108, 0.01
  %v2118 = vmul.f32 %v2111, 0.01
  %v2119 = vsel %vm2113, %v2105, %v2116
  %v2120 = vsel %vm2114, %v2108, %v2117
  %v2121 = vsel %vm2115, %v2111, %v2118
  %v2123 = vsel %vm937, %v2119, 0
  %v2126 = vsel %vm937, %v2120, 0
  %v2129 = vsel %vm937, %v2121, 0
  %2131 = vmatpush.msra.mxu0 0.0
  %2132 = vmatpush.msra.mxu0 0.0
  %2133 = vmatpush.msra.mxu0 0.0
  %2134 = vmatpush.msra.mxu0 0.0
  %2135 = vmatpush.msra.mxu0 0.0
  %2136 = vmatpush.msra.mxu0 0.0
  %2137 = vmatpush.msra.mxu0 0.0
  %2138 = vmatpush.msra.mxu0 0.0
  %2139 = vmatpush.msra.mxu0 0.0
  %2140 = vmatpush.msra.mxu0 0.0
  %2141 = vmatpush.msra.mxu0 0.0
  %2142 = vmatpush.msra.mxu0 0.0
  %2143 = vmatpush.msra.mxu0 0.0
  %2144 = vmatpush.msra.mxu0 0.0
  %2145 = vmatpush.msra.mxu0 %v949
  %2146 = vmatpush.msra.mxu0 %v201
  %2147 = vmatmul.f32.gmra.mxu0 %v2123
  %v2148 = vpop.f32.mrf.mxu0
  %v2149 = vadd.f32 0.0, %v2148
  %2150 = vmatmul.f32.gmra.mxu0 %v2126
  %v2151 = vpop.f32.mrf.mxu0
  %v2152 = vadd.f32 0.0, %v2151
  %2153 = vmatmul.f32.gmra.mxu0 %v2129
  %v2154 = vpop.f32.mrf.mxu0
  %v2155 = vadd.f32 0.0, %v2154
  %2156 = vdwg.mxu0
  %2160 = vrot.lane.b32.xlu0 %v2149, 127
  %v2161 = vpop.permute.xlu0 %2160
  %2162 = vrot.lane.b32.xlu0 %v2152, 127
  %v2163 = vpop.permute.xlu0 %2162
  %2164 = vrot.lane.b32.xlu0 %v2155, 127
  %v2165 = vpop.permute.xlu0 %2164
  %2169 = vrot.lane.b32.xlu0 %v2149, 126
  %v2170 = vpop.permute.xlu0 %2169
  %2171 = vrot.lane.b32.xlu0 %v2152, 126
  %v2172 = vpop.permute.xlu0 %2171
  %2173 = vrot.lane.b32.xlu0 %v2155, 126
  %v2174 = vpop.permute.xlu0 %2173
  %2178 = vrot.lane.b32.xlu0 %v2149, 125
  %v2179 = vpop.permute.xlu0 %2178
  %2180 = vrot.lane.b32.xlu0 %v2152, 125
  %v2181 = vpop.permute.xlu0 %2180
  %2182 = vrot.lane.b32.xlu0 %v2155, 125
  %v2183 = vpop.permute.xlu0 %2182
  %2187 = vrot.lane.b32.xlu0 %v2149, 124
  %v2188 = vpop.permute.xlu0 %2187
  %2189 = vrot.lane.b32.xlu0 %v2152, 124
  %v2190 = vpop.permute.xlu0 %2189
  %2191 = vrot.lane.b32.xlu0 %v2155, 124
  %v2192 = vpop.permute.xlu0 %2191
  %2196 = vmatpush.msra.mxu0 0.0
  %2197 = vmatpush.msra.mxu0 %v2192
  %2198 = vmatpush.msra.mxu0 %v2190
  %2199 = vmatpush.msra.mxu0 %v2188
  %2200 = vmatpush.msra.mxu0 %v2183
  %2201 = vmatpush.msra.mxu0 %v2181
  %2202 = vmatpush.msra.mxu0 %v2179
  %2203 = vmatpush.msra.mxu0 %v2174
  %2204 = vmatpush.msra.mxu0 %v2172
  %2205 = vmatpush.msra.mxu0 %v2170
  %2206 = vmatpush.msra.mxu0 %v2165
  %2207 = vmatpush.msra.mxu0 %v2163
  %2208 = vmatpush.msra.mxu0 %v2161
  %2209 = vmatpush.msra.mxu0 %v2155
  %2210 = vmatpush.msra.mxu0 %v2152
  %2211 = vmatpush.msra.mxu0 %v2149
  %2212 = vmatmul.f32.gmra.mxu0 %v1032
  %v2213 = vpop.f32.mrf.mxu0
  %v2214 = vadd.f32 %v1019, %v2213
  %2215 = vmatmul.f32.gmra.mxu0 %v1035
  %v2216 = vpop.f32.mrf.mxu0
  %v2217 = vadd.f32 %v1024, %v2216
  %2218 = vmatmul.f32.gmra.mxu0 %v1038
  %v2219 = vpop.f32.mrf.mxu0
  %v2220 = vadd.f32 %v1029, %v2219
  %2221 = vdwg.mxu0
  %vm2222 = vcmp.ge.f32.partialorder %v2214, 0.0
  %vm2223 = vcmp.ge.f32.partialorder %v2217, 0.0
  %vm2224 = vcmp.ge.f32.partialorder %v2220, 0.0
  %v2225 = vmul.f32 %v2214, 0.01
  %v2226 = vmul.f32 %v2217, 0.01
  %v2227 = vmul.f32 %v2220, 0.01
  %v2228 = vsel %vm2222, %v2214, %v2225
  %v2229 = vsel %vm2223, %v2217, %v2226
  %v2230 = vsel %vm2224, %v2220, %v2227
  %2234 = vrot.lane.b32.xlu0 %v2228, 127
  %v2235 = vpop.permute.xlu0 %2234
  %2236 = vrot.lane.b32.xlu0 %v2229, 127
  %v2237 = vpop.permute.xlu0 %2236
  %2238 = vrot.lane.b32.xlu0 %v2230, 127
  %v2239 = vpop.permute.xlu0 %2238
  %2243 = vrot.lane.b32.xlu0 %v2228, 126
  %v2244 = vpop.permute.xlu0 %2243
  %2245 = vrot.lane.b32.xlu0 %v2229, 126
  %v2246 = vpop.permute.xlu0 %2245
  %2247 = vrot.lane.b32.xlu0 %v2230, 126
  %v2248 = vpop.permute.xlu0 %2247
  %2252 = vrot.lane.b32.xlu0 %v2228, 125
  %v2253 = vpop.permute.xlu0 %2252
  %2254 = vrot.lane.b32.xlu0 %v2229, 125
  %v2255 = vpop.permute.xlu0 %2254
  %2256 = vrot.lane.b32.xlu0 %v2230, 125
  %v2257 = vpop.permute.xlu0 %2256
  %2261 = vrot.lane.b32.xlu0 %v2228, 124
  %v2262 = vpop.permute.xlu0 %2261
  %2263 = vrot.lane.b32.xlu0 %v2229, 124
  %v2264 = vpop.permute.xlu0 %2263
  %2265 = vrot.lane.b32.xlu0 %v2230, 124
  %v2266 = vpop.permute.xlu0 %2265
  %2270 = vmatpush.msra.mxu0 0.0
  %2271 = vmatpush.msra.mxu0 %v2266
  %2272 = vmatpush.msra.mxu0 %v2264
  %2273 = vmatpush.msra.mxu0 %v2262
  %2274 = vmatpush.msra.mxu0 %v2257
  %2275 = vmatpush.msra.mxu0 %v2255
  %2276 = vmatpush.msra.mxu0 %v2253
  %2277 = vmatpush.msra.mxu0 %v2248
  %2278 = vmatpush.msra.mxu0 %v2246
  %2279 = vmatpush.msra.mxu0 %v2244
  %2280 = vmatpush.msra.mxu0 %v2239
  %2281 = vmatpush.msra.mxu0 %v2237
  %2282 = vmatpush.msra.mxu0 %v2235
  %2283 = vmatpush.msra.mxu0 %v2230
  %2284 = vmatpush.msra.mxu0 %v2229
  %2285 = vmatpush.msra.mxu0 %v2228
  %2286 = vmatmul.f32.gmra.mxu0 %v1125
  %v2287 = vpop.f32.mrf.mxu0
  %v2288 = vadd.f32 %v1117, %v2287
  %2289 = vmatmul.f32.gmra.mxu0 %v1128
  %v2290 = vpop.f32.mrf.mxu0
  %v2291 = vadd.f32 %v1122, %v2290
  %2292 = vdwg.mxu0
  %vm2293 = vcmp.ge.f32.partialorder %v2288, 0.0
  %vm2294 = vcmp.ge.f32.partialorder %v2291, 0.0
  %v2295 = vmul.f32 %v2288, 0.01
  %v2296 = vmul.f32 %v2291, 0.01
  %v2297 = vsel %vm2293, %v2288, %v2295
  %v2298 = vsel %vm2294, %v2291, %v2296
  %2301 = vrot.lane.b32.xlu0 %v2297, 127
  %v2302 = vpop.permute.xlu0 %2301
  %2303 = vrot.lane.b32.xlu0 %v2298, 127
  %v2304 = vpop.permute.xlu0 %2303
  %2307 = vrot.lane.b32.xlu0 %v2297, 126
  %v2308 = vpop.permute.xlu0 %2307
  %2309 = vrot.lane.b32.xlu0 %v2298, 126
  %v2310 = vpop.permute.xlu0 %2309
  %2313 = vrot.lane.b32.xlu0 %v2297, 125
  %v2314 = vpop.permute.xlu0 %2313
  %2315 = vrot.lane.b32.xlu0 %v2298, 125
  %v2316 = vpop.permute.xlu0 %2315
  %2319 = vrot.lane.b32.xlu0 %v2297, 124
  %v2320 = vpop.permute.xlu0 %2319
  %2321 = vrot.lane.b32.xlu0 %v2298, 124
  %v2322 = vpop.permute.xlu0 %2321
  %2325 = vmatpush.msra.mxu0 0.0
  %2326 = vmatpush.msra.mxu0 0.0
  %2327 = vmatpush.msra.mxu0 0.0
  %2328 = vmatpush.msra.mxu0 0.0
  %2329 = vmatpush.msra.mxu0 0.0
  %2330 = vmatpush.msra.mxu0 0.0
  %2331 = vmatpush.msra.mxu0 %v2322
  %2332 = vmatpush.msra.mxu0 %v2320
  %2333 = vmatpush.msra.mxu0 %v2316
  %2334 = vmatpush.msra.mxu0 %v2314
  %2335 = vmatpush.msra.mxu0 %v2310
  %2336 = vmatpush.msra.mxu0 %v2308
  %2337 = vmatpush.msra.mxu0 %v2304
  %2338 = vmatpush.msra.mxu0 %v2302
  %2339 = vmatpush.msra.mxu0 %v2298
  %2340 = vmatpush.msra.mxu0 %v2297
  %2341 = vmatmul.f32.gmra.mxu0 %v1186
  %v2342 = vpop.f32.mrf.mxu0
  %v2343 = vadd.f32 0.0, %v2342
  %2344 = vmatmul.f32.gmra.mxu0 %v1189
  %v2345 = vpop.f32.mrf.mxu0
  %v2346 = vadd.f32 0.0, %v2345
  %2347 = vdwg.mxu0
  %2348 = vrot.lane.b32.xlu0 %v1876, 116
  %v2349 = vpop.permute.xlu0 %2348
  %2350 = vrot.lane.b32.xlu0 %v1877, 116
  %v2351 = vpop.permute.xlu0 %2350
  %2352 = vrot.lane.b32.xlu0 %v1881, 116
  %v2353 = vpop.permute.xlu0 %2352
  %2354 = vrot.lane.b32.xlu0 %v1883, 116
  %v2355 = vpop.permute.xlu0 %2354
  %2356 = vrot.lane.b32.xlu0 %v1887, 116
  %v2357 = vpop.permute.xlu0 %2356
  %2358 = vrot.lane.b32.xlu0 %v1889, 116
  %v2359 = vpop.permute.xlu0 %2358
  %2360 = vrot.lane.b32.xlu0 %v1893, 116
  %v2361 = vpop.permute.xlu0 %2360
  %2362 = vrot.lane.b32.xlu0 %v1895, 116
  %v2363 = vpop.permute.xlu0 %2362
  %2364 = vrot.lane.b32.xlu0 %v1899, 116
  %v2365 = vpop.permute.xlu0 %2364
  %2366 = vrot.lane.b32.xlu0 %v1901, 116
  %v2367 = vpop.permute.xlu0 %2366
  %2378 = vmatpush.msra.mxu0 0.0
  %2379 = vmatpush.msra.mxu0 0.0
  %2380 = vmatpush.msra.mxu0 0.0
  %2381 = vmatpush.msra.mxu0 0.0
  %2382 = vmatpush.msra.mxu0 0.0
  %2383 = vmatpush.msra.mxu0 0.0
  %2384 = vmatpush.msra.mxu0 %v2367
  %2385 = vmatpush.msra.mxu0 %v2365
  %2386 = vmatpush.msra.mxu0 %v2363
  %2387 = vmatpush.msra.mxu0 %v2361
  %2388 = vmatpush.msra.mxu0 %v2359
  %2389 = vmatpush.msra.mxu0 %v2357
  %2390 = vmatpush.msra.mxu0 %v2355
  %2391 = vmatpush.msra.mxu0 %v2353
  %2392 = vmatpush.msra.mxu0 %v2351
  %2393 = vmatpush.msra.mxu0 %v2349
  %2394 = vmatmul.f32.gmra.mxu0 %v1245
  %v2395 = vpop.f32.mrf.mxu0
  %v2396 = vadd.f32 %v2343, %v2395
  %2397 = vmatmul.f32.gmra.mxu0 %v1248
  %v2398 = vpop.f32.mrf.mxu0
  %v2399 = vadd.f32 %v2346, %v2398
  %2400 = vdwg.mxu0
  %v2401 = vadd.f32 %v2396, %v1276
  %v2402 = vadd.f32 %v2399, %v1281
  %vm2403 = vcmp.ge.f32.partialorder %v2401, 0.0
  %vm2404 = vcmp.ge.f32.partialorder %v2402, 0.0
  %v2405 = vmul.f32 %v2401, 0.01
  %v2406 = vmul.f32 %v2402, 0.01
  %v2407 = vsel %vm2403, %v2401, %v2405
  %v2408 = vsel %vm2404, %v2402, %v2406
  %v2410 = vsel %vm1291, %v2407, 0
  %v2413 = vsel %vm1291, %v2408, 0
  %2415 = vmatpush.msra.mxu0 0.0
  %2416 = vmatpush.msra.mxu0 0.0
  %2417 = vmatpush.msra.mxu0 0.0
  %2418 = vmatpush.msra.mxu0 0.0
  %2419 = vmatpush.msra.mxu0 0.0
  %2420 = vmatpush.msra.mxu0 0.0
  %2421 = vmatpush.msra.mxu0 0.0
  %2422 = vmatpush.msra.mxu0 0.0
  %2423 = vmatpush.msra.mxu0 0.0
  %2424 = vmatpush.msra.mxu0 0.0
  %2425 = vmatpush.msra.mxu0 0.0
  %2426 = vmatpush.msra.mxu0 0.0
  %2427 = vmatpush.msra.mxu0 0.0
  %2428 = vmatpush.msra.mxu0 0.0
  %2429 = vmatpush.msra.mxu0 %v1300
  %2430 = vmatpush.msra.mxu0 %v217
  %2431 = vmatmul.f32.gmra.mxu0 %v2410
  %v2432 = vpop.f32.mrf.mxu0
  %v2433 = vadd.f32 0.0, %v2432
  %2434 = vmatmul.f32.gmra.mxu0 %v2413
  %v2435 = vpop.f32.mrf.mxu0
  %v2436 = vadd.f32 0.0, %v2435
  %2437 = vdwg.mxu0
  %2440 = vrot.lane.b32.xlu0 %v2433, 127
  %v2441 = vpop.permute.xlu0 %2440
  %2442 = vrot.lane.b32.xlu0 %v2436, 127
  %v2443 = vpop.permute.xlu0 %2442
  %2446 = vrot.lane.b32.xlu0 %v2433, 126
  %v2447 = vpop.permute.xlu0 %2446
  %2448 = vrot.lane.b32.xlu0 %v2436, 126
  %v2449 = vpop.permute.xlu0 %2448
  %2452 = vrot.lane.b32.xlu0 %v2433, 125
  %v2453 = vpop.permute.xlu0 %2452
  %2454 = vrot.lane.b32.xlu0 %v2436, 125
  %v2455 = vpop.permute.xlu0 %2454
  %2458 = vrot.lane.b32.xlu0 %v2433, 124
  %v2459 = vpop.permute.xlu0 %2458
  %2460 = vrot.lane.b32.xlu0 %v2436, 124
  %v2461 = vpop.permute.xlu0 %2460
  %2464 = vmatpush.msra.mxu0 0.0
  %2465 = vmatpush.msra.mxu0 0.0
  %2466 = vmatpush.msra.mxu0 0.0
  %2467 = vmatpush.msra.mxu0 0.0
  %2468 = vmatpush.msra.mxu0 0.0
  %2469 = vmatpush.msra.mxu0 0.0
  %2470 = vmatpush.msra.mxu0 %v2461
  %2471 = vmatpush.msra.mxu0 %v2459
  %2472 = vmatpush.msra.mxu0 %v2455
  %2473 = vmatpush.msra.mxu0 %v2453
  %2474 = vmatpush.msra.mxu0 %v2449
  %2475 = vmatpush.msra.mxu0 %v2447
  %2476 = vmatpush.msra.mxu0 %v2443
  %2477 = vmatpush.msra.mxu0 %v2441
  %2478 = vmatpush.msra.mxu0 %v2436
  %2479 = vmatpush.msra.mxu0 %v2433
  %2480 = vmatmul.f32.gmra.mxu0 %v1362
  %v2481 = vpop.f32.mrf.mxu0
  %v2482 = vadd.f32 %v1354, %v2481
  %2483 = vmatmul.f32.gmra.mxu0 %v1365
  %v2484 = vpop.f32.mrf.mxu0
  %v2485 = vadd.f32 %v1359, %v2484
  %2486 = vdwg.mxu0
  %vm2487 = vcmp.ge.f32.partialorder %v2482, 0.0
  %vm2488 = vcmp.ge.f32.partialorder %v2485, 0.0
  %v2489 = vmul.f32 %v2482, 0.01
  %v2490 = vmul.f32 %v2485, 0.01
  %v2491 = vsel %vm2487, %v2482, %v2489
  %v2492 = vsel %vm2488, %v2485, %v2490
  %2495 = vrot.lane.b32.xlu0 %v2491, 127
  %v2496 = vpop.permute.xlu0 %2495
  %2497 = vrot.lane.b32.xlu0 %v2492, 127
  %v2498 = vpop.permute.xlu0 %2497
  %2501 = vrot.lane.b32.xlu0 %v2491, 126
  %v2502 = vpop.permute.xlu0 %2501
  %2503 = vrot.lane.b32.xlu0 %v2492, 126
  %v2504 = vpop.permute.xlu0 %2503
  %2507 = vrot.lane.b32.xlu0 %v2491, 125
  %v2508 = vpop.permute.xlu0 %2507
  %2509 = vrot.lane.b32.xlu0 %v2492, 125
  %v2510 = vpop.permute.xlu0 %2509
  %2513 = vrot.lane.b32.xlu0 %v2491, 124
  %v2514 = vpop.permute.xlu0 %2513
  %2515 = vrot.lane.b32.xlu0 %v2492, 124
  %v2516 = vpop.permute.xlu0 %2515
  %2519 = vmatpush.msra.mxu0 0.0
  %2520 = vmatpush.msra.mxu0 0.0
  %2521 = vmatpush.msra.mxu0 0.0
  %2522 = vmatpush.msra.mxu0 0.0
  %2523 = vmatpush.msra.mxu0 0.0
  %2524 = vmatpush.msra.mxu0 0.0
  %2525 = vmatpush.msra.mxu0 %v2516
  %2526 = vmatpush.msra.mxu0 %v2514
  %2527 = vmatpush.msra.mxu0 %v2510
  %2528 = vmatpush.msra.mxu0 %v2508
  %2529 = vmatpush.msra.mxu0 %v2504
  %2530 = vmatpush.msra.mxu0 %v2502
  %2531 = vmatpush.msra.mxu0 %v2498
  %2532 = vmatpush.msra.mxu0 %v2496
  %2533 = vmatpush.msra.mxu0 %v2492
  %2534 = vmatpush.msra.mxu0 %v2491
  %2535 = vmatmul.f32.gmra.mxu0 %v1428
  %v2536 = vpop.f32.mrf.mxu0
  %v2537 = vadd.f32 %v1425, %v2536
  %2538 = vdwg.mxu0
  %vm2539 = vcmp.ge.f32.partialorder %v2537, 0.0
  %v2540 = vmul.f32 %v2537, 0.01
  %v2541 = vsel %vm2539, %v2537, %v2540
  %2543 = vrot.lane.b32.xlu0 %v2541, 127
  %v2544 = vpop.permute.xlu0 %2543
  %2546 = vrot.lane.b32.xlu0 %v2541, 126
  %v2547 = vpop.permute.xlu0 %2546
  %2549 = vrot.lane.b32.xlu0 %v2541, 125
  %v2550 = vpop.permute.xlu0 %2549
  %2552 = vrot.lane.b32.xlu0 %v2541, 124
  %v2553 = vpop.permute.xlu0 %2552
  %2555 = vmatpush.msra.mxu0 0.0
  %2556 = vmatpush.msra.mxu0 0.0
  %2557 = vmatpush.msra.mxu0 0.0
  %2558 = vmatpush.msra.mxu0 0.0
  %2559 = vmatpush.msra.mxu0 0.0
  %2560 = vmatpush.msra.mxu0 0.0
  %2561 = vmatpush.msra.mxu0 0.0
  %2562 = vmatpush.msra.mxu0 0.0
  %2563 = vmatpush.msra.mxu0 0.0
  %2564 = vmatpush.msra.mxu0 0.0
  %2565 = vmatpush.msra.mxu0 0.0
  %2566 = vmatpush.msra.mxu0 %v2553
  %2567 = vmatpush.msra.mxu0 %v2550
  %2568 = vmatpush.msra.mxu0 %v2547
  %2569 = vmatpush.msra.mxu0 %v2544
  %2570 = vmatpush.msra.mxu0 %v2541
  %2571 = vmatmul.f32.gmra.mxu0 %v1467
  %v2572 = vpop.f32.mrf.mxu0
  %v2573 = vadd.f32 0.0, %v2572
  %2574 = vdwg.mxu0
  %2575 = vrot.lane.b32.xlu0 %v1696, 88
  %v2576 = vpop.permute.xlu0 %2575
  %2577 = vrot.lane.b32.xlu0 %v1699, 88
  %v2578 = vpop.permute.xlu0 %2577
  %2579 = vrot.lane.b32.xlu0 %v1702, 88
  %v2580 = vpop.permute.xlu0 %2579
  %2581 = vrot.lane.b32.xlu0 %v1705, 88
  %v2582 = vpop.permute.xlu0 %2581
  %2583 = vrot.lane.b32.xlu0 %v1708, 88
  %v2584 = vpop.permute.xlu0 %2583
  %2590 = vmatpush.msra.mxu0 0.0
  %2591 = vmatpush.msra.mxu0 0.0
  %2592 = vmatpush.msra.mxu0 0.0
  %2593 = vmatpush.msra.mxu0 0.0
  %2594 = vmatpush.msra.mxu0 0.0
  %2595 = vmatpush.msra.mxu0 0.0
  %2596 = vmatpush.msra.mxu0 0.0
  %2597 = vmatpush.msra.mxu0 0.0
  %2598 = vmatpush.msra.mxu0 0.0
  %2599 = vmatpush.msra.mxu0 0.0
  %2600 = vmatpush.msra.mxu0 0.0
  %2601 = vmatpush.msra.mxu0 %v2584
  %2602 = vmatpush.msra.mxu0 %v2582
  %2603 = vmatpush.msra.mxu0 %v2580
  %2604 = vmatpush.msra.mxu0 %v2578
  %2605 = vmatpush.msra.mxu0 %v2576
  %2606 = vmatmul.f32.gmra.mxu0 %v1505
  %v2607 = vpop.f32.mrf.mxu0
  %v2608 = vadd.f32 %v2573, %v2607
  %2609 = vdwg.mxu0
  %v2610 = vadd.f32 %v2608, %v1530
  %vm2611 = vcmp.ge.f32.partialorder %v2610, 0.0
  %v2612 = vmul.f32 %v2610, 0.01
  %v2613 = vsel %vm2611, %v2610, %v2612
  %2614 = vmatpush.msra.mxu0 0.0
  %2615 = vmatpush.msra.mxu0 0.0
  %2616 = vmatpush.msra.mxu0 0.0
  %2617 = vmatpush.msra.mxu0 0.0
  %2618 = vmatpush.msra.mxu0 0.0
  %2619 = vmatpush.msra.mxu0 0.0
  %2620 = vmatpush.msra.mxu0 0.0
  %2621 = vmatpush.msra.mxu0 0.0
  %2622 = vmatpush.msra.mxu0 0.0
  %2623 = vmatpush.msra.mxu0 0.0
  %2624 = vmatpush.msra.mxu0 0.0
  %2625 = vmatpush.msra.mxu0 0.0
  %2626 = vmatpush.msra.mxu0 0.0
  %2627 = vmatpush.msra.mxu0 0.0
  %2628 = vmatpush.msra.mxu0 0.0
  %2629 = vmatpush.msra.mxu0 %v2613
  %2630 = vmatmul.f32.gmra.mxu0 %v1543
  %v2631 = vpop.f32.mrf.mxu0
  %v2632 = vadd.f32 %v1539, %v2631
  %2633 = vdwg.mxu0
  %v2634 = vmax.f32 %v2632, -1.0
  %v2635 = vmin.f32 %v2634, 1.0
  %s2636 = scalar_lea.vmem %s71, 4
  %2637 = vst.msk [vmem:[%s2636] sm:$0xf] %vm1567, %v2635
  // Predicated region
  $region142: #{waveunet_forward.1} parent=0 // pred_check
    _
  $region143: #{waveunet_forward.1} parent=0 // pred_check_branch
    %2639 = sbr.rel (0) target = $region145
  $region144: #{waveunet_forward.1} parent=0 // pred_region
    _
  $region145: #{waveunet_forward.1} parent=0 // pred_fallthru
    _
  // Predicated region
  $region146: #{waveunet_forward.1} parent=0 // pred_check
    _
  $region147: #{waveunet_forward.1} parent=0 // pred_check_branch
    %2641 = sbr.rel (0) target = $region149
  $region148: #{waveunet_forward.1} parent=0 // pred_region
    _
  $region149: #{waveunet_forward.1} parent=0 // pred_fallthru
    _

</llo_original>
